<compile_context>
chip_gen: v7x
topology: tpu7x:2x2x1
jax: 0.10.0
libtpu: 0.0.40
codegen_flags: <defaults>
</compile_context>

<pallas_src>
import jax
import jax.numpy as jnp
from jax.experimental import pallas as pl
from jax.experimental.pallas import tpu as pltpu

FEAT = 1024      # fixed by nn.Linear(1024, 1024)
HID = 1024
NUM_CLASS = 10   # num_class (small example value)


def _round_up(x, m):
    return (x + m - 1) // m * m


def _device_kind():
    try:
        return jax.devices()[0].device_kind.lower()
    except Exception:
        return ""


def _pick_tb(batch, kind=None):
    """Pick the batch tile per TPU generation (see header comment)."""
    kind = _device_kind() if kind is None else kind
    is_v5e = ("v5e" in kind) or ("v5 lite" in kind) or ("v5litepod" in kind)
    two_core = "v7" in kind                      # 2 TensorCores per chip on v7x
    big_tiles = (256, 128) if is_v5e else (512, 256, 128)

    for t in big_tiles:
        if batch >= 2 * t:                       # always >= 2 grid steps
            steps = pl.cdiv(batch, t)
            if (not two_core) or (steps % 2 == 0) or (steps >= 4):
                return t

    # Small / mid batch. On two-core chips split into two tiles so both TCs work.
    if two_core and batch >= 32:
        return _round_up(pl.cdiv(batch, 2), 16)
    return _round_up(max(batch, 1), 16)          # bf16 sublane packing -> multiple of 16


def _fc_head_kernel(x_ref, w1_ref, b1_ref, w2_ref, b2_ref, o_ref):
    # x_ref : (tb, F)   f32   batch tile (cast to bf16 in-kernel, hidden under MXU)
    # w1_ref: (F, H)    bf16  resident across the grid
    # b1_ref: (1, H)    f32
    # w2_ref: (H, Cp)   bf16  lane-padded to a multiple of 128
    # b2_ref: (1, Cp)   f32
    # o_ref : (tb, Cp)  f32   lane-dense output block (unmasked stores)
    x_bf = x_ref[...].astype(jnp.bfloat16)
    h = jnp.dot(x_bf, w1_ref[...], preferred_element_type=jnp.float32)
    h = jnp.maximum(h + b1_ref[...], 0.0)                       # bias + ReLU in f32
    out = jnp.dot(h.astype(jnp.bfloat16), w2_ref[...],
                  preferred_element_type=jnp.float32) + b2_ref[...]
    o_ref[...] = out.astype(o_ref.dtype)


def prepare_head_params(w1, b1, w2, b2):
    """One-time conversion of the fc-head parameters into kernel layout.

    Call once at module init (analogous to storing nn.Linear weights in inference
    layout); re-using the returned dict avoids per-call casts / pads of the weights.
    """
    F, H = w1.shape
    C = w2.shape[1]
    assert (F, H) == (FEAT, HID) and w2.shape[0] == H
    C_pad = _round_up(C, 128)                    # lane-dense output -> unmasked vst
    return dict(
        w1=w1.astype(jnp.bfloat16),
        b1=jnp.reshape(b1, (1, H)).astype(jnp.float32),
        w2=jnp.pad(w2, ((0, 0), (0, C_pad - C))).astype(jnp.bfloat16),
        b2=jnp.pad(jnp.reshape(b2, (1, C)), ((0, 0), (0, C_pad - C))).astype(jnp.float32),
        num_class=C,
        c_pad=C_pad,
    )


def classifier_head(x, params, *, tb=None):
    """Fused fc head: Linear(1024,1024) -> ReLU -> Linear(1024,num_class)."""
    B, F = x.shape
    w1, b1, w2, b2 = params["w1"], params["b1"], params["w2"], params["b2"]
    C = params["num_class"]
    C_pad = params["c_pad"]
    H = w1.shape[1]
    assert F == w1.shape[0] and w2.shape == (H, C_pad)

    if tb is None:
        tb = _pick_tb(B)
    B_pad = _round_up(B, tb)

    x_p = x if B_pad == B else jnp.pad(x, ((0, B_pad - B), (0, 0)))
    x_p = x_p.astype(jnp.float32)                # bf16 cast happens inside the kernel

    grid = (B_pad // tb,)

    bytes_accessed = (x_p.size * 4 + w1.size * 2 + w2.size * 2
                      + b1.size * 4 + b2.size * 4 + B_pad * C_pad * 4)
    cost = pl.CostEstimate(
        flops=2 * B_pad * (F * H + H * C_pad),
        transcendentals=0,
        bytes_accessed=bytes_accessed,
    )

    out = pl.pallas_call(
        _fc_head_kernel,
        out_shape=jax.ShapeDtypeStruct((B_pad, C_pad), jnp.float32),
        grid_spec=pltpu.PrefetchScalarGridSpec(
            num_scalar_prefetch=0,
            grid=grid,
            in_specs=[
                pl.BlockSpec((tb, F), lambda i: (i, 0)),      # x batch tile (f32)
                pl.BlockSpec((F, H), lambda i: (0, 0)),       # W1 (bf16, resident)
                pl.BlockSpec((1, H), lambda i: (0, 0)),       # b1
                pl.BlockSpec((H, C_pad), lambda i: (0, 0)),   # W2 (bf16, lane-padded)
                pl.BlockSpec((1, C_pad), lambda i: (0, 0)),   # b2
            ],
            out_specs=pl.BlockSpec((tb, C_pad), lambda i: (i, 0)),
        ),
        compiler_params=pltpu.CompilerParams(
            dimension_semantics=("parallel",),   # shards batch tiles across v7x TCs
            vmem_limit_bytes=32 << 20,           # ~9 MiB used at tb=512 -> ample headroom
        ),
        cost_estimate=cost,
    )(x_p, w1, b1, w2, b2)

    # Strip batch and class-lane padding (padded rows/lanes never reach the caller).
    return out[:B, :C]


def _init_linear(key, fan_in, fan_out):
    # Deterministic init mimicking torch.nn.Linear default U[-1/sqrt(fan_in), 1/sqrt(fan_in)]
    kw, kb = jax.random.split(key)
    bound = 1.0 / jnp.sqrt(float(fan_in))
    w = jax.random.uniform(kw, (fan_in, fan_out), jnp.float32, -bound, bound)
    b = jax.random.uniform(kb, (1, fan_out), jnp.float32, -bound, bound)
    return w, b


if __name__ == "__main__":
    key = jax.random.PRNGKey(0)
    kx, k1, k2 = jax.random.split(key, 3)

    # Deliberately not a multiple of the batch tile: exercises the padding path.
    B = 12
    # Backbone output features (frozen backbone treated as identity here).
    x = jax.random.normal(kx, (B, FEAT), jnp.float32)

    w1, b1 = _init_linear(k1, FEAT, HID)
    w2, b2 = _init_linear(k2, HID, NUM_CLASS)

    # One-time weight preparation (done at init, not per forward call).
    params = prepare_head_params(w1, b1, w2, b2)

    out = classifier_head(x, params)
    out = jax.block_until_ready(out)

    # Reference using the same bf16-operand / f32-accumulate recipe.
    # Note: bf16 MXU operands diverge from torch f32 Linear by bf16 rounding (~1e-2).
    h_ref = jnp.maximum(
        jnp.dot(x.astype(jnp.bfloat16), w1.astype(jnp.bfloat16),
                preferred_element_type=jnp.float32) + b1, 0.0)
    ref = jnp.dot(h_ref.astype(jnp.bfloat16), w2.astype(jnp.bfloat16),
                  preferred_element_type=jnp.float32) + b2

    assert out.shape == (B, NUM_CLASS)
    assert jnp.allclose(out, ref, atol=2e-2, rtol=2e-2), float(jnp.max(jnp.abs(out - ref)))

    print("KERNEL_OK")
</pallas_src>

<mosaic_0001>
module attributes {stable_mosaic.version = 11 : i64} {
  func.func @_fc_head_kernel(%arg0: i32, %arg1: memref<16x1024xf32, #tpu.memory_space<vmem>>, %arg2: memref<1024x1024xbf16, #tpu.memory_space<vmem>>, %arg3: memref<1x1024xf32, #tpu.memory_space<vmem>>, %arg4: memref<1024x128xbf16, #tpu.memory_space<vmem>>, %arg5: memref<1x128xf32, #tpu.memory_space<vmem>>, %arg6: memref<16x128xf32, #tpu.memory_space<vmem>>) attributes {dimension_semantics = [#tpu.dimension_semantics<parallel>], iteration_bounds = array<i64: 1>, scalar_prefetch = 0 : i64, scratch_operands = 0 : i64, tpu.core_type = #tpu.core_type<tc>, window_params = [{transform_indices = @transform_0, window_bounds = array<i64: 16, 1024>}, {pipeline_mode = #tpu.pipeline_mode<synchronous>, transform_indices = @transform_1, window_bounds = array<i64: 1024, 1024>}, {pipeline_mode = #tpu.pipeline_mode<synchronous>, transform_indices = @transform_2, window_bounds = array<i64: 1, 1024>}, {pipeline_mode = #tpu.pipeline_mode<synchronous>, transform_indices = @transform_3, window_bounds = array<i64: 1024, 128>}, {pipeline_mode = #tpu.pipeline_mode<synchronous>, transform_indices = @transform_4, window_bounds = array<i64: 1, 128>}, {transform_indices = @transform_5, window_bounds = array<i64: 16, 128>}]} {
    %c0 = arith.constant 0 : index
    %c0_0 = arith.constant 0 : index
    %0 = vector.load %arg1[%c0, %c0_0] : memref<16x1024xf32, #tpu.memory_space<vmem>>, vector<16x1024xf32>
    %1 = arith.truncf %0 : vector<16x1024xf32> to vector<16x1024xbf16>
    %c0_1 = arith.constant 0 : index
    %c0_2 = arith.constant 0 : index
    %2 = vector.load %arg2[%c0_1, %c0_2] : memref<1024x1024xbf16, #tpu.memory_space<vmem>>, vector<1024x1024xbf16>
    %cst = arith.constant dense<0.000000e+00> : vector<16x1024xf32>
    %3 = tpu.matmul %1, %2, %cst {dimension_numbers = #tpu.dot_dimension_numbers<[1], [0], [0], [1], [0, 0, 1, 1], [], []>} : vector<16x1024xbf16>, vector<1024x1024xbf16>, vector<16x1024xf32> -> vector<16x1024xf32>
    %c0_3 = arith.constant 0 : index
    %c0_4 = arith.constant 0 : index
    %4 = vector.load %arg3[%c0_3, %c0_4] : memref<1x1024xf32, #tpu.memory_space<vmem>>, vector<1x1024xf32>
    %5 = vector.broadcast %4 : vector<1x1024xf32> to vector<16x1024xf32>
    %6 = arith.addf %3, %5 : vector<16x1024xf32>
    %cst_5 = arith.constant 0.000000e+00 : f32
    %7 = vector.broadcast %cst_5 : f32 to vector<16x1024xf32>
    %8 = arith.maximumf %6, %7 : vector<16x1024xf32>
    %9 = arith.truncf %8 : vector<16x1024xf32> to vector<16x1024xbf16>
    %c0_6 = arith.constant 0 : index
    %c0_7 = arith.constant 0 : index
    %10 = vector.load %arg4[%c0_6, %c0_7] : memref<1024x128xbf16, #tpu.memory_space<vmem>>, vector<1024x128xbf16>
    %cst_8 = arith.constant dense<0.000000e+00> : vector<16x128xf32>
    %11 = tpu.matmul %9, %10, %cst_8 {dimension_numbers = #tpu.dot_dimension_numbers<[1], [0], [0], [1], [0, 0, 1, 1], [], []>} : vector<16x1024xbf16>, vector<1024x128xbf16>, vector<16x128xf32> -> vector<16x128xf32>
    %c0_9 = arith.constant 0 : index
    %c0_10 = arith.constant 0 : index
    %12 = vector.load %arg5[%c0_9, %c0_10] : memref<1x128xf32, #tpu.memory_space<vmem>>, vector<1x128xf32>
    %13 = vector.broadcast %12 : vector<1x128xf32> to vector<16x128xf32>
    %14 = arith.addf %11, %13 : vector<16x128xf32>
    %c0_11 = arith.constant 0 : index
    %c0_12 = arith.constant 0 : index
    %15 = vector.load %arg6[%c0_11, %c0_12] : memref<16x128xf32, #tpu.memory_space<vmem>>, vector<16x128xf32>
    tpu.vector_store %arg6[%c0_11, %c0_12], %14 {strides = array<i32>} : memref<16x128xf32, #tpu.memory_space<vmem>>, vector<16x128xf32>,
    return
  }
  func.func @transform_0(%arg0: i32) -> (i32, i32) {
    %c0_i32 = arith.constant 0 : i32
    %c0_i32_0 = arith.constant 0 : i32
    return %arg0, %c0_i32 : i32, i32
  }
  func.func @transform_1(%arg0: i32) -> (i32, i32) {
    %c0_i32 = arith.constant 0 : i32
    %c0_i32_0 = arith.constant 0 : i32
    %c0_i32_1 = arith.constant 0 : i32
    return %c0_i32, %c0_i32_0 : i32, i32
  }
  func.func @transform_2(%arg0: i32) -> (i32, i32) {
    %c0_i32 = arith.constant 0 : i32
    %c0_i32_0 = arith.constant 0 : i32
    %c0_i32_1 = arith.constant 0 : i32
    return %c0_i32, %c0_i32_0 : i32, i32
  }
  func.func @transform_3(%arg0: i32) -> (i32, i32) {
    %c0_i32 = arith.constant 0 : i32
    %c0_i32_0 = arith.constant 0 : i32
    %c0_i32_1 = arith.constant 0 : i32
    return %c0_i32, %c0_i32_0 : i32, i32
  }
  func.func @transform_4(%arg0: i32) -> (i32, i32) {
    %c0_i32 = arith.constant 0 : i32
    %c0_i32_0 = arith.constant 0 : i32
    %c0_i32_1 = arith.constant 0 : i32
    return %c0_i32, %c0_i32_0 : i32, i32
  }
  func.func @transform_5(%arg0: i32) -> (i32, i32) {
    %c0_i32 = arith.constant 0 : i32
    %c0_i32_0 = arith.constant 0 : i32
    return %arg0, %c0_i32 : i32, i32
  }
}

</mosaic_0001>

<llo_original>
// kernel: tpu_custom_call.1
$region0: #{tpu_custom_call.1}
  #allocation0 [shape = 'u32[]', space=smem, size = 0x4, offset = 0x4, fixed_abs, tag = 'smem constant byte address 0x4 - core index']
  #allocation1 [shape = 'u32[144,128]{1,0:T(1,128)}', space=vmem, size = 0x12000, scoped, tag = 'internal scratch']
  %s0 = inlined_call_operand.hbm [shape: f32[16,1024], index: 0, kind: input, shape index: {}]
  %s1 = inlined_call_operand.hbm [shape: bf16[1024,1024], index: 1, kind: input, shape index: {}]
  %s2 = inlined_call_operand.hbm [shape: f32[1,1024], index: 2, kind: input, shape index: {}]
  %s3 = inlined_call_operand.hbm [shape: bf16[1024,128], index: 3, kind: input, shape index: {}]
  %s4 = inlined_call_operand.hbm [shape: f32[1,128], index: 4, kind: input, shape index: {}]
  %s5 = inlined_call_operand.hbm [shape: f32[16,128], index: 5, kind: output, shape index: {}]
  %s6 = sld [smem:[#allocation0]]
  $region50: #{tpu_custom_call.1} parent=0
    _
  %s8 = ssub.s32 1, %s6
  %s9 = scalar_select 0, %s8, %s6
  $region1: #{tpu_custom_call.1} parent=0
    #allocation2 [shape = 'u8[65536]{0}', space=vmem, size = 0x10000, scoped, tag = 'input window, operand 0, single buffered']
    #allocation3 [shape = 's32[1]{0}', space=sflag, size = 0x4, scoped, tag = 'scoped memory for tpu_custom_call.1']
    #allocation4 [shape = 's32[1]{0}', space=sflag, size = 0x4, scoped, tag = 'scoped memory for tpu_custom_call.1']
    #allocation5 [shape = 'u8[2097152]{0}', space=vmem, size = 0x200000, scoped, tag = 'input window, operand 1, single buffered']
    #allocation6 [shape = 's32[1]{0}', space=sflag, size = 0x4, scoped, tag = 'scoped memory for tpu_custom_call.1']
    #allocation7 [shape = 'u8[4096]{0}', space=vmem, size = 0x1000, scoped, tag = 'input window, operand 2, single buffered']
    #allocation8 [shape = 'u8[262144]{0}', space=vmem, size = 0x40000, scoped, tag = 'input window, operand 3, single buffered']
    #allocation9 [shape = 's32[1]{0}', space=sflag, size = 0x4, scoped, tag = 'scoped memory for tpu_custom_call.1']
    #allocation10 [shape = 'u8[512]{0}', space=vmem, size = 0x400, scoped, tag = 'input window, operand 4, single buffered']
    #allocation11 [shape = 'u8[8192]{0}', space=vmem, size = 0x2000, scoped, tag = 'output window, operand 0, single buffered']
    %10 = vsyncpa [#allocation3], 0
    %11 = vsyncpa [#allocation6], 0
    %12 = vsyncpa [#allocation9], 0
    %13 = vsyncpa [#allocation4], 0
    // Predicated region
    $region2: #{tpu_custom_call.1} parent=1 // pred_check
      _
    $region3: #{tpu_custom_call.1} parent=1 // pred_check_branch
      %15 = sbr.rel (0) target = $region5
    $region4: #{tpu_custom_call.1} parent=1 // pred_region
      %s17 = ssub.s32 2048, 2048
      %18 = vsyncadd [#allocation3], %s17
      %s19 = sshll.u32 [#allocation2], 4
      %s20 = int_to_ptr.vmem [resolvable:$true] %s19
      %25 = dma.hbm_to_vmem [thread:$0]  %s0, 2048, %s20, [#allocation3], 1024, 1024, 64
    $region5: #{tpu_custom_call.1} parent=1 // pred_fallthru
      _
    // Predicated region
    $region6: #{tpu_custom_call.1} parent=1 // pred_check
      _
    $region7: #{tpu_custom_call.1} parent=1 // pred_check_branch
      %27 = sbr.rel (0) target = $region9
    $region8: #{tpu_custom_call.1} parent=1 // pred_region
      %s29 = ssub.s32 65536, 65536
      %30 = vsyncadd [#allocation6], %s29
      %s31 = sshll.u32 [#allocation5], 4
      %s32 = int_to_ptr.vmem [resolvable:$true] %s31
      %37 = dma.hbm_to_vmem [thread:$0]  %s1, 65536, %s32, [#allocation6], 512, 512, 32
    $region9: #{tpu_custom_call.1} parent=1 // pred_fallthru
      _
    // Predicated region
    $region10: #{tpu_custom_call.1} parent=1 // pred_check
      _
    $region11: #{tpu_custom_call.1} parent=1 // pred_check_branch
      %39 = sbr.rel (0) target = $region13
    $region12: #{tpu_custom_call.1} parent=1 // pred_region
      %s41 = ssub.s32 128, 128
      %42 = vsyncadd [#allocation6], %s41
      %s44 = sshll.u32 [#allocation7], 4
      %s45 = int_to_ptr.vmem [resolvable:$true] %s44
      %47 = dma.hbm_to_vmem [thread:$0]  %s2, 128, %s45, [#allocation6]
    $region13: #{tpu_custom_call.1} parent=1 // pred_fallthru
      _
    // Predicated region
    $region14: #{tpu_custom_call.1} parent=1 // pred_check
      _
    $region15: #{tpu_custom_call.1} parent=1 // pred_check_branch
      %49 = sbr.rel (0) target = $region17
    $region16: #{tpu_custom_call.1} parent=1 // pred_region
      %s51 = ssub.s32 8192, 8192
      %52 = vsyncadd [#allocation9], %s51
      %s53 = sshll.u32 [#allocation8], 4
      %s54 = int_to_ptr.vmem [resolvable:$true] %s53
      %59 = dma.hbm_to_vmem [thread:$0]  %s3, 8192, %s54, [#allocation9], 64, 64, 4
    $region17: #{tpu_custom_call.1} parent=1 // pred_fallthru
      _
    // Predicated region
    $region18: #{tpu_custom_call.1} parent=1 // pred_check
      _
    $region19: #{tpu_custom_call.1} parent=1 // pred_check_branch
      %61 = sbr.rel (0) target = $region21
    $region20: #{tpu_custom_call.1} parent=1 // pred_region
      %s63 = ssub.s32 16, 16
      %64 = vsyncadd [#allocation9], %s63
      %s66 = sshll.u32 [#allocation10], 4
      %s67 = int_to_ptr.vmem [resolvable:$true] %s66
      %69 = dma.hbm_to_vmem [thread:$0]  %s4, 16, %s67, [#allocation9]
    $region21: #{tpu_custom_call.1} parent=1 // pred_fallthru
      _
    // Predicated region
    $region22: #{tpu_custom_call.1} parent=1 // pred_check
      _
    $region23: #{tpu_custom_call.1} parent=1 // pred_check_branch
      %71 = sbr.rel (0) target = $region25
    $region24: #{tpu_custom_call.1} parent=1 // pred_region
      %72 = dma.done [#allocation3], 2048
    $region25: #{tpu_custom_call.1} parent=1 // pred_fallthru
      _
    // Predicated region
    $region26: #{tpu_custom_call.1} parent=1 // pred_check
      _
    $region27: #{tpu_custom_call.1} parent=1 // pred_check_branch
      %74 = sbr.rel (0) target = $region29
    $region28: #{tpu_custom_call.1} parent=1 // pred_region
      %75 = dma.done [#allocation6], 65536
    $region29: #{tpu_custom_call.1} parent=1 // pred_fallthru
      _
    // Predicated region
    $region30: #{tpu_custom_call.1} parent=1 // pred_check
      _
    $region31: #{tpu_custom_call.1} parent=1 // pred_check_branch
      %77 = sbr.rel (0) target = $region33
    $region32: #{tpu_custom_call.1} parent=1 // pred_region
      %78 = dma.done [#allocation6], 128
    $region33: #{tpu_custom_call.1} parent=1 // pred_fallthru
      _
    // Predicated region
    $region34: #{tpu_custom_call.1} parent=1 // pred_check
      _
    $region35: #{tpu_custom_call.1} parent=1 // pred_check_branch
      %80 = sbr.rel (0) target = $region37
    $region36: #{tpu_custom_call.1} parent=1 // pred_region
      %81 = dma.done [#allocation9], 8192
    $region37: #{tpu_custom_call.1} parent=1 // pred_fallthru
      _
    // Predicated region
    $region38: #{tpu_custom_call.1} parent=1 // pred_check
      _
    $region39: #{tpu_custom_call.1} parent=1 // pred_check_branch
      %83 = sbr.rel (0) target = $region41
    $region40: #{tpu_custom_call.1} parent=1 // pred_region
      %84 = dma.done [#allocation9], 16
    $region41: #{tpu_custom_call.1} parent=1 // pred_fallthru
      _
    %v86 = vld [vmem:[#allocation2] sm:$0xff]
    %v87 = vld [vmem:[#allocation2 + $0x8] sm:$0xff]
    %v88 = vld [vmem:[#allocation2 + $0x10] sm:$0xff]
    %v89 = vld [vmem:[#allocation2 + $0x18] sm:$0xff]
    %v90 = vld [vmem:[#allocation2 + $0x20] sm:$0xff]
    %v91 = vld [vmem:[#allocation2 + $0x28] sm:$0xff]
    %v92 = vld [vmem:[#allocation2 + $0x30] sm:$0xff]
    %v93 = vld [vmem:[#allocation2 + $0x38] sm:$0xff]
    %v94 = vld [vmem:[#allocation2 + $0x40] sm:$0xff]
    %v95 = vld [vmem:[#allocation2 + $0x48] sm:$0xff]
    %v96 = vld [vmem:[#allocation2 + $0x50] sm:$0xff]
    %v97 = vld [vmem:[#allocation2 + $0x58] sm:$0xff]
    %v98 = vld [vmem:[#allocation2 + $0x60] sm:$0xff]
    %v99 = vld [vmem:[#allocation2 + $0x68] sm:$0xff]
    %v100 = vld [vmem:[#allocation2 + $0x70] sm:$0xff]
    %v101 = vld [vmem:[#allocation2 + $0x78] sm:$0xff]
    %v102 = vpack.c.bf16 %v94, %v86
    %v103 = vpack.c.bf16 %v95, %v87
    %v104 = vpack.c.bf16 %v96, %v88
    %v105 = vpack.c.bf16 %v97, %v89
    %v106 = vpack.c.bf16 %v98, %v90
    %v107 = vpack.c.bf16 %v99, %v91
    %v108 = vpack.c.bf16 %v100, %v92
    %v109 = vpack.c.bf16 %v101, %v93
    %v110 = vld [vmem:[#allocation5] sm:$0xff]
    %v111 = vld [vmem:[#allocation5 + $0x8] sm:$0xff]
    %v112 = vld [vmem:[#allocation5 + $0x10] sm:$0xff]
    %v113 = vld [vmem:[#allocation5 + $0x18] sm:$0xff]
    %v114 = vld [vmem:[#allocation5 + $0x20] sm:$0xff]
    %v115 = vld [vmem:[#allocation5 + $0x28] sm:$0xff]
    %v116 = vld [vmem:[#allocation5 + $0x30] sm:$0xff]
    %v117 = vld [vmem:[#allocation5 + $0x38] sm:$0xff]
    %v118 = vld [vmem:[#allocation5 + $0x40] sm:$0xff]
    %v119 = vld [vmem:[#allocation5 + $0x48] sm:$0xff]
    %v120 = vld [vmem:[#allocation5 + $0x50] sm:$0xff]
    %v121 = vld [vmem:[#allocation5 + $0x58] sm:$0xff]
    %v122 = vld [vmem:[#allocation5 + $0x60] sm:$0xff]
    %v123 = vld [vmem:[#allocation5 + $0x68] sm:$0xff]
    %v124 = vld [vmem:[#allocation5 + $0x70] sm:$0xff]
    %v125 = vld [vmem:[#allocation5 + $0x78] sm:$0xff]
    %v126 = vld [vmem:[#allocation5 + $0x80] sm:$0xff]
    %v127 = vld [vmem:[#allocation5 + $0x88] sm:$0xff]
    %v128 = vld [vmem:[#allocation5 + $0x90] sm:$0xff]
    %v129 = vld [vmem:[#allocation5 + $0x98] sm:$0xff]
    %v130 = vld [vmem:[#allocation5 + $0xa0] sm:$0xff]
    %v131 = vld [vmem:[#allocation5 + $0xa8] sm:$0xff]
    %v132 = vld [vmem:[#allocation5 + $0xb0] sm:$0xff]
    %v133 = vld [vmem:[#allocation5 + $0xb8] sm:$0xff]
    %v134 = vld [vmem:[#allocation5 + $0xc0] sm:$0xff]
    %v135 = vld [vmem:[#allocation5 + $0xc8] sm:$0xff]
    %v136 = vld [vmem:[#allocation5 + $0xd0] sm:$0xff]
    %v137 = vld [vmem:[#allocation5 + $0xd8] sm:$0xff]
    %v138 = vld [vmem:[#allocation5 + $0xe0] sm:$0xff]
    %v139 = vld [vmem:[#allocation5 + $0xe8] sm:$0xff]
    %v140 = vld [vmem:[#allocation5 + $0xf0] sm:$0xff]
    %v141 = vld [vmem:[#allocation5 + $0xf8] sm:$0xff]
    %v142 = vld [vmem:[#allocation5 + $0x100] sm:$0xff]
    %v143 = vld [vmem:[#allocation5 + $0x108] sm:$0xff]
    %v144 = vld [vmem:[#allocation5 + $0x110] sm:$0xff]
    %v145 = vld [vmem:[#allocation5 + $0x118] sm:$0xff]
    %v146 = vld [vmem:[#allocation5 + $0x120] sm:$0xff]
    %v147 = vld [vmem:[#allocation5 + $0x128] sm:$0xff]
    %v148 = vld [vmem:[#allocation5 + $0x130] sm:$0xff]
    %v149 = vld [vmem:[#allocation5 + $0x138] sm:$0xff]
    %v150 = vld [vmem:[#allocation5 + $0x140] sm:$0xff]
    %v151 = vld [vmem:[#allocation5 + $0x148] sm:$0xff]
    %v152 = vld [vmem:[#allocation5 + $0x150] sm:$0xff]
    %v153 = vld [vmem:[#allocation5 + $0x158] sm:$0xff]
    %v154 = vld [vmem:[#allocation5 + $0x160] sm:$0xff]
    %v155 = vld [vmem:[#allocation5 + $0x168] sm:$0xff]
    %v156 = vld [vmem:[#allocation5 + $0x170] sm:$0xff]
    %v157 = vld [vmem:[#allocation5 + $0x178] sm:$0xff]
    %v158 = vld [vmem:[#allocation5 + $0x180] sm:$0xff]
    %v159 = vld [vmem:[#allocation5 + $0x188] sm:$0xff]
    %v160 = vld [vmem:[#allocation5 + $0x190] sm:$0xff]
    %v161 = vld [vmem:[#allocation5 + $0x198] sm:$0xff]
    %v162 = vld [vmem:[#allocation5 + $0x1a0] sm:$0xff]
    %v163 = vld [vmem:[#allocation5 + $0x1a8] sm:$0xff]
    %v164 = vld [vmem:[#allocation5 + $0x1b0] sm:$0xff]
    %v165 = vld [vmem:[#allocation5 + $0x1b8] sm:$0xff]
    %v166 = vld [vmem:[#allocation5 + $0x1c0] sm:$0xff]
    %v167 = vld [vmem:[#allocation5 + $0x1c8] sm:$0xff]
    %v168 = vld [vmem:[#allocation5 + $0x1d0] sm:$0xff]
    %v169 = vld [vmem:[#allocation5 + $0x1d8] sm:$0xff]
    %v170 = vld [vmem:[#allocation5 + $0x1e0] sm:$0xff]
    %v171 = vld [vmem:[#allocation5 + $0x1e8] sm:$0xff]
    %v172 = vld [vmem:[#allocation5 + $0x1f0] sm:$0xff]
    %v173 = vld [vmem:[#allocation5 + $0x1f8] sm:$0xff]
    %v174 = vld [vmem:[#allocation5 + $0x200] sm:$0xff]
    %v175 = vld [vmem:[#allocation5 + $0x208] sm:$0xff]
    %v176 = vld [vmem:[#allocation5 + $0x210] sm:$0xff]
    %v177 = vld [vmem:[#allocation5 + $0x218] sm:$0xff]
    %v178 = vld [vmem:[#allocation5 + $0x220] sm:$0xff]
    %v179 = vld [vmem:[#allocation5 + $0x228] sm:$0xff]
    %v180 = vld [vmem:[#allocation5 + $0x230] sm:$0xff]
    %v181 = vld [vmem:[#allocation5 + $0x238] sm:$0xff]
    %v182 = vld [vmem:[#allocation5 + $0x240] sm:$0xff]
    %v183 = vld [vmem:[#allocation5 + $0x248] sm:$0xff]
    %v184 = vld [vmem:[#allocation5 + $0x250] sm:$0xff]
    %v185 = vld [vmem:[#allocation5 + $0x258] sm:$0xff]
    %v186 = vld [vmem:[#allocation5 + $0x260] sm:$0xff]
    %v187 = vld [vmem:[#allocation5 + $0x268] sm:$0xff]
    %v188 = vld [vmem:[#allocation5 + $0x270] sm:$0xff]
    %v189 = vld [vmem:[#allocation5 + $0x278] sm:$0xff]
    %v190 = vld [vmem:[#allocation5 + $0x280] sm:$0xff]
    %v191 = vld [vmem:[#allocation5 + $0x288] sm:$0xff]
    %v192 = vld [vmem:[#allocation5 + $0x290] sm:$0xff]
    %v193 = vld [vmem:[#allocation5 + $0x298] sm:$0xff]
    %v194 = vld [vmem:[#allocation5 + $0x2a0] sm:$0xff]
    %v195 = vld [vmem:[#allocation5 + $0x2a8] sm:$0xff]
    %v196 = vld [vmem:[#allocation5 + $0x2b0] sm:$0xff]
    %v197 = vld [vmem:[#allocation5 + $0x2b8] sm:$0xff]
    %v198 = vld [vmem:[#allocation5 + $0x2c0] sm:$0xff]
    %v199 = vld [vmem:[#allocation5 + $0x2c8] sm:$0xff]
    %v200 = vld [vmem:[#allocation5 + $0x2d0] sm:$0xff]
    %v201 = vld [vmem:[#allocation5 + $0x2d8] sm:$0xff]
    %v202 = vld [vmem:[#allocation5 + $0x2e0] sm:$0xff]
    %v203 = vld [vmem:[#allocation5 + $0x2e8] sm:$0xff]
    %v204 = vld [vmem:[#allocation5 + $0x2f0] sm:$0xff]
    %v205 = vld [vmem:[#allocation5 + $0x2f8] sm:$0xff]
    %v206 = vld [vmem:[#allocation5 + $0x300] sm:$0xff]
    %v207 = vld [vmem:[#allocation5 + $0x308] sm:$0xff]
    %v208 = vld [vmem:[#allocation5 + $0x310] sm:$0xff]
    %v209 = vld [vmem:[#allocation5 + $0x318] sm:$0xff]
    %v210 = vld [vmem:[#allocation5 + $0x320] sm:$0xff]
    %v211 = vld [vmem:[#allocation5 + $0x328] sm:$0xff]
    %v212 = vld [vmem:[#allocation5 + $0x330] sm:$0xff]
    %v213 = vld [vmem:[#allocation5 + $0x338] sm:$0xff]
    %v214 = vld [vmem:[#allocation5 + $0x340] sm:$0xff]
    %v215 = vld [vmem:[#allocation5 + $0x348] sm:$0xff]
    %v216 = vld [vmem:[#allocation5 + $0x350] sm:$0xff]
    %v217 = vld [vmem:[#allocation5 + $0x358] sm:$0xff]
    %v218 = vld [vmem:[#allocation5 + $0x360] sm:$0xff]
    %v219 = vld [vmem:[#allocation5 + $0x368] sm:$0xff]
    %v220 = vld [vmem:[#allocation5 + $0x370] sm:$0xff]
    %v221 = vld [vmem:[#allocation5 + $0x378] sm:$0xff]
    %v222 = vld [vmem:[#allocation5 + $0x380] sm:$0xff]
    %v223 = vld [vmem:[#allocation5 + $0x388] sm:$0xff]
    %v224 = vld [vmem:[#allocation5 + $0x390] sm:$0xff]
    %v225 = vld [vmem:[#allocation5 + $0x398] sm:$0xff]
    %v226 = vld [vmem:[#allocation5 + $0x3a0] sm:$0xff]
    %v227 = vld [vmem:[#allocation5 + $0x3a8] sm:$0xff]
    %v228 = vld [vmem:[#allocation5 + $0x3b0] sm:$0xff]
    %v229 = vld [vmem:[#allocation5 + $0x3b8] sm:$0xff]
    %v230 = vld [vmem:[#allocation5 + $0x3c0] sm:$0xff]
    %v231 = vld [vmem:[#allocation5 + $0x3c8] sm:$0xff]
    %v232 = vld [vmem:[#allocation5 + $0x3d0] sm:$0xff]
    %v233 = vld [vmem:[#allocation5 + $0x3d8] sm:$0xff]
    %v234 = vld [vmem:[#allocation5 + $0x3e0] sm:$0xff]
    %v235 = vld [vmem:[#allocation5 + $0x3e8] sm:$0xff]
    %v236 = vld [vmem:[#allocation5 + $0x3f0] sm:$0xff]
    %v237 = vld [vmem:[#allocation5 + $0x3f8] sm:$0xff]
    %v238 = vld [vmem:[#allocation5 + $0x400] sm:$0xff]
    %v239 = vld [vmem:[#allocation5 + $0x408] sm:$0xff]
    %v240 = vld [vmem:[#allocation5 + $0x410] sm:$0xff]
    %v241 = vld [vmem:[#allocation5 + $0x418] sm:$0xff]
    %v242 = vld [vmem:[#allocation5 + $0x420] sm:$0xff]
    %v243 = vld [vmem:[#allocation5 + $0x428] sm:$0xff]
    %v244 = vld [vmem:[#allocation5 + $0x430] sm:$0xff]
    %v245 = vld [vmem:[#allocation5 + $0x438] sm:$0xff]
    %v246 = vld [vmem:[#allocation5 + $0x440] sm:$0xff]
    %v247 = vld [vmem:[#allocation5 + $0x448] sm:$0xff]
    %v248 = vld [vmem:[#allocation5 + $0x450] sm:$0xff]
    %v249 = vld [vmem:[#allocation5 + $0x458] sm:$0xff]
    %v250 = vld [vmem:[#allocation5 + $0x460] sm:$0xff]
    %v251 = vld [vmem:[#allocation5 + $0x468] sm:$0xff]
    %v252 = vld [vmem:[#allocation5 + $0x470] sm:$0xff]
    %v253 = vld [vmem:[#allocation5 + $0x478] sm:$0xff]
    %v254 = vld [vmem:[#allocation5 + $0x480] sm:$0xff]
    %v255 = vld [vmem:[#allocation5 + $0x488] sm:$0xff]
    %v256 = vld [vmem:[#allocation5 + $0x490] sm:$0xff]
    %v257 = vld [vmem:[#allocation5 + $0x498] sm:$0xff]
    %v258 = vld [vmem:[#allocation5 + $0x4a0] sm:$0xff]
    %v259 = vld [vmem:[#allocation5 + $0x4a8] sm:$0xff]
    %v260 = vld [vmem:[#allocation5 + $0x4b0] sm:$0xff]
    %v261 = vld [vmem:[#allocation5 + $0x4b8] sm:$0xff]
    %v262 = vld [vmem:[#allocation5 + $0x4c0] sm:$0xff]
    %v263 = vld [vmem:[#allocation5 + $0x4c8] sm:$0xff]
    %v264 = vld [vmem:[#allocation5 + $0x4d0] sm:$0xff]
    %v265 = vld [vmem:[#allocation5 + $0x4d8] sm:$0xff]
    %v266 = vld [vmem:[#allocation5 + $0x4e0] sm:$0xff]
    %v267 = vld [vmem:[#allocation5 + $0x4e8] sm:$0xff]
    %v268 = vld [vmem:[#allocation5 + $0x4f0] sm:$0xff]
    %v269 = vld [vmem:[#allocation5 + $0x4f8] sm:$0xff]
    %v270 = vld [vmem:[#allocation5 + $0x500] sm:$0xff]
    %v271 = vld [vmem:[#allocation5 + $0x508] sm:$0xff]
    %v272 = vld [vmem:[#allocation5 + $0x510] sm:$0xff]
    %v273 = vld [vmem:[#allocation5 + $0x518] sm:$0xff]
    %v274 = vld [vmem:[#allocation5 + $0x520] sm:$0xff]
    %v275 = vld [vmem:[#allocation5 + $0x528] sm:$0xff]
    %v276 = vld [vmem:[#allocation5 + $0x530] sm:$0xff]
    %v277 = vld [vmem:[#allocation5 + $0x538] sm:$0xff]
    %v278 = vld [vmem:[#allocation5 + $0x540] sm:$0xff]
    %v279 = vld [vmem:[#allocation5 + $0x548] sm:$0xff]
    %v280 = vld [vmem:[#allocation5 + $0x550] sm:$0xff]
    %v281 = vld [vmem:[#allocation5 + $0x558] sm:$0xff]
    %v282 = vld [vmem:[#allocation5 + $0x560] sm:$0xff]
    %v283 = vld [vmem:[#allocation5 + $0x568] sm:$0xff]
    %v284 = vld [vmem:[#allocation5 + $0x570] sm:$0xff]
    %v285 = vld [vmem:[#allocation5 + $0x578] sm:$0xff]
    %v286 = vld [vmem:[#allocation5 + $0x580] sm:$0xff]
    %v287 = vld [vmem:[#allocation5 + $0x588] sm:$0xff]
    %v288 = vld [vmem:[#allocation5 + $0x590] sm:$0xff]
    %v289 = vld [vmem:[#allocation5 + $0x598] sm:$0xff]
    %v290 = vld [vmem:[#allocation5 + $0x5a0] sm:$0xff]
    %v291 = vld [vmem:[#allocation5 + $0x5a8] sm:$0xff]
    %v292 = vld [vmem:[#allocation5 + $0x5b0] sm:$0xff]
    %v293 = vld [vmem:[#allocation5 + $0x5b8] sm:$0xff]
    %v294 = vld [vmem:[#allocation5 + $0x5c0] sm:$0xff]
    %v295 = vld [vmem:[#allocation5 + $0x5c8] sm:$0xff]
    %v296 = vld [vmem:[#allocation5 + $0x5d0] sm:$0xff]
    %v297 = vld [vmem:[#allocation5 + $0x5d8] sm:$0xff]
    %v298 = vld [vmem:[#allocation5 + $0x5e0] sm:$0xff]
    %v299 = vld [vmem:[#allocation5 + $0x5e8] sm:$0xff]
    %v300 = vld [vmem:[#allocation5 + $0x5f0] sm:$0xff]
    %v301 = vld [vmem:[#allocation5 + $0x5f8] sm:$0xff]
    %v302 = vld [vmem:[#allocation5 + $0x600] sm:$0xff]
    %v303 = vld [vmem:[#allocation5 + $0x608] sm:$0xff]
    %v304 = vld [vmem:[#allocation5 + $0x610] sm:$0xff]
    %v305 = vld [vmem:[#allocation5 + $0x618] sm:$0xff]
    %v306 = vld [vmem:[#allocation5 + $0x620] sm:$0xff]
    %v307 = vld [vmem:[#allocation5 + $0x628] sm:$0xff]
    %v308 = vld [vmem:[#allocation5 + $0x630] sm:$0xff]
    %v309 = vld [vmem:[#allocation5 + $0x638] sm:$0xff]
    %v310 = vld [vmem:[#allocation5 + $0x640] sm:$0xff]
    %v311 = vld [vmem:[#allocation5 + $0x648] sm:$0xff]
    %v312 = vld [vmem:[#allocation5 + $0x650] sm:$0xff]
    %v313 = vld [vmem:[#allocation5 + $0x658] sm:$0xff]
    %v314 = vld [vmem:[#allocation5 + $0x660] sm:$0xff]
    %v315 = vld [vmem:[#allocation5 + $0x668] sm:$0xff]
    %v316 = vld [vmem:[#allocation5 + $0x670] sm:$0xff]
    %v317 = vld [vmem:[#allocation5 + $0x678] sm:$0xff]
    %v318 = vld [vmem:[#allocation5 + $0x680] sm:$0xff]
    %v319 = vld [vmem:[#allocation5 + $0x688] sm:$0xff]
    %v320 = vld [vmem:[#allocation5 + $0x690] sm:$0xff]
    %v321 = vld [vmem:[#allocation5 + $0x698] sm:$0xff]
    %v322 = vld [vmem:[#allocation5 + $0x6a0] sm:$0xff]
    %v323 = vld [vmem:[#allocation5 + $0x6a8] sm:$0xff]
    %v324 = vld [vmem:[#allocation5 + $0x6b0] sm:$0xff]
    %v325 = vld [vmem:[#allocation5 + $0x6b8] sm:$0xff]
    %v326 = vld [vmem:[#allocation5 + $0x6c0] sm:$0xff]
    %v327 = vld [vmem:[#allocation5 + $0x6c8] sm:$0xff]
    %v328 = vld [vmem:[#allocation5 + $0x6d0] sm:$0xff]
    %v329 = vld [vmem:[#allocation5 + $0x6d8] sm:$0xff]
    %v330 = vld [vmem:[#allocation5 + $0x6e0] sm:$0xff]
    %v331 = vld [vmem:[#allocation5 + $0x6e8] sm:$0xff]
    %v332 = vld [vmem:[#allocation5 + $0x6f0] sm:$0xff]
    %v333 = vld [vmem:[#allocation5 + $0x6f8] sm:$0xff]
    %v334 = vld [vmem:[#allocation5 + $0x700] sm:$0xff]
    %v335 = vld [vmem:[#allocation5 + $0x708] sm:$0xff]
    %v336 = vld [vmem:[#allocation5 + $0x710] sm:$0xff]
    %v337 = vld [vmem:[#allocation5 + $0x718] sm:$0xff]
    %v338 = vld [vmem:[#allocation5 + $0x720] sm:$0xff]
    %v339 = vld [vmem:[#allocation5 + $0x728] sm:$0xff]
    %v340 = vld [vmem:[#allocation5 + $0x730] sm:$0xff]
    %v341 = vld [vmem:[#allocation5 + $0x738] sm:$0xff]
    %v342 = vld [vmem:[#allocation5 + $0x740] sm:$0xff]
    %v343 = vld [vmem:[#allocation5 + $0x748] sm:$0xff]
    %v344 = vld [vmem:[#allocation5 + $0x750] sm:$0xff]
    %v345 = vld [vmem:[#allocation5 + $0x758] sm:$0xff]
    %v346 = vld [vmem:[#allocation5 + $0x760] sm:$0xff]
    %v347 = vld [vmem:[#allocation5 + $0x768] sm:$0xff]
    %v348 = vld [vmem:[#allocation5 + $0x770] sm:$0xff]
    %v349 = vld [vmem:[#allocation5 + $0x778] sm:$0xff]
    %v350 = vld [vmem:[#allocation5 + $0x780] sm:$0xff]
    %v351 = vld [vmem:[#allocation5 + $0x788] sm:$0xff]
    %v352 = vld [vmem:[#allocation5 + $0x790] sm:$0xff]
    %v353 = vld [vmem:[#allocation5 + $0x798] sm:$0xff]
    %v354 = vld [vmem:[#allocation5 + $0x7a0] sm:$0xff]
    %v355 = vld [vmem:[#allocation5 + $0x7a8] sm:$0xff]
    %v356 = vld [vmem:[#allocation5 + $0x7b0] sm:$0xff]
    %v357 = vld [vmem:[#allocation5 + $0x7b8] sm:$0xff]
    %v358 = vld [vmem:[#allocation5 + $0x7c0] sm:$0xff]
    %v359 = vld [vmem:[#allocation5 + $0x7c8] sm:$0xff]
    %v360 = vld [vmem:[#allocation5 + $0x7d0] sm:$0xff]
    %v361 = vld [vmem:[#allocation5 + $0x7d8] sm:$0xff]
    %v362 = vld [vmem:[#allocation5 + $0x7e0] sm:$0xff]
    %v363 = vld [vmem:[#allocation5 + $0x7e8] sm:$0xff]
    %v364 = vld [vmem:[#allocation5 + $0x7f0] sm:$0xff]
    %v365 = vld [vmem:[#allocation5 + $0x7f8] sm:$0xff]
    %v366 = vld [vmem:[#allocation5 + $0x800] sm:$0xff]
    %v367 = vld [vmem:[#allocation5 + $0x808] sm:$0xff]
    %v368 = vld [vmem:[#allocation5 + $0x810] sm:$0xff]
    %v369 = vld [vmem:[#allocation5 + $0x818] sm:$0xff]
    %v370 = vld [vmem:[#allocation5 + $0x820] sm:$0xff]
    %v371 = vld [vmem:[#allocation5 + $0x828] sm:$0xff]
    %v372 = vld [vmem:[#allocation5 + $0x830] sm:$0xff]
    %v373 = vld [vmem:[#allocation5 + $0x838] sm:$0xff]
    %v374 = vld [vmem:[#allocation5 + $0x840] sm:$0xff]
    %v375 = vld [vmem:[#allocation5 + $0x848] sm:$0xff]
    %v376 = vld [vmem:[#allocation5 + $0x850] sm:$0xff]
    %v377 = vld [vmem:[#allocation5 + $0x858] sm:$0xff]
    %v378 = vld [vmem:[#allocation5 + $0x860] sm:$0xff]
    %v379 = vld [vmem:[#allocation5 + $0x868] sm:$0xff]
    %v380 = vld [vmem:[#allocation5 + $0x870] sm:$0xff]
    %v381 = vld [vmem:[#allocation5 + $0x878] sm:$0xff]
    %v382 = vld [vmem:[#allocation5 + $0x880] sm:$0xff]
    %v383 = vld [vmem:[#allocation5 + $0x888] sm:$0xff]
    %v384 = vld [vmem:[#allocation5 + $0x890] sm:$0xff]
    %v385 = vld [vmem:[#allocation5 + $0x898] sm:$0xff]
    %v386 = vld [vmem:[#allocation5 + $0x8a0] sm:$0xff]
    %v387 = vld [vmem:[#allocation5 + $0x8a8] sm:$0xff]
    %v388 = vld [vmem:[#allocation5 + $0x8b0] sm:$0xff]
    %v389 = vld [vmem:[#allocation5 + $0x8b8] sm:$0xff]
    %v390 = vld [vmem:[#allocation5 + $0x8c0] sm:$0xff]
    %v391 = vld [vmem:[#allocation5 + $0x8c8] sm:$0xff]
    %v392 = vld [vmem:[#allocation5 + $0x8d0] sm:$0xff]
    %v393 = vld [vmem:[#allocation5 + $0x8d8] sm:$0xff]
    %v394 = vld [vmem:[#allocation5 + $0x8e0] sm:$0xff]
    %v395 = vld [vmem:[#allocation5 + $0x8e8] sm:$0xff]
    %v396 = vld [vmem:[#allocation5 + $0x8f0] sm:$0xff]
    %v397 = vld [vmem:[#allocation5 + $0x8f8] sm:$0xff]
    %v398 = vld [vmem:[#allocation5 + $0x900] sm:$0xff]
    %v399 = vld [vmem:[#allocation5 + $0x908] sm:$0xff]
    %v400 = vld [vmem:[#allocation5 + $0x910] sm:$0xff]
    %v401 = vld [vmem:[#allocation5 + $0x918] sm:$0xff]
    %v402 = vld [vmem:[#allocation5 + $0x920] sm:$0xff]
    %v403 = vld [vmem:[#allocation5 + $0x928] sm:$0xff]
    %v404 = vld [vmem:[#allocation5 + $0x930] sm:$0xff]
    %v405 = vld [vmem:[#allocation5 + $0x938] sm:$0xff]
    %v406 = vld [vmem:[#allocation5 + $0x940] sm:$0xff]
    %v407 = vld [vmem:[#allocation5 + $0x948] sm:$0xff]
    %v408 = vld [vmem:[#allocation5 + $0x950] sm:$0xff]
    %v409 = vld [vmem:[#allocation5 + $0x958] sm:$0xff]
    %v410 = vld [vmem:[#allocation5 + $0x960] sm:$0xff]
    %v411 = vld [vmem:[#allocation5 + $0x968] sm:$0xff]
    %v412 = vld [vmem:[#allocation5 + $0x970] sm:$0xff]
    %v413 = vld [vmem:[#allocation5 + $0x978] sm:$0xff]
    %v414 = vld [vmem:[#allocation5 + $0x980] sm:$0xff]
    %v415 = vld [vmem:[#allocation5 + $0x988] sm:$0xff]
    %v416 = vld [vmem:[#allocation5 + $0x990] sm:$0xff]
    %v417 = vld [vmem:[#allocation5 + $0x998] sm:$0xff]
    %v418 = vld [vmem:[#allocation5 + $0x9a0] sm:$0xff]
    %v419 = vld [vmem:[#allocation5 + $0x9a8] sm:$0xff]
    %v420 = vld [vmem:[#allocation5 + $0x9b0] sm:$0xff]
    %v421 = vld [vmem:[#allocation5 + $0x9b8] sm:$0xff]
    %v422 = vld [vmem:[#allocation5 + $0x9c0] sm:$0xff]
    %v423 = vld [vmem:[#allocation5 + $0x9c8] sm:$0xff]
    %v424 = vld [vmem:[#allocation5 + $0x9d0] sm:$0xff]
    %v425 = vld [vmem:[#allocation5 + $0x9d8] sm:$0xff]
    %v426 = vld [vmem:[#allocation5 + $0x9e0] sm:$0xff]
    %v427 = vld [vmem:[#allocation5 + $0x9e8] sm:$0xff]
    %v428 = vld [vmem:[#allocation5 + $0x9f0] sm:$0xff]
    %v429 = vld [vmem:[#allocation5 + $0x9f8] sm:$0xff]
    %v430 = vld [vmem:[#allocation5 + $0xa00] sm:$0xff]
    %v431 = vld [vmem:[#allocation5 + $0xa08] sm:$0xff]
    %v432 = vld [vmem:[#allocation5 + $0xa10] sm:$0xff]
    %v433 = vld [vmem:[#allocation5 + $0xa18] sm:$0xff]
    %v434 = vld [vmem:[#allocation5 + $0xa20] sm:$0xff]
    %v435 = vld [vmem:[#allocation5 + $0xa28] sm:$0xff]
    %v436 = vld [vmem:[#allocation5 + $0xa30] sm:$0xff]
    %v437 = vld [vmem:[#allocation5 + $0xa38] sm:$0xff]
    %v438 = vld [vmem:[#allocation5 + $0xa40] sm:$0xff]
    %v439 = vld [vmem:[#allocation5 + $0xa48] sm:$0xff]
    %v440 = vld [vmem:[#allocation5 + $0xa50] sm:$0xff]
    %v441 = vld [vmem:[#allocation5 + $0xa58] sm:$0xff]
    %v442 = vld [vmem:[#allocation5 + $0xa60] sm:$0xff]
    %v443 = vld [vmem:[#allocation5 + $0xa68] sm:$0xff]
    %v444 = vld [vmem:[#allocation5 + $0xa70] sm:$0xff]
    %v445 = vld [vmem:[#allocation5 + $0xa78] sm:$0xff]
    %v446 = vld [vmem:[#allocation5 + $0xa80] sm:$0xff]
    %v447 = vld [vmem:[#allocation5 + $0xa88] sm:$0xff]
    %v448 = vld [vmem:[#allocation5 + $0xa90] sm:$0xff]
    %v449 = vld [vmem:[#allocation5 + $0xa98] sm:$0xff]
    %v450 = vld [vmem:[#allocation5 + $0xaa0] sm:$0xff]
    %v451 = vld [vmem:[#allocation5 + $0xaa8] sm:$0xff]
    %v452 = vld [vmem:[#allocation5 + $0xab0] sm:$0xff]
    %v453 = vld [vmem:[#allocation5 + $0xab8] sm:$0xff]
    %v454 = vld [vmem:[#allocation5 + $0xac0] sm:$0xff]
    %v455 = vld [vmem:[#allocation5 + $0xac8] sm:$0xff]
    %v456 = vld [vmem:[#allocation5 + $0xad0] sm:$0xff]
    %v457 = vld [vmem:[#allocation5 + $0xad8] sm:$0xff]
    %v458 = vld [vmem:[#allocation5 + $0xae0] sm:$0xff]
    %v459 = vld [vmem:[#allocation5 + $0xae8] sm:$0xff]
    %v460 = vld [vmem:[#allocation5 + $0xaf0] sm:$0xff]
    %v461 = vld [vmem:[#allocation5 + $0xaf8] sm:$0xff]
    %v462 = vld [vmem:[#allocation5 + $0xb00] sm:$0xff]
    %v463 = vld [vmem:[#allocation5 + $0xb08] sm:$0xff]
    %v464 = vld [vmem:[#allocation5 + $0xb10] sm:$0xff]
    %v465 = vld [vmem:[#allocation5 + $0xb18] sm:$0xff]
    %v466 = vld [vmem:[#allocation5 + $0xb20] sm:$0xff]
    %v467 = vld [vmem:[#allocation5 + $0xb28] sm:$0xff]
    %v468 = vld [vmem:[#allocation5 + $0xb30] sm:$0xff]
    %v469 = vld [vmem:[#allocation5 + $0xb38] sm:$0xff]
    %v470 = vld [vmem:[#allocation5 + $0xb40] sm:$0xff]
    %v471 = vld [vmem:[#allocation5 + $0xb48] sm:$0xff]
    %v472 = vld [vmem:[#allocation5 + $0xb50] sm:$0xff]
    %v473 = vld [vmem:[#allocation5 + $0xb58] sm:$0xff]
    %v474 = vld [vmem:[#allocation5 + $0xb60] sm:$0xff]
    %v475 = vld [vmem:[#allocation5 + $0xb68] sm:$0xff]
    %v476 = vld [vmem:[#allocation5 + $0xb70] sm:$0xff]
    %v477 = vld [vmem:[#allocation5 + $0xb78] sm:$0xff]
    %v478 = vld [vmem:[#allocation5 + $0xb80] sm:$0xff]
    %v479 = vld [vmem:[#allocation5 + $0xb88] sm:$0xff]
    %v480 = vld [vmem:[#allocation5 + $0xb90] sm:$0xff]
    %v481 = vld [vmem:[#allocation5 + $0xb98] sm:$0xff]
    %v482 = vld [vmem:[#allocation5 + $0xba0] sm:$0xff]
    %v483 = vld [vmem:[#allocation5 + $0xba8] sm:$0xff]
    %v484 = vld [vmem:[#allocation5 + $0xbb0] sm:$0xff]
    %v485 = vld [vmem:[#allocation5 + $0xbb8] sm:$0xff]
    %v486 = vld [vmem:[#allocation5 + $0xbc0] sm:$0xff]
    %v487 = vld [vmem:[#allocation5 + $0xbc8] sm:$0xff]
    %v488 = vld [vmem:[#allocation5 + $0xbd0] sm:$0xff]
    %v489 = vld [vmem:[#allocation5 + $0xbd8] sm:$0xff]
    %v490 = vld [vmem:[#allocation5 + $0xbe0] sm:$0xff]
    %v491 = vld [vmem:[#allocation5 + $0xbe8] sm:$0xff]
    %v492 = vld [vmem:[#allocation5 + $0xbf0] sm:$0xff]
    %v493 = vld [vmem:[#allocation5 + $0xbf8] sm:$0xff]
    %v494 = vld [vmem:[#allocation5 + $0xc00] sm:$0xff]
    %v495 = vld [vmem:[#allocation5 + $0xc08] sm:$0xff]
    %v496 = vld [vmem:[#allocation5 + $0xc10] sm:$0xff]
    %v497 = vld [vmem:[#allocation5 + $0xc18] sm:$0xff]
    %v498 = vld [vmem:[#allocation5 + $0xc20] sm:$0xff]
    %v499 = vld [vmem:[#allocation5 + $0xc28] sm:$0xff]
    %v500 = vld [vmem:[#allocation5 + $0xc30] sm:$0xff]
    %v501 = vld [vmem:[#allocation5 + $0xc38] sm:$0xff]
    %v502 = vld [vmem:[#allocation5 + $0xc40] sm:$0xff]
    %v503 = vld [vmem:[#allocation5 + $0xc48] sm:$0xff]
    %v504 = vld [vmem:[#allocation5 + $0xc50] sm:$0xff]
    %v505 = vld [vmem:[#allocation5 + $0xc58] sm:$0xff]
    %v506 = vld [vmem:[#allocation5 + $0xc60] sm:$0xff]
    %v507 = vld [vmem:[#allocation5 + $0xc68] sm:$0xff]
    %v508 = vld [vmem:[#allocation5 + $0xc70] sm:$0xff]
    %v509 = vld [vmem:[#allocation5 + $0xc78] sm:$0xff]
    %v510 = vld [vmem:[#allocation5 + $0xc80] sm:$0xff]
    %v511 = vld [vmem:[#allocation5 + $0xc88] sm:$0xff]
    %v512 = vld [vmem:[#allocation5 + $0xc90] sm:$0xff]
    %v513 = vld [vmem:[#allocation5 + $0xc98] sm:$0xff]
    %v514 = vld [vmem:[#allocation5 + $0xca0] sm:$0xff]
    %v515 = vld [vmem:[#allocation5 + $0xca8] sm:$0xff]
    %v516 = vld [vmem:[#allocation5 + $0xcb0] sm:$0xff]
    %v517 = vld [vmem:[#allocation5 + $0xcb8] sm:$0xff]
    %v518 = vld [vmem:[#allocation5 + $0xcc0] sm:$0xff]
    %v519 = vld [vmem:[#allocation5 + $0xcc8] sm:$0xff]
    %v520 = vld [vmem:[#allocation5 + $0xcd0] sm:$0xff]
    %v521 = vld [vmem:[#allocation5 + $0xcd8] sm:$0xff]
    %v522 = vld [vmem:[#allocation5 + $0xce0] sm:$0xff]
    %v523 = vld [vmem:[#allocation5 + $0xce8] sm:$0xff]
    %v524 = vld [vmem:[#allocation5 + $0xcf0] sm:$0xff]
    %v525 = vld [vmem:[#allocation5 + $0xcf8] sm:$0xff]
    %v526 = vld [vmem:[#allocation5 + $0xd00] sm:$0xff]
    %v527 = vld [vmem:[#allocation5 + $0xd08] sm:$0xff]
    %v528 = vld [vmem:[#allocation5 + $0xd10] sm:$0xff]
    %v529 = vld [vmem:[#allocation5 + $0xd18] sm:$0xff]
    %v530 = vld [vmem:[#allocation5 + $0xd20] sm:$0xff]
    %v531 = vld [vmem:[#allocation5 + $0xd28] sm:$0xff]
    %v532 = vld [vmem:[#allocation5 + $0xd30] sm:$0xff]
    %v533 = vld [vmem:[#allocation5 + $0xd38] sm:$0xff]
    %v534 = vld [vmem:[#allocation5 + $0xd40] sm:$0xff]
    %v535 = vld [vmem:[#allocation5 + $0xd48] sm:$0xff]
    %v536 = vld [vmem:[#allocation5 + $0xd50] sm:$0xff]
    %v537 = vld [vmem:[#allocation5 + $0xd58] sm:$0xff]
    %v538 = vld [vmem:[#allocation5 + $0xd60] sm:$0xff]
    %v539 = vld [vmem:[#allocation5 + $0xd68] sm:$0xff]
    %v540 = vld [vmem:[#allocation5 + $0xd70] sm:$0xff]
    %v541 = vld [vmem:[#allocation5 + $0xd78] sm:$0xff]
    %v542 = vld [vmem:[#allocation5 + $0xd80] sm:$0xff]
    %v543 = vld [vmem:[#allocation5 + $0xd88] sm:$0xff]
    %v544 = vld [vmem:[#allocation5 + $0xd90] sm:$0xff]
    %v545 = vld [vmem:[#allocation5 + $0xd98] sm:$0xff]
    %v546 = vld [vmem:[#allocation5 + $0xda0] sm:$0xff]
    %v547 = vld [vmem:[#allocation5 + $0xda8] sm:$0xff]
    %v548 = vld [vmem:[#allocation5 + $0xdb0] sm:$0xff]
    %v549 = vld [vmem:[#allocation5 + $0xdb8] sm:$0xff]
    %v550 = vld [vmem:[#allocation5 + $0xdc0] sm:$0xff]
    %v551 = vld [vmem:[#allocation5 + $0xdc8] sm:$0xff]
    %v552 = vld [vmem:[#allocation5 + $0xdd0] sm:$0xff]
    %v553 = vld [vmem:[#allocation5 + $0xdd8] sm:$0xff]
    %v554 = vld [vmem:[#allocation5 + $0xde0] sm:$0xff]
    %v555 = vld [vmem:[#allocation5 + $0xde8] sm:$0xff]
    %v556 = vld [vmem:[#allocation5 + $0xdf0] sm:$0xff]
    %v557 = vld [vmem:[#allocation5 + $0xdf8] sm:$0xff]
    %v558 = vld [vmem:[#allocation5 + $0xe00] sm:$0xff]
    %v559 = vld [vmem:[#allocation5 + $0xe08] sm:$0xff]
    %v560 = vld [vmem:[#allocation5 + $0xe10] sm:$0xff]
    %v561 = vld [vmem:[#allocation5 + $0xe18] sm:$0xff]
    %v562 = vld [vmem:[#allocation5 + $0xe20] sm:$0xff]
    %v563 = vld [vmem:[#allocation5 + $0xe28] sm:$0xff]
    %v564 = vld [vmem:[#allocation5 + $0xe30] sm:$0xff]
    %v565 = vld [vmem:[#allocation5 + $0xe38] sm:$0xff]
    %v566 = vld [vmem:[#allocation5 + $0xe40] sm:$0xff]
    %v567 = vld [vmem:[#allocation5 + $0xe48] sm:$0xff]
    %v568 = vld [vmem:[#allocation5 + $0xe50] sm:$0xff]
    %v569 = vld [vmem:[#allocation5 + $0xe58] sm:$0xff]
    %v570 = vld [vmem:[#allocation5 + $0xe60] sm:$0xff]
    %v571 = vld [vmem:[#allocation5 + $0xe68] sm:$0xff]
    %v572 = vld [vmem:[#allocation5 + $0xe70] sm:$0xff]
    %v573 = vld [vmem:[#allocation5 + $0xe78] sm:$0xff]
    %v574 = vld [vmem:[#allocation5 + $0xe80] sm:$0xff]
    %v575 = vld [vmem:[#allocation5 + $0xe88] sm:$0xff]
    %v576 = vld [vmem:[#allocation5 + $0xe90] sm:$0xff]
    %v577 = vld [vmem:[#allocation5 + $0xe98] sm:$0xff]
    %v578 = vld [vmem:[#allocation5 + $0xea0] sm:$0xff]
    %v579 = vld [vmem:[#allocation5 + $0xea8] sm:$0xff]
    %v580 = vld [vmem:[#allocation5 + $0xeb0] sm:$0xff]
    %v581 = vld [vmem:[#allocation5 + $0xeb8] sm:$0xff]
    %v582 = vld [vmem:[#allocation5 + $0xec0] sm:$0xff]
    %v583 = vld [vmem:[#allocation5 + $0xec8] sm:$0xff]
    %v584 = vld [vmem:[#allocation5 + $0xed0] sm:$0xff]
    %v585 = vld [vmem:[#allocation5 + $0xed8] sm:$0xff]
    %v586 = vld [vmem:[#allocation5 + $0xee0] sm:$0xff]
    %v587 = vld [vmem:[#allocation5 + $0xee8] sm:$0xff]
    %v588 = vld [vmem:[#allocation5 + $0xef0] sm:$0xff]
    %v589 = vld [vmem:[#allocation5 + $0xef8] sm:$0xff]
    %v590 = vld [vmem:[#allocation5 + $0xf00] sm:$0xff]
    %v591 = vld [vmem:[#allocation5 + $0xf08] sm:$0xff]
    %v592 = vld [vmem:[#allocation5 + $0xf10] sm:$0xff]
    %v593 = vld [vmem:[#allocation5 + $0xf18] sm:$0xff]
    %v594 = vld [vmem:[#allocation5 + $0xf20] sm:$0xff]
    %v595 = vld [vmem:[#allocation5 + $0xf28] sm:$0xff]
    %v596 = vld [vmem:[#allocation5 + $0xf30] sm:$0xff]
    %v597 = vld [vmem:[#allocation5 + $0xf38] sm:$0xff]
    %v598 = vld [vmem:[#allocation5 + $0xf40] sm:$0xff]
    %v599 = vld [vmem:[#allocation5 + $0xf48] sm:$0xff]
    %v600 = vld [vmem:[#allocation5 + $0xf50] sm:$0xff]
    %v601 = vld [vmem:[#allocation5 + $0xf58] sm:$0xff]
    %v602 = vld [vmem:[#allocation5 + $0xf60] sm:$0xff]
    %v603 = vld [vmem:[#allocation5 + $0xf68] sm:$0xff]
    %v604 = vld [vmem:[#allocation5 + $0xf70] sm:$0xff]
    %v605 = vld [vmem:[#allocation5 + $0xf78] sm:$0xff]
    %v606 = vld [vmem:[#allocation5 + $0xf80] sm:$0xff]
    %v607 = vld [vmem:[#allocation5 + $0xf88] sm:$0xff]
    %v608 = vld [vmem:[#allocation5 + $0xf90] sm:$0xff]
    %v609 = vld [vmem:[#allocation5 + $0xf98] sm:$0xff]
    %v610 = vld [vmem:[#allocation5 + $0xfa0] sm:$0xff]
    %v611 = vld [vmem:[#allocation5 + $0xfa8] sm:$0xff]
    %v612 = vld [vmem:[#allocation5 + $0xfb0] sm:$0xff]
    %v613 = vld [vmem:[#allocation5 + $0xfb8] sm:$0xff]
    %v614 = vld [vmem:[#allocation5 + $0xfc0] sm:$0xff]
    %v615 = vld [vmem:[#allocation5 + $0xfc8] sm:$0xff]
    %v616 = vld [vmem:[#allocation5 + $0xfd0] sm:$0xff]
    %v617 = vld [vmem:[#allocation5 + $0xfd8] sm:$0xff]
    %v618 = vld [vmem:[#allocation5 + $0xfe0] sm:$0xff]
    %v619 = vld [vmem:[#allocation5 + $0xfe8] sm:$0xff]
    %v620 = vld [vmem:[#allocation5 + $0xff0] sm:$0xff]
    %v621 = vld [vmem:[#allocation5 + $0xff8] sm:$0xff]
    %v622 = vld [vmem:[#allocation7] sm:$0xff]
    %v624 = vlaneseq
    %v625 = vshrl.u32 %v624, 7
    %v626 = vsub.s32 0, %v625
    %v627 = vrot.slane %v622, %v626
    %v628 = vlaneseq
    %v629 = vshrl.u32 %v628, 7
    %v630 = vsub.s32 1, %v629
    %v631 = vrot.slane %v622, %v630
    %v632 = vlaneseq
    %v633 = vshrl.u32 %v632, 7
    %v634 = vsub.s32 2, %v633
    %v635 = vrot.slane %v622, %v634
    %v636 = vlaneseq
    %v637 = vshrl.u32 %v636, 7
    %v638 = vsub.s32 3, %v637
    %v639 = vrot.slane %v622, %v638
    %v640 = vlaneseq
    %v641 = vshrl.u32 %v640, 7
    %v642 = vsub.s32 4, %v641
    %v643 = vrot.slane %v622, %v642
    %v644 = vlaneseq
    %v645 = vshrl.u32 %v644, 7
    %v646 = vsub.s32 5, %v645
    %v647 = vrot.slane %v622, %v646
    %v648 = vlaneseq
    %v649 = vshrl.u32 %v648, 7
    %v650 = vsub.s32 6, %v649
    %v651 = vrot.slane %v622, %v650
    %v652 = vlaneseq
    %v653 = vshrl.u32 %v652, 7
    %v654 = vsub.s32 7, %v653
    %v655 = vrot.slane %v622, %v654
    %v1176 = vunpack.c.l.b16 %v110
    %v1177 = vunpack.c.h.b16 %v110
    %v1178 = vunpack.c.l.b16 %v111
    %v1179 = vunpack.c.h.b16 %v111
    %v1180 = vunpack.c.l.b16 %v112
    %v1181 = vunpack.c.h.b16 %v112
    %v1182 = vunpack.c.l.b16 %v113
    %v1183 = vunpack.c.h.b16 %v113
    %v1184 = vunpack.c.l.b16 %v114
    %v1185 = vunpack.c.h.b16 %v114
    %v1186 = vunpack.c.l.b16 %v115
    %v1187 = vunpack.c.h.b16 %v115
    %v1188 = vunpack.c.l.b16 %v116
    %v1189 = vunpack.c.h.b16 %v116
    %v1190 = vunpack.c.l.b16 %v117
    %v1191 = vunpack.c.h.b16 %v117
    %v1192 = vunpack.c.l.b16 %v118
    %v1193 = vunpack.c.h.b16 %v118
    %v1194 = vunpack.c.l.b16 %v119
    %v1195 = vunpack.c.h.b16 %v119
    %v1196 = vunpack.c.l.b16 %v120
    %v1197 = vunpack.c.h.b16 %v120
    %v1198 = vunpack.c.l.b16 %v121
    %v1199 = vunpack.c.h.b16 %v121
    %v1200 = vunpack.c.l.b16 %v122
    %v1201 = vunpack.c.h.b16 %v122
    %v1202 = vunpack.c.l.b16 %v123
    %v1203 = vunpack.c.h.b16 %v123
    %v1204 = vunpack.c.l.b16 %v124
    %v1205 = vunpack.c.h.b16 %v124
    %v1206 = vunpack.c.l.b16 %v125
    %v1207 = vunpack.c.h.b16 %v125
    %v1208 = vunpack.c.l.b16 %v126
    %v1209 = vunpack.c.h.b16 %v126
    %v1210 = vunpack.c.l.b16 %v127
    %v1211 = vunpack.c.h.b16 %v127
    %v1212 = vunpack.c.l.b16 %v128
    %v1213 = vunpack.c.h.b16 %v128
    %v1214 = vunpack.c.l.b16 %v129
    %v1215 = vunpack.c.h.b16 %v129
    %v1216 = vunpack.c.l.b16 %v130
    %v1217 = vunpack.c.h.b16 %v130
    %v1218 = vunpack.c.l.b16 %v131
    %v1219 = vunpack.c.h.b16 %v131
    %v1220 = vunpack.c.l.b16 %v132
    %v1221 = vunpack.c.h.b16 %v132
    %v1222 = vunpack.c.l.b16 %v133
    %v1223 = vunpack.c.h.b16 %v133
    %v1224 = vunpack.c.l.b16 %v134
    %v1225 = vunpack.c.h.b16 %v134
    %v1226 = vunpack.c.l.b16 %v135
    %v1227 = vunpack.c.h.b16 %v135
    %v1228 = vunpack.c.l.b16 %v136
    %v1229 = vunpack.c.h.b16 %v136
    %v1230 = vunpack.c.l.b16 %v137
    %v1231 = vunpack.c.h.b16 %v137
    %v1232 = vunpack.c.l.b16 %v138
    %v1233 = vunpack.c.h.b16 %v138
    %v1234 = vunpack.c.l.b16 %v139
    %v1235 = vunpack.c.h.b16 %v139
    %v1236 = vunpack.c.l.b16 %v140
    %v1237 = vunpack.c.h.b16 %v140
    %v1238 = vunpack.c.l.b16 %v141
    %v1239 = vunpack.c.h.b16 %v141
    %v1240 = vunpack.c.l.b16 %v142
    %v1241 = vunpack.c.h.b16 %v142
    %v1242 = vunpack.c.l.b16 %v143
    %v1243 = vunpack.c.h.b16 %v143
    %v1244 = vunpack.c.l.b16 %v144
    %v1245 = vunpack.c.h.b16 %v144
    %v1246 = vunpack.c.l.b16 %v145
    %v1247 = vunpack.c.h.b16 %v145
    %v1248 = vunpack.c.l.b16 %v146
    %v1249 = vunpack.c.h.b16 %v146
    %v1250 = vunpack.c.l.b16 %v147
    %v1251 = vunpack.c.h.b16 %v147
    %v1252 = vunpack.c.l.b16 %v148
    %v1253 = vunpack.c.h.b16 %v148
    %v1254 = vunpack.c.l.b16 %v149
    %v1255 = vunpack.c.h.b16 %v149
    %v1256 = vunpack.c.l.b16 %v150
    %v1257 = vunpack.c.h.b16 %v150
    %v1258 = vunpack.c.l.b16 %v151
    %v1259 = vunpack.c.h.b16 %v151
    %v1260 = vunpack.c.l.b16 %v152
    %v1261 = vunpack.c.h.b16 %v152
    %v1262 = vunpack.c.l.b16 %v153
    %v1263 = vunpack.c.h.b16 %v153
    %v1264 = vunpack.c.l.b16 %v154
    %v1265 = vunpack.c.h.b16 %v154
    %v1266 = vunpack.c.l.b16 %v155
    %v1267 = vunpack.c.h.b16 %v155
    %v1268 = vunpack.c.l.b16 %v156
    %v1269 = vunpack.c.h.b16 %v156
    %v1270 = vunpack.c.l.b16 %v157
    %v1271 = vunpack.c.h.b16 %v157
    %v1272 = vunpack.c.l.b16 %v158
    %v1273 = vunpack.c.h.b16 %v158
    %v1274 = vunpack.c.l.b16 %v159
    %v1275 = vunpack.c.h.b16 %v159
    %v1276 = vunpack.c.l.b16 %v160
    %v1277 = vunpack.c.h.b16 %v160
    %v1278 = vunpack.c.l.b16 %v161
    %v1279 = vunpack.c.h.b16 %v161
    %v1280 = vunpack.c.l.b16 %v162
    %v1281 = vunpack.c.h.b16 %v162
    %v1282 = vunpack.c.l.b16 %v163
    %v1283 = vunpack.c.h.b16 %v163
    %v1284 = vunpack.c.l.b16 %v164
    %v1285 = vunpack.c.h.b16 %v164
    %v1286 = vunpack.c.l.b16 %v165
    %v1287 = vunpack.c.h.b16 %v165
    %v1288 = vunpack.c.l.b16 %v166
    %v1289 = vunpack.c.h.b16 %v166
    %v1290 = vunpack.c.l.b16 %v167
    %v1291 = vunpack.c.h.b16 %v167
    %v1292 = vunpack.c.l.b16 %v168
    %v1293 = vunpack.c.h.b16 %v168
    %v1294 = vunpack.c.l.b16 %v169
    %v1295 = vunpack.c.h.b16 %v169
    %v1296 = vunpack.c.l.b16 %v170
    %v1297 = vunpack.c.h.b16 %v170
    %v1298 = vunpack.c.l.b16 %v171
    %v1299 = vunpack.c.h.b16 %v171
    %v1300 = vunpack.c.l.b16 %v172
    %v1301 = vunpack.c.h.b16 %v172
    %v1302 = vunpack.c.l.b16 %v173
    %v1303 = vunpack.c.h.b16 %v173
    %v1304 = vunpack.c.l.b16 %v174
    %v1305 = vunpack.c.h.b16 %v174
    %v1306 = vunpack.c.l.b16 %v175
    %v1307 = vunpack.c.h.b16 %v175
    %v1308 = vunpack.c.l.b16 %v176
    %v1309 = vunpack.c.h.b16 %v176
    %v1310 = vunpack.c.l.b16 %v177
    %v1311 = vunpack.c.h.b16 %v177
    %v1312 = vunpack.c.l.b16 %v178
    %v1313 = vunpack.c.h.b16 %v178
    %v1314 = vunpack.c.l.b16 %v179
    %v1315 = vunpack.c.h.b16 %v179
    %v1316 = vunpack.c.l.b16 %v180
    %v1317 = vunpack.c.h.b16 %v180
    %v1318 = vunpack.c.l.b16 %v181
    %v1319 = vunpack.c.h.b16 %v181
    %v1320 = vunpack.c.l.b16 %v182
    %v1321 = vunpack.c.h.b16 %v182
    %v1322 = vunpack.c.l.b16 %v183
    %v1323 = vunpack.c.h.b16 %v183
    %v1324 = vunpack.c.l.b16 %v184
    %v1325 = vunpack.c.h.b16 %v184
    %v1326 = vunpack.c.l.b16 %v185
    %v1327 = vunpack.c.h.b16 %v185
    %v1328 = vunpack.c.l.b16 %v186
    %v1329 = vunpack.c.h.b16 %v186
    %v1330 = vunpack.c.l.b16 %v187
    %v1331 = vunpack.c.h.b16 %v187
    %v1332 = vunpack.c.l.b16 %v188
    %v1333 = vunpack.c.h.b16 %v188
    %v1334 = vunpack.c.l.b16 %v189
    %v1335 = vunpack.c.h.b16 %v189
    %v1336 = vunpack.c.l.b16 %v190
    %v1337 = vunpack.c.h.b16 %v190
    %v1338 = vunpack.c.l.b16 %v191
    %v1339 = vunpack.c.h.b16 %v191
    %v1340 = vunpack.c.l.b16 %v192
    %v1341 = vunpack.c.h.b16 %v192
    %v1342 = vunpack.c.l.b16 %v193
    %v1343 = vunpack.c.h.b16 %v193
    %v1344 = vunpack.c.l.b16 %v194
    %v1345 = vunpack.c.h.b16 %v194
    %v1346 = vunpack.c.l.b16 %v195
    %v1347 = vunpack.c.h.b16 %v195
    %v1348 = vunpack.c.l.b16 %v196
    %v1349 = vunpack.c.h.b16 %v196
    %v1350 = vunpack.c.l.b16 %v197
    %v1351 = vunpack.c.h.b16 %v197
    %v1352 = vunpack.c.l.b16 %v198
    %v1353 = vunpack.c.h.b16 %v198
    %v1354 = vunpack.c.l.b16 %v199
    %v1355 = vunpack.c.h.b16 %v199
    %v1356 = vunpack.c.l.b16 %v200
    %v1357 = vunpack.c.h.b16 %v200
    %v1358 = vunpack.c.l.b16 %v201
    %v1359 = vunpack.c.h.b16 %v201
    %v1360 = vunpack.c.l.b16 %v202
    %v1361 = vunpack.c.h.b16 %v202
    %v1362 = vunpack.c.l.b16 %v203
    %v1363 = vunpack.c.h.b16 %v203
    %v1364 = vunpack.c.l.b16 %v204
    %v1365 = vunpack.c.h.b16 %v204
    %v1366 = vunpack.c.l.b16 %v205
    %v1367 = vunpack.c.h.b16 %v205
    %v1368 = vunpack.c.l.b16 %v206
    %v1369 = vunpack.c.h.b16 %v206
    %v1370 = vunpack.c.l.b16 %v207
    %v1371 = vunpack.c.h.b16 %v207
    %v1372 = vunpack.c.l.b16 %v208
    %v1373 = vunpack.c.h.b16 %v208
    %v1374 = vunpack.c.l.b16 %v209
    %v1375 = vunpack.c.h.b16 %v209
    %v1376 = vunpack.c.l.b16 %v210
    %v1377 = vunpack.c.h.b16 %v210
    %v1378 = vunpack.c.l.b16 %v211
    %v1379 = vunpack.c.h.b16 %v211
    %v1380 = vunpack.c.l.b16 %v212
    %v1381 = vunpack.c.h.b16 %v212
    %v1382 = vunpack.c.l.b16 %v213
    %v1383 = vunpack.c.h.b16 %v213
    %v1384 = vunpack.c.l.b16 %v214
    %v1385 = vunpack.c.h.b16 %v214
    %v1386 = vunpack.c.l.b16 %v215
    %v1387 = vunpack.c.h.b16 %v215
    %v1388 = vunpack.c.l.b16 %v216
    %v1389 = vunpack.c.h.b16 %v216
    %v1390 = vunpack.c.l.b16 %v217
    %v1391 = vunpack.c.h.b16 %v217
    %v1392 = vunpack.c.l.b16 %v218
    %v1393 = vunpack.c.h.b16 %v218
    %v1394 = vunpack.c.l.b16 %v219
    %v1395 = vunpack.c.h.b16 %v219
    %v1396 = vunpack.c.l.b16 %v220
    %v1397 = vunpack.c.h.b16 %v220
    %v1398 = vunpack.c.l.b16 %v221
    %v1399 = vunpack.c.h.b16 %v221
    %v1400 = vunpack.c.l.b16 %v222
    %v1401 = vunpack.c.h.b16 %v222
    %v1402 = vunpack.c.l.b16 %v223
    %v1403 = vunpack.c.h.b16 %v223
    %v1404 = vunpack.c.l.b16 %v224
    %v1405 = vunpack.c.h.b16 %v224
    %v1406 = vunpack.c.l.b16 %v225
    %v1407 = vunpack.c.h.b16 %v225
    %v1408 = vunpack.c.l.b16 %v226
    %v1409 = vunpack.c.h.b16 %v226
    %v1410 = vunpack.c.l.b16 %v227
    %v1411 = vunpack.c.h.b16 %v227
    %v1412 = vunpack.c.l.b16 %v228
    %v1413 = vunpack.c.h.b16 %v228
    %v1414 = vunpack.c.l.b16 %v229
    %v1415 = vunpack.c.h.b16 %v229
    %v1416 = vunpack.c.l.b16 %v230
    %v1417 = vunpack.c.h.b16 %v230
    %v1418 = vunpack.c.l.b16 %v231
    %v1419 = vunpack.c.h.b16 %v231
    %v1420 = vunpack.c.l.b16 %v232
    %v1421 = vunpack.c.h.b16 %v232
    %v1422 = vunpack.c.l.b16 %v233
    %v1423 = vunpack.c.h.b16 %v233
    %v1424 = vunpack.c.l.b16 %v234
    %v1425 = vunpack.c.h.b16 %v234
    %v1426 = vunpack.c.l.b16 %v235
    %v1427 = vunpack.c.h.b16 %v235
    %v1428 = vunpack.c.l.b16 %v236
    %v1429 = vunpack.c.h.b16 %v236
    %v1430 = vunpack.c.l.b16 %v237
    %v1431 = vunpack.c.h.b16 %v237
    %v1432 = vunpack.c.l.b16 %v238
    %v1433 = vunpack.c.h.b16 %v238
    %v1434 = vunpack.c.l.b16 %v239
    %v1435 = vunpack.c.h.b16 %v239
    %v1436 = vunpack.c.l.b16 %v240
    %v1437 = vunpack.c.h.b16 %v240
    %v1438 = vunpack.c.l.b16 %v241
    %v1439 = vunpack.c.h.b16 %v241
    %v1440 = vunpack.c.l.b16 %v242
    %v1441 = vunpack.c.h.b16 %v242
    %v1442 = vunpack.c.l.b16 %v243
    %v1443 = vunpack.c.h.b16 %v243
    %v1444 = vunpack.c.l.b16 %v244
    %v1445 = vunpack.c.h.b16 %v244
    %v1446 = vunpack.c.l.b16 %v245
    %v1447 = vunpack.c.h.b16 %v245
    %v1448 = vunpack.c.l.b16 %v246
    %v1449 = vunpack.c.h.b16 %v246
    %v1450 = vunpack.c.l.b16 %v247
    %v1451 = vunpack.c.h.b16 %v247
    %v1452 = vunpack.c.l.b16 %v248
    %v1453 = vunpack.c.h.b16 %v248
    %v1454 = vunpack.c.l.b16 %v249
    %v1455 = vunpack.c.h.b16 %v249
    %v1456 = vunpack.c.l.b16 %v250
    %v1457 = vunpack.c.h.b16 %v250
    %v1458 = vunpack.c.l.b16 %v251
    %v1459 = vunpack.c.h.b16 %v251
    %v1460 = vunpack.c.l.b16 %v252
    %v1461 = vunpack.c.h.b16 %v252
    %v1462 = vunpack.c.l.b16 %v253
    %v1463 = vunpack.c.h.b16 %v253
    %v1464 = vunpack.c.l.b16 %v254
    %v1465 = vunpack.c.h.b16 %v254
    %v1466 = vunpack.c.l.b16 %v255
    %v1467 = vunpack.c.h.b16 %v255
    %v1468 = vunpack.c.l.b16 %v256
    %v1469 = vunpack.c.h.b16 %v256
    %v1470 = vunpack.c.l.b16 %v257
    %v1471 = vunpack.c.h.b16 %v257
    %v1472 = vunpack.c.l.b16 %v258
    %v1473 = vunpack.c.h.b16 %v258
    %v1474 = vunpack.c.l.b16 %v259
    %v1475 = vunpack.c.h.b16 %v259
    %v1476 = vunpack.c.l.b16 %v260
    %v1477 = vunpack.c.h.b16 %v260
    %v1478 = vunpack.c.l.b16 %v261
    %v1479 = vunpack.c.h.b16 %v261
    %v1480 = vunpack.c.l.b16 %v262
    %v1481 = vunpack.c.h.b16 %v262
    %v1482 = vunpack.c.l.b16 %v263
    %v1483 = vunpack.c.h.b16 %v263
    %v1484 = vunpack.c.l.b16 %v264
    %v1485 = vunpack.c.h.b16 %v264
    %v1486 = vunpack.c.l.b16 %v265
    %v1487 = vunpack.c.h.b16 %v265
    %v1488 = vunpack.c.l.b16 %v266
    %v1489 = vunpack.c.h.b16 %v266
    %v1490 = vunpack.c.l.b16 %v267
    %v1491 = vunpack.c.h.b16 %v267
    %v1492 = vunpack.c.l.b16 %v268
    %v1493 = vunpack.c.h.b16 %v268
    %v1494 = vunpack.c.l.b16 %v269
    %v1495 = vunpack.c.h.b16 %v269
    %v1496 = vunpack.c.l.b16 %v270
    %v1497 = vunpack.c.h.b16 %v270
    %v1498 = vunpack.c.l.b16 %v271
    %v1499 = vunpack.c.h.b16 %v271
    %v1500 = vunpack.c.l.b16 %v272
    %v1501 = vunpack.c.h.b16 %v272
    %v1502 = vunpack.c.l.b16 %v273
    %v1503 = vunpack.c.h.b16 %v273
    %v1504 = vunpack.c.l.b16 %v274
    %v1505 = vunpack.c.h.b16 %v274
    %v1506 = vunpack.c.l.b16 %v275
    %v1507 = vunpack.c.h.b16 %v275
    %v1508 = vunpack.c.l.b16 %v276
    %v1509 = vunpack.c.h.b16 %v276
    %v1510 = vunpack.c.l.b16 %v277
    %v1511 = vunpack.c.h.b16 %v277
    %v1512 = vunpack.c.l.b16 %v278
    %v1513 = vunpack.c.h.b16 %v278
    %v1514 = vunpack.c.l.b16 %v279
    %v1515 = vunpack.c.h.b16 %v279
    %v1516 = vunpack.c.l.b16 %v280
    %v1517 = vunpack.c.h.b16 %v280
    %v1518 = vunpack.c.l.b16 %v281
    %v1519 = vunpack.c.h.b16 %v281
    %v1520 = vunpack.c.l.b16 %v282
    %v1521 = vunpack.c.h.b16 %v282
    %v1522 = vunpack.c.l.b16 %v283
    %v1523 = vunpack.c.h.b16 %v283
    %v1524 = vunpack.c.l.b16 %v284
    %v1525 = vunpack.c.h.b16 %v284
    %v1526 = vunpack.c.l.b16 %v285
    %v1527 = vunpack.c.h.b16 %v285
    %v1528 = vunpack.c.l.b16 %v286
    %v1529 = vunpack.c.h.b16 %v286
    %v1530 = vunpack.c.l.b16 %v287
    %v1531 = vunpack.c.h.b16 %v287
    %v1532 = vunpack.c.l.b16 %v288
    %v1533 = vunpack.c.h.b16 %v288
    %v1534 = vunpack.c.l.b16 %v289
    %v1535 = vunpack.c.h.b16 %v289
    %v1536 = vunpack.c.l.b16 %v290
    %v1537 = vunpack.c.h.b16 %v290
    %v1538 = vunpack.c.l.b16 %v291
    %v1539 = vunpack.c.h.b16 %v291
    %v1540 = vunpack.c.l.b16 %v292
    %v1541 = vunpack.c.h.b16 %v292
    %v1542 = vunpack.c.l.b16 %v293
    %v1543 = vunpack.c.h.b16 %v293
    %v1544 = vunpack.c.l.b16 %v294
    %v1545 = vunpack.c.h.b16 %v294
    %v1546 = vunpack.c.l.b16 %v295
    %v1547 = vunpack.c.h.b16 %v295
    %v1548 = vunpack.c.l.b16 %v296
    %v1549 = vunpack.c.h.b16 %v296
    %v1550 = vunpack.c.l.b16 %v297
    %v1551 = vunpack.c.h.b16 %v297
    %v1552 = vunpack.c.l.b16 %v298
    %v1553 = vunpack.c.h.b16 %v298
    %v1554 = vunpack.c.l.b16 %v299
    %v1555 = vunpack.c.h.b16 %v299
    %v1556 = vunpack.c.l.b16 %v300
    %v1557 = vunpack.c.h.b16 %v300
    %v1558 = vunpack.c.l.b16 %v301
    %v1559 = vunpack.c.h.b16 %v301
    %v1560 = vunpack.c.l.b16 %v302
    %v1561 = vunpack.c.h.b16 %v302
    %v1562 = vunpack.c.l.b16 %v303
    %v1563 = vunpack.c.h.b16 %v303
    %v1564 = vunpack.c.l.b16 %v304
    %v1565 = vunpack.c.h.b16 %v304
    %v1566 = vunpack.c.l.b16 %v305
    %v1567 = vunpack.c.h.b16 %v305
    %v1568 = vunpack.c.l.b16 %v306
    %v1569 = vunpack.c.h.b16 %v306
    %v1570 = vunpack.c.l.b16 %v307
    %v1571 = vunpack.c.h.b16 %v307
    %v1572 = vunpack.c.l.b16 %v308
    %v1573 = vunpack.c.h.b16 %v308
    %v1574 = vunpack.c.l.b16 %v309
    %v1575 = vunpack.c.h.b16 %v309
    %v1576 = vunpack.c.l.b16 %v310
    %v1577 = vunpack.c.h.b16 %v310
    %v1578 = vunpack.c.l.b16 %v311
    %v1579 = vunpack.c.h.b16 %v311
    %v1580 = vunpack.c.l.b16 %v312
    %v1581 = vunpack.c.h.b16 %v312
    %v1582 = vunpack.c.l.b16 %v313
    %v1583 = vunpack.c.h.b16 %v313
    %v1584 = vunpack.c.l.b16 %v314
    %v1585 = vunpack.c.h.b16 %v314
    %v1586 = vunpack.c.l.b16 %v315
    %v1587 = vunpack.c.h.b16 %v315
    %v1588 = vunpack.c.l.b16 %v316
    %v1589 = vunpack.c.h.b16 %v316
    %v1590 = vunpack.c.l.b16 %v317
    %v1591 = vunpack.c.h.b16 %v317
    %v1592 = vunpack.c.l.b16 %v318
    %v1593 = vunpack.c.h.b16 %v318
    %v1594 = vunpack.c.l.b16 %v319
    %v1595 = vunpack.c.h.b16 %v319
    %v1596 = vunpack.c.l.b16 %v320
    %v1597 = vunpack.c.h.b16 %v320
    %v1598 = vunpack.c.l.b16 %v321
    %v1599 = vunpack.c.h.b16 %v321
    %v1600 = vunpack.c.l.b16 %v322
    %v1601 = vunpack.c.h.b16 %v322
    %v1602 = vunpack.c.l.b16 %v323
    %v1603 = vunpack.c.h.b16 %v323
    %v1604 = vunpack.c.l.b16 %v324
    %v1605 = vunpack.c.h.b16 %v324
    %v1606 = vunpack.c.l.b16 %v325
    %v1607 = vunpack.c.h.b16 %v325
    %v1608 = vunpack.c.l.b16 %v326
    %v1609 = vunpack.c.h.b16 %v326
    %v1610 = vunpack.c.l.b16 %v327
    %v1611 = vunpack.c.h.b16 %v327
    %v1612 = vunpack.c.l.b16 %v328
    %v1613 = vunpack.c.h.b16 %v328
    %v1614 = vunpack.c.l.b16 %v329
    %v1615 = vunpack.c.h.b16 %v329
    %v1616 = vunpack.c.l.b16 %v330
    %v1617 = vunpack.c.h.b16 %v330
    %v1618 = vunpack.c.l.b16 %v331
    %v1619 = vunpack.c.h.b16 %v331
    %v1620 = vunpack.c.l.b16 %v332
    %v1621 = vunpack.c.h.b16 %v332
    %v1622 = vunpack.c.l.b16 %v333
    %v1623 = vunpack.c.h.b16 %v333
    %v1624 = vunpack.c.l.b16 %v334
    %v1625 = vunpack.c.h.b16 %v334
    %v1626 = vunpack.c.l.b16 %v335
    %v1627 = vunpack.c.h.b16 %v335
    %v1628 = vunpack.c.l.b16 %v336
    %v1629 = vunpack.c.h.b16 %v336
    %v1630 = vunpack.c.l.b16 %v337
    %v1631 = vunpack.c.h.b16 %v337
    %v1632 = vunpack.c.l.b16 %v338
    %v1633 = vunpack.c.h.b16 %v338
    %v1634 = vunpack.c.l.b16 %v339
    %v1635 = vunpack.c.h.b16 %v339
    %v1636 = vunpack.c.l.b16 %v340
    %v1637 = vunpack.c.h.b16 %v340
    %v1638 = vunpack.c.l.b16 %v341
    %v1639 = vunpack.c.h.b16 %v341
    %v1640 = vunpack.c.l.b16 %v342
    %v1641 = vunpack.c.h.b16 %v342
    %v1642 = vunpack.c.l.b16 %v343
    %v1643 = vunpack.c.h.b16 %v343
    %v1644 = vunpack.c.l.b16 %v344
    %v1645 = vunpack.c.h.b16 %v344
    %v1646 = vunpack.c.l.b16 %v345
    %v1647 = vunpack.c.h.b16 %v345
    %v1648 = vunpack.c.l.b16 %v346
    %v1649 = vunpack.c.h.b16 %v346
    %v1650 = vunpack.c.l.b16 %v347
    %v1651 = vunpack.c.h.b16 %v347
    %v1652 = vunpack.c.l.b16 %v348
    %v1653 = vunpack.c.h.b16 %v348
    %v1654 = vunpack.c.l.b16 %v349
    %v1655 = vunpack.c.h.b16 %v349
    %v1656 = vunpack.c.l.b16 %v350
    %v1657 = vunpack.c.h.b16 %v350
    %v1658 = vunpack.c.l.b16 %v351
    %v1659 = vunpack.c.h.b16 %v351
    %v1660 = vunpack.c.l.b16 %v352
    %v1661 = vunpack.c.h.b16 %v352
    %v1662 = vunpack.c.l.b16 %v353
    %v1663 = vunpack.c.h.b16 %v353
    %v1664 = vunpack.c.l.b16 %v354
    %v1665 = vunpack.c.h.b16 %v354
    %v1666 = vunpack.c.l.b16 %v355
    %v1667 = vunpack.c.h.b16 %v355
    %v1668 = vunpack.c.l.b16 %v356
    %v1669 = vunpack.c.h.b16 %v356
    %v1670 = vunpack.c.l.b16 %v357
    %v1671 = vunpack.c.h.b16 %v357
    %v1672 = vunpack.c.l.b16 %v358
    %v1673 = vunpack.c.h.b16 %v358
    %v1674 = vunpack.c.l.b16 %v359
    %v1675 = vunpack.c.h.b16 %v359
    %v1676 = vunpack.c.l.b16 %v360
    %v1677 = vunpack.c.h.b16 %v360
    %v1678 = vunpack.c.l.b16 %v361
    %v1679 = vunpack.c.h.b16 %v361
    %v1680 = vunpack.c.l.b16 %v362
    %v1681 = vunpack.c.h.b16 %v362
    %v1682 = vunpack.c.l.b16 %v363
    %v1683 = vunpack.c.h.b16 %v363
    %v1684 = vunpack.c.l.b16 %v364
    %v1685 = vunpack.c.h.b16 %v364
    %v1686 = vunpack.c.l.b16 %v365
    %v1687 = vunpack.c.h.b16 %v365
    %v1688 = vunpack.c.l.b16 %v366
    %v1689 = vunpack.c.h.b16 %v366
    %v1690 = vunpack.c.l.b16 %v367
    %v1691 = vunpack.c.h.b16 %v367
    %v1692 = vunpack.c.l.b16 %v368
    %v1693 = vunpack.c.h.b16 %v368
    %v1694 = vunpack.c.l.b16 %v369
    %v1695 = vunpack.c.h.b16 %v369
    %v1696 = vunpack.c.l.b16 %v370
    %v1697 = vunpack.c.h.b16 %v370
    %v1698 = vunpack.c.l.b16 %v371
    %v1699 = vunpack.c.h.b16 %v371
    %v1700 = vunpack.c.l.b16 %v372
    %v1701 = vunpack.c.h.b16 %v372
    %v1702 = vunpack.c.l.b16 %v373
    %v1703 = vunpack.c.h.b16 %v373
    %v1704 = vunpack.c.l.b16 %v374
    %v1705 = vunpack.c.h.b16 %v374
    %v1706 = vunpack.c.l.b16 %v375
    %v1707 = vunpack.c.h.b16 %v375
    %v1708 = vunpack.c.l.b16 %v376
    %v1709 = vunpack.c.h.b16 %v376
    %v1710 = vunpack.c.l.b16 %v377
    %v1711 = vunpack.c.h.b16 %v377
    %v1712 = vunpack.c.l.b16 %v378
    %v1713 = vunpack.c.h.b16 %v378
    %v1714 = vunpack.c.l.b16 %v379
    %v1715 = vunpack.c.h.b16 %v379
    %v1716 = vunpack.c.l.b16 %v380
    %v1717 = vunpack.c.h.b16 %v380
    %v1718 = vunpack.c.l.b16 %v381
    %v1719 = vunpack.c.h.b16 %v381
    %v1720 = vunpack.c.l.b16 %v382
    %v1721 = vunpack.c.h.b16 %v382
    %v1722 = vunpack.c.l.b16 %v383
    %v1723 = vunpack.c.h.b16 %v383
    %v1724 = vunpack.c.l.b16 %v384
    %v1725 = vunpack.c.h.b16 %v384
    %v1726 = vunpack.c.l.b16 %v385
    %v1727 = vunpack.c.h.b16 %v385
    %v1728 = vunpack.c.l.b16 %v386
    %v1729 = vunpack.c.h.b16 %v386
    %v1730 = vunpack.c.l.b16 %v387
    %v1731 = vunpack.c.h.b16 %v387
    %v1732 = vunpack.c.l.b16 %v388
    %v1733 = vunpack.c.h.b16 %v388
    %v1734 = vunpack.c.l.b16 %v389
    %v1735 = vunpack.c.h.b16 %v389
    %v1736 = vunpack.c.l.b16 %v390
    %v1737 = vunpack.c.h.b16 %v390
    %v1738 = vunpack.c.l.b16 %v391
    %v1739 = vunpack.c.h.b16 %v391
    %v1740 = vunpack.c.l.b16 %v392
    %v1741 = vunpack.c.h.b16 %v392
    %v1742 = vunpack.c.l.b16 %v393
    %v1743 = vunpack.c.h.b16 %v393
    %v1744 = vunpack.c.l.b16 %v394
    %v1745 = vunpack.c.h.b16 %v394
    %v1746 = vunpack.c.l.b16 %v395
    %v1747 = vunpack.c.h.b16 %v395
    %v1748 = vunpack.c.l.b16 %v396
    %v1749 = vunpack.c.h.b16 %v396
    %v1750 = vunpack.c.l.b16 %v397
    %v1751 = vunpack.c.h.b16 %v397
    %v1752 = vunpack.c.l.b16 %v398
    %v1753 = vunpack.c.h.b16 %v398
    %v1754 = vunpack.c.l.b16 %v399
    %v1755 = vunpack.c.h.b16 %v399
    %v1756 = vunpack.c.l.b16 %v400
    %v1757 = vunpack.c.h.b16 %v400
    %v1758 = vunpack.c.l.b16 %v401
    %v1759 = vunpack.c.h.b16 %v401
    %v1760 = vunpack.c.l.b16 %v402
    %v1761 = vunpack.c.h.b16 %v402
    %v1762 = vunpack.c.l.b16 %v403
    %v1763 = vunpack.c.h.b16 %v403
    %v1764 = vunpack.c.l.b16 %v404
    %v1765 = vunpack.c.h.b16 %v404
    %v1766 = vunpack.c.l.b16 %v405
    %v1767 = vunpack.c.h.b16 %v405
    %v1768 = vunpack.c.l.b16 %v406
    %v1769 = vunpack.c.h.b16 %v406
    %v1770 = vunpack.c.l.b16 %v407
    %v1771 = vunpack.c.h.b16 %v407
    %v1772 = vunpack.c.l.b16 %v408
    %v1773 = vunpack.c.h.b16 %v408
    %v1774 = vunpack.c.l.b16 %v409
    %v1775 = vunpack.c.h.b16 %v409
    %v1776 = vunpack.c.l.b16 %v410
    %v1777 = vunpack.c.h.b16 %v410
    %v1778 = vunpack.c.l.b16 %v411
    %v1779 = vunpack.c.h.b16 %v411
    %v1780 = vunpack.c.l.b16 %v412
    %v1781 = vunpack.c.h.b16 %v412
    %v1782 = vunpack.c.l.b16 %v413
    %v1783 = vunpack.c.h.b16 %v413
    %v1784 = vunpack.c.l.b16 %v414
    %v1785 = vunpack.c.h.b16 %v414
    %v1786 = vunpack.c.l.b16 %v415
    %v1787 = vunpack.c.h.b16 %v415
    %v1788 = vunpack.c.l.b16 %v416
    %v1789 = vunpack.c.h.b16 %v416
    %v1790 = vunpack.c.l.b16 %v417
    %v1791 = vunpack.c.h.b16 %v417
    %v1792 = vunpack.c.l.b16 %v418
    %v1793 = vunpack.c.h.b16 %v418
    %v1794 = vunpack.c.l.b16 %v419
    %v1795 = vunpack.c.h.b16 %v419
    %v1796 = vunpack.c.l.b16 %v420
    %v1797 = vunpack.c.h.b16 %v420
    %v1798 = vunpack.c.l.b16 %v421
    %v1799 = vunpack.c.h.b16 %v421
    %v1800 = vunpack.c.l.b16 %v422
    %v1801 = vunpack.c.h.b16 %v422
    %v1802 = vunpack.c.l.b16 %v423
    %v1803 = vunpack.c.h.b16 %v423
    %v1804 = vunpack.c.l.b16 %v424
    %v1805 = vunpack.c.h.b16 %v424
    %v1806 = vunpack.c.l.b16 %v425
    %v1807 = vunpack.c.h.b16 %v425
    %v1808 = vunpack.c.l.b16 %v426
    %v1809 = vunpack.c.h.b16 %v426
    %v1810 = vunpack.c.l.b16 %v427
    %v1811 = vunpack.c.h.b16 %v427
    %v1812 = vunpack.c.l.b16 %v428
    %v1813 = vunpack.c.h.b16 %v428
    %v1814 = vunpack.c.l.b16 %v429
    %v1815 = vunpack.c.h.b16 %v429
    %v1816 = vunpack.c.l.b16 %v430
    %v1817 = vunpack.c.h.b16 %v430
    %v1818 = vunpack.c.l.b16 %v431
    %v1819 = vunpack.c.h.b16 %v431
    %v1820 = vunpack.c.l.b16 %v432
    %v1821 = vunpack.c.h.b16 %v432
    %v1822 = vunpack.c.l.b16 %v433
    %v1823 = vunpack.c.h.b16 %v433
    %v1824 = vunpack.c.l.b16 %v434
    %v1825 = vunpack.c.h.b16 %v434
    %v1826 = vunpack.c.l.b16 %v435
    %v1827 = vunpack.c.h.b16 %v435
    %v1828 = vunpack.c.l.b16 %v436
    %v1829 = vunpack.c.h.b16 %v436
    %v1830 = vunpack.c.l.b16 %v437
    %v1831 = vunpack.c.h.b16 %v437
    %v1832 = vunpack.c.l.b16 %v438
    %v1833 = vunpack.c.h.b16 %v438
    %v1834 = vunpack.c.l.b16 %v439
    %v1835 = vunpack.c.h.b16 %v439
    %v1836 = vunpack.c.l.b16 %v440
    %v1837 = vunpack.c.h.b16 %v440
    %v1838 = vunpack.c.l.b16 %v441
    %v1839 = vunpack.c.h.b16 %v441
    %v1840 = vunpack.c.l.b16 %v442
    %v1841 = vunpack.c.h.b16 %v442
    %v1842 = vunpack.c.l.b16 %v443
    %v1843 = vunpack.c.h.b16 %v443
    %v1844 = vunpack.c.l.b16 %v444
    %v1845 = vunpack.c.h.b16 %v444
    %v1846 = vunpack.c.l.b16 %v445
    %v1847 = vunpack.c.h.b16 %v445
    %v1848 = vunpack.c.l.b16 %v446
    %v1849 = vunpack.c.h.b16 %v446
    %v1850 = vunpack.c.l.b16 %v447
    %v1851 = vunpack.c.h.b16 %v447
    %v1852 = vunpack.c.l.b16 %v448
    %v1853 = vunpack.c.h.b16 %v448
    %v1854 = vunpack.c.l.b16 %v449
    %v1855 = vunpack.c.h.b16 %v449
    %v1856 = vunpack.c.l.b16 %v450
    %v1857 = vunpack.c.h.b16 %v450
    %v1858 = vunpack.c.l.b16 %v451
    %v1859 = vunpack.c.h.b16 %v451
    %v1860 = vunpack.c.l.b16 %v452
    %v1861 = vunpack.c.h.b16 %v452
    %v1862 = vunpack.c.l.b16 %v453
    %v1863 = vunpack.c.h.b16 %v453
    %v1864 = vunpack.c.l.b16 %v454
    %v1865 = vunpack.c.h.b16 %v454
    %v1866 = vunpack.c.l.b16 %v455
    %v1867 = vunpack.c.h.b16 %v455
    %v1868 = vunpack.c.l.b16 %v456
    %v1869 = vunpack.c.h.b16 %v456
    %v1870 = vunpack.c.l.b16 %v457
    %v1871 = vunpack.c.h.b16 %v457
    %v1872 = vunpack.c.l.b16 %v458
    %v1873 = vunpack.c.h.b16 %v458
    %v1874 = vunpack.c.l.b16 %v459
    %v1875 = vunpack.c.h.b16 %v459
    %v1876 = vunpack.c.l.b16 %v460
    %v1877 = vunpack.c.h.b16 %v460
    %v1878 = vunpack.c.l.b16 %v461
    %v1879 = vunpack.c.h.b16 %v461
    %v1880 = vunpack.c.l.b16 %v462
    %v1881 = vunpack.c.h.b16 %v462
    %v1882 = vunpack.c.l.b16 %v463
    %v1883 = vunpack.c.h.b16 %v463
    %v1884 = vunpack.c.l.b16 %v464
    %v1885 = vunpack.c.h.b16 %v464
    %v1886 = vunpack.c.l.b16 %v465
    %v1887 = vunpack.c.h.b16 %v465
    %v1888 = vunpack.c.l.b16 %v466
    %v1889 = vunpack.c.h.b16 %v466
    %v1890 = vunpack.c.l.b16 %v467
    %v1891 = vunpack.c.h.b16 %v467
    %v1892 = vunpack.c.l.b16 %v468
    %v1893 = vunpack.c.h.b16 %v468
    %v1894 = vunpack.c.l.b16 %v469
    %v1895 = vunpack.c.h.b16 %v469
    %v1896 = vunpack.c.l.b16 %v470
    %v1897 = vunpack.c.h.b16 %v470
    %v1898 = vunpack.c.l.b16 %v471
    %v1899 = vunpack.c.h.b16 %v471
    %v1900 = vunpack.c.l.b16 %v472
    %v1901 = vunpack.c.h.b16 %v472
    %v1902 = vunpack.c.l.b16 %v473
    %v1903 = vunpack.c.h.b16 %v473
    %v1904 = vunpack.c.l.b16 %v474
    %v1905 = vunpack.c.h.b16 %v474
    %v1906 = vunpack.c.l.b16 %v475
    %v1907 = vunpack.c.h.b16 %v475
    %v1908 = vunpack.c.l.b16 %v476
    %v1909 = vunpack.c.h.b16 %v476
    %v1910 = vunpack.c.l.b16 %v477
    %v1911 = vunpack.c.h.b16 %v477
    %v1912 = vunpack.c.l.b16 %v478
    %v1913 = vunpack.c.h.b16 %v478
    %v1914 = vunpack.c.l.b16 %v479
    %v1915 = vunpack.c.h.b16 %v479
    %v1916 = vunpack.c.l.b16 %v480
    %v1917 = vunpack.c.h.b16 %v480
    %v1918 = vunpack.c.l.b16 %v481
    %v1919 = vunpack.c.h.b16 %v481
    %v1920 = vunpack.c.l.b16 %v482
    %v1921 = vunpack.c.h.b16 %v482
    %v1922 = vunpack.c.l.b16 %v483
    %v1923 = vunpack.c.h.b16 %v483
    %v1924 = vunpack.c.l.b16 %v484
    %v1925 = vunpack.c.h.b16 %v484
    %v1926 = vunpack.c.l.b16 %v485
    %v1927 = vunpack.c.h.b16 %v485
    %v1928 = vunpack.c.l.b16 %v486
    %v1929 = vunpack.c.h.b16 %v486
    %v1930 = vunpack.c.l.b16 %v487
    %v1931 = vunpack.c.h.b16 %v487
    %v1932 = vunpack.c.l.b16 %v488
    %v1933 = vunpack.c.h.b16 %v488
    %v1934 = vunpack.c.l.b16 %v489
    %v1935 = vunpack.c.h.b16 %v489
    %v1936 = vunpack.c.l.b16 %v490
    %v1937 = vunpack.c.h.b16 %v490
    %v1938 = vunpack.c.l.b16 %v491
    %v1939 = vunpack.c.h.b16 %v491
    %v1940 = vunpack.c.l.b16 %v492
    %v1941 = vunpack.c.h.b16 %v492
    %v1942 = vunpack.c.l.b16 %v493
    %v1943 = vunpack.c.h.b16 %v493
    %v1944 = vunpack.c.l.b16 %v494
    %v1945 = vunpack.c.h.b16 %v494
    %v1946 = vunpack.c.l.b16 %v495
    %v1947 = vunpack.c.h.b16 %v495
    %v1948 = vunpack.c.l.b16 %v496
    %v1949 = vunpack.c.h.b16 %v496
    %v1950 = vunpack.c.l.b16 %v497
    %v1951 = vunpack.c.h.b16 %v497
    %v1952 = vunpack.c.l.b16 %v498
    %v1953 = vunpack.c.h.b16 %v498
    %v1954 = vunpack.c.l.b16 %v499
    %v1955 = vunpack.c.h.b16 %v499
    %v1956 = vunpack.c.l.b16 %v500
    %v1957 = vunpack.c.h.b16 %v500
    %v1958 = vunpack.c.l.b16 %v501
    %v1959 = vunpack.c.h.b16 %v501
    %v1960 = vunpack.c.l.b16 %v502
    %v1961 = vunpack.c.h.b16 %v502
    %v1962 = vunpack.c.l.b16 %v503
    %v1963 = vunpack.c.h.b16 %v503
    %v1964 = vunpack.c.l.b16 %v504
    %v1965 = vunpack.c.h.b16 %v504
    %v1966 = vunpack.c.l.b16 %v505
    %v1967 = vunpack.c.h.b16 %v505
    %v1968 = vunpack.c.l.b16 %v506
    %v1969 = vunpack.c.h.b16 %v506
    %v1970 = vunpack.c.l.b16 %v507
    %v1971 = vunpack.c.h.b16 %v507
    %v1972 = vunpack.c.l.b16 %v508
    %v1973 = vunpack.c.h.b16 %v508
    %v1974 = vunpack.c.l.b16 %v509
    %v1975 = vunpack.c.h.b16 %v509
    %v1976 = vunpack.c.l.b16 %v510
    %v1977 = vunpack.c.h.b16 %v510
    %v1978 = vunpack.c.l.b16 %v511
    %v1979 = vunpack.c.h.b16 %v511
    %v1980 = vunpack.c.l.b16 %v512
    %v1981 = vunpack.c.h.b16 %v512
    %v1982 = vunpack.c.l.b16 %v513
    %v1983 = vunpack.c.h.b16 %v513
    %v1984 = vunpack.c.l.b16 %v514
    %v1985 = vunpack.c.h.b16 %v514
    %v1986 = vunpack.c.l.b16 %v515
    %v1987 = vunpack.c.h.b16 %v515
    %v1988 = vunpack.c.l.b16 %v516
    %v1989 = vunpack.c.h.b16 %v516
    %v1990 = vunpack.c.l.b16 %v517
    %v1991 = vunpack.c.h.b16 %v517
    %v1992 = vunpack.c.l.b16 %v518
    %v1993 = vunpack.c.h.b16 %v518
    %v1994 = vunpack.c.l.b16 %v519
    %v1995 = vunpack.c.h.b16 %v519
    %v1996 = vunpack.c.l.b16 %v520
    %v1997 = vunpack.c.h.b16 %v520
    %v1998 = vunpack.c.l.b16 %v521
    %v1999 = vunpack.c.h.b16 %v521
    %v2000 = vunpack.c.l.b16 %v522
    %v2001 = vunpack.c.h.b16 %v522
    %v2002 = vunpack.c.l.b16 %v523
    %v2003 = vunpack.c.h.b16 %v523
    %v2004 = vunpack.c.l.b16 %v524
    %v2005 = vunpack.c.h.b16 %v524
    %v2006 = vunpack.c.l.b16 %v525
    %v2007 = vunpack.c.h.b16 %v525
    %v2008 = vunpack.c.l.b16 %v526
    %v2009 = vunpack.c.h.b16 %v526
    %v2010 = vunpack.c.l.b16 %v527
    %v2011 = vunpack.c.h.b16 %v527
    %v2012 = vunpack.c.l.b16 %v528
    %v2013 = vunpack.c.h.b16 %v528
    %v2014 = vunpack.c.l.b16 %v529
    %v2015 = vunpack.c.h.b16 %v529
    %v2016 = vunpack.c.l.b16 %v530
    %v2017 = vunpack.c.h.b16 %v530
    %v2018 = vunpack.c.l.b16 %v531
    %v2019 = vunpack.c.h.b16 %v531
    %v2020 = vunpack.c.l.b16 %v532
    %v2021 = vunpack.c.h.b16 %v532
    %v2022 = vunpack.c.l.b16 %v533
    %v2023 = vunpack.c.h.b16 %v533
    %v2024 = vunpack.c.l.b16 %v534
    %v2025 = vunpack.c.h.b16 %v534
    %v2026 = vunpack.c.l.b16 %v535
    %v2027 = vunpack.c.h.b16 %v535
    %v2028 = vunpack.c.l.b16 %v536
    %v2029 = vunpack.c.h.b16 %v536
    %v2030 = vunpack.c.l.b16 %v537
    %v2031 = vunpack.c.h.b16 %v537
    %v2032 = vunpack.c.l.b16 %v538
    %v2033 = vunpack.c.h.b16 %v538
    %v2034 = vunpack.c.l.b16 %v539
    %v2035 = vunpack.c.h.b16 %v539
    %v2036 = vunpack.c.l.b16 %v540
    %v2037 = vunpack.c.h.b16 %v540
    %v2038 = vunpack.c.l.b16 %v541
    %v2039 = vunpack.c.h.b16 %v541
    %v2040 = vunpack.c.l.b16 %v542
    %v2041 = vunpack.c.h.b16 %v542
    %v2042 = vunpack.c.l.b16 %v543
    %v2043 = vunpack.c.h.b16 %v543
    %v2044 = vunpack.c.l.b16 %v544
    %v2045 = vunpack.c.h.b16 %v544
    %v2046 = vunpack.c.l.b16 %v545
    %v2047 = vunpack.c.h.b16 %v545
    %v2048 = vunpack.c.l.b16 %v546
    %v2049 = vunpack.c.h.b16 %v546
    %v2050 = vunpack.c.l.b16 %v547
    %v2051 = vunpack.c.h.b16 %v547
    %v2052 = vunpack.c.l.b16 %v548
    %v2053 = vunpack.c.h.b16 %v548
    %v2054 = vunpack.c.l.b16 %v549
    %v2055 = vunpack.c.h.b16 %v549
    %v2056 = vunpack.c.l.b16 %v550
    %v2057 = vunpack.c.h.b16 %v550
    %v2058 = vunpack.c.l.b16 %v551
    %v2059 = vunpack.c.h.b16 %v551
    %v2060 = vunpack.c.l.b16 %v552
    %v2061 = vunpack.c.h.b16 %v552
    %v2062 = vunpack.c.l.b16 %v553
    %v2063 = vunpack.c.h.b16 %v553
    %v2064 = vunpack.c.l.b16 %v554
    %v2065 = vunpack.c.h.b16 %v554
    %v2066 = vunpack.c.l.b16 %v555
    %v2067 = vunpack.c.h.b16 %v555
    %v2068 = vunpack.c.l.b16 %v556
    %v2069 = vunpack.c.h.b16 %v556
    %v2070 = vunpack.c.l.b16 %v557
    %v2071 = vunpack.c.h.b16 %v557
    %v2072 = vunpack.c.l.b16 %v558
    %v2073 = vunpack.c.h.b16 %v558
    %v2074 = vunpack.c.l.b16 %v559
    %v2075 = vunpack.c.h.b16 %v559
    %v2076 = vunpack.c.l.b16 %v560
    %v2077 = vunpack.c.h.b16 %v560
    %v2078 = vunpack.c.l.b16 %v561
    %v2079 = vunpack.c.h.b16 %v561
    %v2080 = vunpack.c.l.b16 %v562
    %v2081 = vunpack.c.h.b16 %v562
    %v2082 = vunpack.c.l.b16 %v563
    %v2083 = vunpack.c.h.b16 %v563
    %v2084 = vunpack.c.l.b16 %v564
    %v2085 = vunpack.c.h.b16 %v564
    %v2086 = vunpack.c.l.b16 %v565
    %v2087 = vunpack.c.h.b16 %v565
    %v2088 = vunpack.c.l.b16 %v566
    %v2089 = vunpack.c.h.b16 %v566
    %v2090 = vunpack.c.l.b16 %v567
    %v2091 = vunpack.c.h.b16 %v567
    %v2092 = vunpack.c.l.b16 %v568
    %v2093 = vunpack.c.h.b16 %v568
    %v2094 = vunpack.c.l.b16 %v569
    %v2095 = vunpack.c.h.b16 %v569
    %v2096 = vunpack.c.l.b16 %v570
    %v2097 = vunpack.c.h.b16 %v570
    %v2098 = vunpack.c.l.b16 %v571
    %v2099 = vunpack.c.h.b16 %v571
    %v2100 = vunpack.c.l.b16 %v572
    %v2101 = vunpack.c.h.b16 %v572
    %v2102 = vunpack.c.l.b16 %v573
    %v2103 = vunpack.c.h.b16 %v573
    %v2104 = vunpack.c.l.b16 %v574
    %v2105 = vunpack.c.h.b16 %v574
    %v2106 = vunpack.c.l.b16 %v575
    %v2107 = vunpack.c.h.b16 %v575
    %v2108 = vunpack.c.l.b16 %v576
    %v2109 = vunpack.c.h.b16 %v576
    %v2110 = vunpack.c.l.b16 %v577
    %v2111 = vunpack.c.h.b16 %v577
    %v2112 = vunpack.c.l.b16 %v578
    %v2113 = vunpack.c.h.b16 %v578
    %v2114 = vunpack.c.l.b16 %v579
    %v2115 = vunpack.c.h.b16 %v579
    %v2116 = vunpack.c.l.b16 %v580
    %v2117 = vunpack.c.h.b16 %v580
    %v2118 = vunpack.c.l.b16 %v581
    %v2119 = vunpack.c.h.b16 %v581
    %v2120 = vunpack.c.l.b16 %v582
    %v2121 = vunpack.c.h.b16 %v582
    %v2122 = vunpack.c.l.b16 %v583
    %v2123 = vunpack.c.h.b16 %v583
    %v2124 = vunpack.c.l.b16 %v584
    %v2125 = vunpack.c.h.b16 %v584
    %v2126 = vunpack.c.l.b16 %v585
    %v2127 = vunpack.c.h.b16 %v585
    %v2128 = vunpack.c.l.b16 %v586
    %v2129 = vunpack.c.h.b16 %v586
    %v2130 = vunpack.c.l.b16 %v587
    %v2131 = vunpack.c.h.b16 %v587
    %v2132 = vunpack.c.l.b16 %v588
    %v2133 = vunpack.c.h.b16 %v588
    %v2134 = vunpack.c.l.b16 %v589
    %v2135 = vunpack.c.h.b16 %v589
    %v2136 = vunpack.c.l.b16 %v590
    %v2137 = vunpack.c.h.b16 %v590
    %v2138 = vunpack.c.l.b16 %v591
    %v2139 = vunpack.c.h.b16 %v591
    %v2140 = vunpack.c.l.b16 %v592
    %v2141 = vunpack.c.h.b16 %v592
    %v2142 = vunpack.c.l.b16 %v593
    %v2143 = vunpack.c.h.b16 %v593
    %v2144 = vunpack.c.l.b16 %v594
    %v2145 = vunpack.c.h.b16 %v594
    %v2146 = vunpack.c.l.b16 %v595
    %v2147 = vunpack.c.h.b16 %v595
    %v2148 = vunpack.c.l.b16 %v596
    %v2149 = vunpack.c.h.b16 %v596
    %v2150 = vunpack.c.l.b16 %v597
    %v2151 = vunpack.c.h.b16 %v597
    %v2152 = vunpack.c.l.b16 %v598
    %v2153 = vunpack.c.h.b16 %v598
    %v2154 = vunpack.c.l.b16 %v599
    %v2155 = vunpack.c.h.b16 %v599
    %v2156 = vunpack.c.l.b16 %v600
    %v2157 = vunpack.c.h.b16 %v600
    %v2158 = vunpack.c.l.b16 %v601
    %v2159 = vunpack.c.h.b16 %v601
    %v2160 = vunpack.c.l.b16 %v602
    %v2161 = vunpack.c.h.b16 %v602
    %v2162 = vunpack.c.l.b16 %v603
    %v2163 = vunpack.c.h.b16 %v603
    %v2164 = vunpack.c.l.b16 %v604
    %v2165 = vunpack.c.h.b16 %v604
    %v2166 = vunpack.c.l.b16 %v605
    %v2167 = vunpack.c.h.b16 %v605
    %v2168 = vunpack.c.l.b16 %v606
    %v2169 = vunpack.c.h.b16 %v606
    %v2170 = vunpack.c.l.b16 %v607
    %v2171 = vunpack.c.h.b16 %v607
    %v2172 = vunpack.c.l.b16 %v608
    %v2173 = vunpack.c.h.b16 %v608
    %v2174 = vunpack.c.l.b16 %v609
    %v2175 = vunpack.c.h.b16 %v609
    %v2176 = vunpack.c.l.b16 %v610
    %v2177 = vunpack.c.h.b16 %v610
    %v2178 = vunpack.c.l.b16 %v611
    %v2179 = vunpack.c.h.b16 %v611
    %v2180 = vunpack.c.l.b16 %v612
    %v2181 = vunpack.c.h.b16 %v612
    %v2182 = vunpack.c.l.b16 %v613
    %v2183 = vunpack.c.h.b16 %v613
    %v2184 = vunpack.c.l.b16 %v614
    %v2185 = vunpack.c.h.b16 %v614
    %v2186 = vunpack.c.l.b16 %v615
    %v2187 = vunpack.c.h.b16 %v615
    %v2188 = vunpack.c.l.b16 %v616
    %v2189 = vunpack.c.h.b16 %v616
    %v2190 = vunpack.c.l.b16 %v617
    %v2191 = vunpack.c.h.b16 %v617
    %v2192 = vunpack.c.l.b16 %v618
    %v2193 = vunpack.c.h.b16 %v618
    %v2194 = vunpack.c.l.b16 %v619
    %v2195 = vunpack.c.h.b16 %v619
    %v2196 = vunpack.c.l.b16 %v620
    %v2197 = vunpack.c.h.b16 %v620
    %v2198 = vunpack.c.l.b16 %v621
    %v2199 = vunpack.c.h.b16 %v621
    %v2200 = vpack.c.b16 %v1184, %v1176
    %v2201 = vpack.c.b16 %v1185, %v1177
    %v2202 = vpack.c.b16 %v1186, %v1178
    %v2203 = vpack.c.b16 %v1187, %v1179
    %v2204 = vpack.c.b16 %v1188, %v1180
    %v2205 = vpack.c.b16 %v1189, %v1181
    %v2206 = vpack.c.b16 %v1190, %v1182
    %v2207 = vpack.c.b16 %v1191, %v1183
    %v2208 = vpack.c.b16 %v1200, %v1192
    %v2209 = vpack.c.b16 %v1201, %v1193
    %v2210 = vpack.c.b16 %v1202, %v1194
    %v2211 = vpack.c.b16 %v1203, %v1195
    %v2212 = vpack.c.b16 %v1204, %v1196
    %v2213 = vpack.c.b16 %v1205, %v1197
    %v2214 = vpack.c.b16 %v1206, %v1198
    %v2215 = vpack.c.b16 %v1207, %v1199
    %v2216 = vpack.c.b16 %v1216, %v1208
    %v2217 = vpack.c.b16 %v1217, %v1209
    %v2218 = vpack.c.b16 %v1218, %v1210
    %v2219 = vpack.c.b16 %v1219, %v1211
    %v2220 = vpack.c.b16 %v1220, %v1212
    %v2221 = vpack.c.b16 %v1221, %v1213
    %v2222 = vpack.c.b16 %v1222, %v1214
    %v2223 = vpack.c.b16 %v1223, %v1215
    %v2224 = vpack.c.b16 %v1232, %v1224
    %v2225 = vpack.c.b16 %v1233, %v1225
    %v2226 = vpack.c.b16 %v1234, %v1226
    %v2227 = vpack.c.b16 %v1235, %v1227
    %v2228 = vpack.c.b16 %v1236, %v1228
    %v2229 = vpack.c.b16 %v1237, %v1229
    %v2230 = vpack.c.b16 %v1238, %v1230
    %v2231 = vpack.c.b16 %v1239, %v1231
    %v2232 = vpack.c.b16 %v1248, %v1240
    %v2233 = vpack.c.b16 %v1249, %v1241
    %v2234 = vpack.c.b16 %v1250, %v1242
    %v2235 = vpack.c.b16 %v1251, %v1243
    %v2236 = vpack.c.b16 %v1252, %v1244
    %v2237 = vpack.c.b16 %v1253, %v1245
    %v2238 = vpack.c.b16 %v1254, %v1246
    %v2239 = vpack.c.b16 %v1255, %v1247
    %v2240 = vpack.c.b16 %v1264, %v1256
    %v2241 = vpack.c.b16 %v1265, %v1257
    %v2242 = vpack.c.b16 %v1266, %v1258
    %v2243 = vpack.c.b16 %v1267, %v1259
    %v2244 = vpack.c.b16 %v1268, %v1260
    %v2245 = vpack.c.b16 %v1269, %v1261
    %v2246 = vpack.c.b16 %v1270, %v1262
    %v2247 = vpack.c.b16 %v1271, %v1263
    %v2248 = vpack.c.b16 %v1280, %v1272
    %v2249 = vpack.c.b16 %v1281, %v1273
    %v2250 = vpack.c.b16 %v1282, %v1274
    %v2251 = vpack.c.b16 %v1283, %v1275
    %v2252 = vpack.c.b16 %v1284, %v1276
    %v2253 = vpack.c.b16 %v1285, %v1277
    %v2254 = vpack.c.b16 %v1286, %v1278
    %v2255 = vpack.c.b16 %v1287, %v1279
    %v2256 = vpack.c.b16 %v1296, %v1288
    %v2257 = vpack.c.b16 %v1297, %v1289
    %v2258 = vpack.c.b16 %v1298, %v1290
    %v2259 = vpack.c.b16 %v1299, %v1291
    %v2260 = vpack.c.b16 %v1300, %v1292
    %v2261 = vpack.c.b16 %v1301, %v1293
    %v2262 = vpack.c.b16 %v1302, %v1294
    %v2263 = vpack.c.b16 %v1303, %v1295
    %v2264 = vpack.c.b16 %v1312, %v1304
    %v2265 = vpack.c.b16 %v1313, %v1305
    %v2266 = vpack.c.b16 %v1314, %v1306
    %v2267 = vpack.c.b16 %v1315, %v1307
    %v2268 = vpack.c.b16 %v1316, %v1308
    %v2269 = vpack.c.b16 %v1317, %v1309
    %v2270 = vpack.c.b16 %v1318, %v1310
    %v2271 = vpack.c.b16 %v1319, %v1311
    %v2272 = vpack.c.b16 %v1328, %v1320
    %v2273 = vpack.c.b16 %v1329, %v1321
    %v2274 = vpack.c.b16 %v1330, %v1322
    %v2275 = vpack.c.b16 %v1331, %v1323
    %v2276 = vpack.c.b16 %v1332, %v1324
    %v2277 = vpack.c.b16 %v1333, %v1325
    %v2278 = vpack.c.b16 %v1334, %v1326
    %v2279 = vpack.c.b16 %v1335, %v1327
    %v2280 = vpack.c.b16 %v1344, %v1336
    %v2281 = vpack.c.b16 %v1345, %v1337
    %v2282 = vpack.c.b16 %v1346, %v1338
    %v2283 = vpack.c.b16 %v1347, %v1339
    %v2284 = vpack.c.b16 %v1348, %v1340
    %v2285 = vpack.c.b16 %v1349, %v1341
    %v2286 = vpack.c.b16 %v1350, %v1342
    %v2287 = vpack.c.b16 %v1351, %v1343
    %v2288 = vpack.c.b16 %v1360, %v1352
    %v2289 = vpack.c.b16 %v1361, %v1353
    %v2290 = vpack.c.b16 %v1362, %v1354
    %v2291 = vpack.c.b16 %v1363, %v1355
    %v2292 = vpack.c.b16 %v1364, %v1356
    %v2293 = vpack.c.b16 %v1365, %v1357
    %v2294 = vpack.c.b16 %v1366, %v1358
    %v2295 = vpack.c.b16 %v1367, %v1359
    %v2296 = vpack.c.b16 %v1376, %v1368
    %v2297 = vpack.c.b16 %v1377, %v1369
    %v2298 = vpack.c.b16 %v1378, %v1370
    %v2299 = vpack.c.b16 %v1379, %v1371
    %v2300 = vpack.c.b16 %v1380, %v1372
    %v2301 = vpack.c.b16 %v1381, %v1373
    %v2302 = vpack.c.b16 %v1382, %v1374
    %v2303 = vpack.c.b16 %v1383, %v1375
    %v2304 = vpack.c.b16 %v1392, %v1384
    %v2305 = vpack.c.b16 %v1393, %v1385
    %v2306 = vpack.c.b16 %v1394, %v1386
    %v2307 = vpack.c.b16 %v1395, %v1387
    %v2308 = vpack.c.b16 %v1396, %v1388
    %v2309 = vpack.c.b16 %v1397, %v1389
    %v2310 = vpack.c.b16 %v1398, %v1390
    %v2311 = vpack.c.b16 %v1399, %v1391
    %v2312 = vpack.c.b16 %v1408, %v1400
    %v2313 = vpack.c.b16 %v1409, %v1401
    %v2314 = vpack.c.b16 %v1410, %v1402
    %v2315 = vpack.c.b16 %v1411, %v1403
    %v2316 = vpack.c.b16 %v1412, %v1404
    %v2317 = vpack.c.b16 %v1413, %v1405
    %v2318 = vpack.c.b16 %v1414, %v1406
    %v2319 = vpack.c.b16 %v1415, %v1407
    %v2320 = vpack.c.b16 %v1424, %v1416
    %v2321 = vpack.c.b16 %v1425, %v1417
    %v2322 = vpack.c.b16 %v1426, %v1418
    %v2323 = vpack.c.b16 %v1427, %v1419
    %v2324 = vpack.c.b16 %v1428, %v1420
    %v2325 = vpack.c.b16 %v1429, %v1421
    %v2326 = vpack.c.b16 %v1430, %v1422
    %v2327 = vpack.c.b16 %v1431, %v1423
    %v2328 = vpack.c.b16 %v1440, %v1432
    %v2329 = vpack.c.b16 %v1441, %v1433
    %v2330 = vpack.c.b16 %v1442, %v1434
    %v2331 = vpack.c.b16 %v1443, %v1435
    %v2332 = vpack.c.b16 %v1444, %v1436
    %v2333 = vpack.c.b16 %v1445, %v1437
    %v2334 = vpack.c.b16 %v1446, %v1438
    %v2335 = vpack.c.b16 %v1447, %v1439
    %v2336 = vpack.c.b16 %v1456, %v1448
    %v2337 = vpack.c.b16 %v1457, %v1449
    %v2338 = vpack.c.b16 %v1458, %v1450
    %v2339 = vpack.c.b16 %v1459, %v1451
    %v2340 = vpack.c.b16 %v1460, %v1452
    %v2341 = vpack.c.b16 %v1461, %v1453
    %v2342 = vpack.c.b16 %v1462, %v1454
    %v2343 = vpack.c.b16 %v1463, %v1455
    %v2344 = vpack.c.b16 %v1472, %v1464
    %v2345 = vpack.c.b16 %v1473, %v1465
    %v2346 = vpack.c.b16 %v1474, %v1466
    %v2347 = vpack.c.b16 %v1475, %v1467
    %v2348 = vpack.c.b16 %v1476, %v1468
    %v2349 = vpack.c.b16 %v1477, %v1469
    %v2350 = vpack.c.b16 %v1478, %v1470
    %v2351 = vpack.c.b16 %v1479, %v1471
    %v2352 = vpack.c.b16 %v1488, %v1480
    %v2353 = vpack.c.b16 %v1489, %v1481
    %v2354 = vpack.c.b16 %v1490, %v1482
    %v2355 = vpack.c.b16 %v1491, %v1483
    %v2356 = vpack.c.b16 %v1492, %v1484
    %v2357 = vpack.c.b16 %v1493, %v1485
    %v2358 = vpack.c.b16 %v1494, %v1486
    %v2359 = vpack.c.b16 %v1495, %v1487
    %v2360 = vpack.c.b16 %v1504, %v1496
    %v2361 = vpack.c.b16 %v1505, %v1497
    %v2362 = vpack.c.b16 %v1506, %v1498
    %v2363 = vpack.c.b16 %v1507, %v1499
    %v2364 = vpack.c.b16 %v1508, %v1500
    %v2365 = vpack.c.b16 %v1509, %v1501
    %v2366 = vpack.c.b16 %v1510, %v1502
    %v2367 = vpack.c.b16 %v1511, %v1503
    %v2368 = vpack.c.b16 %v1520, %v1512
    %v2369 = vpack.c.b16 %v1521, %v1513
    %v2370 = vpack.c.b16 %v1522, %v1514
    %v2371 = vpack.c.b16 %v1523, %v1515
    %v2372 = vpack.c.b16 %v1524, %v1516
    %v2373 = vpack.c.b16 %v1525, %v1517
    %v2374 = vpack.c.b16 %v1526, %v1518
    %v2375 = vpack.c.b16 %v1527, %v1519
    %v2376 = vpack.c.b16 %v1536, %v1528
    %v2377 = vpack.c.b16 %v1537, %v1529
    %v2378 = vpack.c.b16 %v1538, %v1530
    %v2379 = vpack.c.b16 %v1539, %v1531
    %v2380 = vpack.c.b16 %v1540, %v1532
    %v2381 = vpack.c.b16 %v1541, %v1533
    %v2382 = vpack.c.b16 %v1542, %v1534
    %v2383 = vpack.c.b16 %v1543, %v1535
    %v2384 = vpack.c.b16 %v1552, %v1544
    %v2385 = vpack.c.b16 %v1553, %v1545
    %v2386 = vpack.c.b16 %v1554, %v1546
    %v2387 = vpack.c.b16 %v1555, %v1547
    %v2388 = vpack.c.b16 %v1556, %v1548
    %v2389 = vpack.c.b16 %v1557, %v1549
    %v2390 = vpack.c.b16 %v1558, %v1550
    %v2391 = vpack.c.b16 %v1559, %v1551
    %v2392 = vpack.c.b16 %v1568, %v1560
    %v2393 = vpack.c.b16 %v1569, %v1561
    %v2394 = vpack.c.b16 %v1570, %v1562
    %v2395 = vpack.c.b16 %v1571, %v1563
    %v2396 = vpack.c.b16 %v1572, %v1564
    %v2397 = vpack.c.b16 %v1573, %v1565
    %v2398 = vpack.c.b16 %v1574, %v1566
    %v2399 = vpack.c.b16 %v1575, %v1567
    %v2400 = vpack.c.b16 %v1584, %v1576
    %v2401 = vpack.c.b16 %v1585, %v1577
    %v2402 = vpack.c.b16 %v1586, %v1578
    %v2403 = vpack.c.b16 %v1587, %v1579
    %v2404 = vpack.c.b16 %v1588, %v1580
    %v2405 = vpack.c.b16 %v1589, %v1581
    %v2406 = vpack.c.b16 %v1590, %v1582
    %v2407 = vpack.c.b16 %v1591, %v1583
    %v2408 = vpack.c.b16 %v1600, %v1592
    %v2409 = vpack.c.b16 %v1601, %v1593
    %v2410 = vpack.c.b16 %v1602, %v1594
    %v2411 = vpack.c.b16 %v1603, %v1595
    %v2412 = vpack.c.b16 %v1604, %v1596
    %v2413 = vpack.c.b16 %v1605, %v1597
    %v2414 = vpack.c.b16 %v1606, %v1598
    %v2415 = vpack.c.b16 %v1607, %v1599
    %v2416 = vpack.c.b16 %v1616, %v1608
    %v2417 = vpack.c.b16 %v1617, %v1609
    %v2418 = vpack.c.b16 %v1618, %v1610
    %v2419 = vpack.c.b16 %v1619, %v1611
    %v2420 = vpack.c.b16 %v1620, %v1612
    %v2421 = vpack.c.b16 %v1621, %v1613
    %v2422 = vpack.c.b16 %v1622, %v1614
    %v2423 = vpack.c.b16 %v1623, %v1615
    %v2424 = vpack.c.b16 %v1632, %v1624
    %v2425 = vpack.c.b16 %v1633, %v1625
    %v2426 = vpack.c.b16 %v1634, %v1626
    %v2427 = vpack.c.b16 %v1635, %v1627
    %v2428 = vpack.c.b16 %v1636, %v1628
    %v2429 = vpack.c.b16 %v1637, %v1629
    %v2430 = vpack.c.b16 %v1638, %v1630
    %v2431 = vpack.c.b16 %v1639, %v1631
    %v2432 = vpack.c.b16 %v1648, %v1640
    %v2433 = vpack.c.b16 %v1649, %v1641
    %v2434 = vpack.c.b16 %v1650, %v1642
    %v2435 = vpack.c.b16 %v1651, %v1643
    %v2436 = vpack.c.b16 %v1652, %v1644
    %v2437 = vpack.c.b16 %v1653, %v1645
    %v2438 = vpack.c.b16 %v1654, %v1646
    %v2439 = vpack.c.b16 %v1655, %v1647
    %v2440 = vpack.c.b16 %v1664, %v1656
    %v2441 = vpack.c.b16 %v1665, %v1657
    %v2442 = vpack.c.b16 %v1666, %v1658
    %v2443 = vpack.c.b16 %v1667, %v1659
    %v2444 = vpack.c.b16 %v1668, %v1660
    %v2445 = vpack.c.b16 %v1669, %v1661
    %v2446 = vpack.c.b16 %v1670, %v1662
    %v2447 = vpack.c.b16 %v1671, %v1663
    %v2448 = vpack.c.b16 %v1680, %v1672
    %v2449 = vpack.c.b16 %v1681, %v1673
    %v2450 = vpack.c.b16 %v1682, %v1674
    %v2451 = vpack.c.b16 %v1683, %v1675
    %v2452 = vpack.c.b16 %v1684, %v1676
    %v2453 = vpack.c.b16 %v1685, %v1677
    %v2454 = vpack.c.b16 %v1686, %v1678
    %v2455 = vpack.c.b16 %v1687, %v1679
    %v2456 = vpack.c.b16 %v1696, %v1688
    %v2457 = vpack.c.b16 %v1697, %v1689
    %v2458 = vpack.c.b16 %v1698, %v1690
    %v2459 = vpack.c.b16 %v1699, %v1691
    %v2460 = vpack.c.b16 %v1700, %v1692
    %v2461 = vpack.c.b16 %v1701, %v1693
    %v2462 = vpack.c.b16 %v1702, %v1694
    %v2463 = vpack.c.b16 %v1703, %v1695
    %v2464 = vpack.c.b16 %v1712, %v1704
    %v2465 = vpack.c.b16 %v1713, %v1705
    %v2466 = vpack.c.b16 %v1714, %v1706
    %v2467 = vpack.c.b16 %v1715, %v1707
    %v2468 = vpack.c.b16 %v1716, %v1708
    %v2469 = vpack.c.b16 %v1717, %v1709
    %v2470 = vpack.c.b16 %v1718, %v1710
    %v2471 = vpack.c.b16 %v1719, %v1711
    %v2472 = vpack.c.b16 %v1728, %v1720
    %v2473 = vpack.c.b16 %v1729, %v1721
    %v2474 = vpack.c.b16 %v1730, %v1722
    %v2475 = vpack.c.b16 %v1731, %v1723
    %v2476 = vpack.c.b16 %v1732, %v1724
    %v2477 = vpack.c.b16 %v1733, %v1725
    %v2478 = vpack.c.b16 %v1734, %v1726
    %v2479 = vpack.c.b16 %v1735, %v1727
    %v2480 = vpack.c.b16 %v1744, %v1736
    %v2481 = vpack.c.b16 %v1745, %v1737
    %v2482 = vpack.c.b16 %v1746, %v1738
    %v2483 = vpack.c.b16 %v1747, %v1739
    %v2484 = vpack.c.b16 %v1748, %v1740
    %v2485 = vpack.c.b16 %v1749, %v1741
    %v2486 = vpack.c.b16 %v1750, %v1742
    %v2487 = vpack.c.b16 %v1751, %v1743
    %v2488 = vpack.c.b16 %v1760, %v1752
    %v2489 = vpack.c.b16 %v1761, %v1753
    %v2490 = vpack.c.b16 %v1762, %v1754
    %v2491 = vpack.c.b16 %v1763, %v1755
    %v2492 = vpack.c.b16 %v1764, %v1756
    %v2493 = vpack.c.b16 %v1765, %v1757
    %v2494 = vpack.c.b16 %v1766, %v1758
    %v2495 = vpack.c.b16 %v1767, %v1759
    %v2496 = vpack.c.b16 %v1776, %v1768
    %v2497 = vpack.c.b16 %v1777, %v1769
    %v2498 = vpack.c.b16 %v1778, %v1770
    %v2499 = vpack.c.b16 %v1779, %v1771
    %v2500 = vpack.c.b16 %v1780, %v1772
    %v2501 = vpack.c.b16 %v1781, %v1773
    %v2502 = vpack.c.b16 %v1782, %v1774
    %v2503 = vpack.c.b16 %v1783, %v1775
    %v2504 = vpack.c.b16 %v1792, %v1784
    %v2505 = vpack.c.b16 %v1793, %v1785
    %v2506 = vpack.c.b16 %v1794, %v1786
    %v2507 = vpack.c.b16 %v1795, %v1787
    %v2508 = vpack.c.b16 %v1796, %v1788
    %v2509 = vpack.c.b16 %v1797, %v1789
    %v2510 = vpack.c.b16 %v1798, %v1790
    %v2511 = vpack.c.b16 %v1799, %v1791
    %v2512 = vpack.c.b16 %v1808, %v1800
    %v2513 = vpack.c.b16 %v1809, %v1801
    %v2514 = vpack.c.b16 %v1810, %v1802
    %v2515 = vpack.c.b16 %v1811, %v1803
    %v2516 = vpack.c.b16 %v1812, %v1804
    %v2517 = vpack.c.b16 %v1813, %v1805
    %v2518 = vpack.c.b16 %v1814, %v1806
    %v2519 = vpack.c.b16 %v1815, %v1807
    %v2520 = vpack.c.b16 %v1824, %v1816
    %v2521 = vpack.c.b16 %v1825, %v1817
    %v2522 = vpack.c.b16 %v1826, %v1818
    %v2523 = vpack.c.b16 %v1827, %v1819
    %v2524 = vpack.c.b16 %v1828, %v1820
    %v2525 = vpack.c.b16 %v1829, %v1821
    %v2526 = vpack.c.b16 %v1830, %v1822
    %v2527 = vpack.c.b16 %v1831, %v1823
    %v2528 = vpack.c.b16 %v1840, %v1832
    %v2529 = vpack.c.b16 %v1841, %v1833
    %v2530 = vpack.c.b16 %v1842, %v1834
    %v2531 = vpack.c.b16 %v1843, %v1835
    %v2532 = vpack.c.b16 %v1844, %v1836
    %v2533 = vpack.c.b16 %v1845, %v1837
    %v2534 = vpack.c.b16 %v1846, %v1838
    %v2535 = vpack.c.b16 %v1847, %v1839
    %v2536 = vpack.c.b16 %v1856, %v1848
    %v2537 = vpack.c.b16 %v1857, %v1849
    %v2538 = vpack.c.b16 %v1858, %v1850
    %v2539 = vpack.c.b16 %v1859, %v1851
    %v2540 = vpack.c.b16 %v1860, %v1852
    %v2541 = vpack.c.b16 %v1861, %v1853
    %v2542 = vpack.c.b16 %v1862, %v1854
    %v2543 = vpack.c.b16 %v1863, %v1855
    %v2544 = vpack.c.b16 %v1872, %v1864
    %v2545 = vpack.c.b16 %v1873, %v1865
    %v2546 = vpack.c.b16 %v1874, %v1866
    %v2547 = vpack.c.b16 %v1875, %v1867
    %v2548 = vpack.c.b16 %v1876, %v1868
    %v2549 = vpack.c.b16 %v1877, %v1869
    %v2550 = vpack.c.b16 %v1878, %v1870
    %v2551 = vpack.c.b16 %v1879, %v1871
    %v2552 = vpack.c.b16 %v1888, %v1880
    %v2553 = vpack.c.b16 %v1889, %v1881
    %v2554 = vpack.c.b16 %v1890, %v1882
    %v2555 = vpack.c.b16 %v1891, %v1883
    %v2556 = vpack.c.b16 %v1892, %v1884
    %v2557 = vpack.c.b16 %v1893, %v1885
    %v2558 = vpack.c.b16 %v1894, %v1886
    %v2559 = vpack.c.b16 %v1895, %v1887
    %v2560 = vpack.c.b16 %v1904, %v1896
    %v2561 = vpack.c.b16 %v1905, %v1897
    %v2562 = vpack.c.b16 %v1906, %v1898
    %v2563 = vpack.c.b16 %v1907, %v1899
    %v2564 = vpack.c.b16 %v1908, %v1900
    %v2565 = vpack.c.b16 %v1909, %v1901
    %v2566 = vpack.c.b16 %v1910, %v1902
    %v2567 = vpack.c.b16 %v1911, %v1903
    %v2568 = vpack.c.b16 %v1920, %v1912
    %v2569 = vpack.c.b16 %v1921, %v1913
    %v2570 = vpack.c.b16 %v1922, %v1914
    %v2571 = vpack.c.b16 %v1923, %v1915
    %v2572 = vpack.c.b16 %v1924, %v1916
    %v2573 = vpack.c.b16 %v1925, %v1917
    %v2574 = vpack.c.b16 %v1926, %v1918
    %v2575 = vpack.c.b16 %v1927, %v1919
    %v2576 = vpack.c.b16 %v1936, %v1928
    %v2577 = vpack.c.b16 %v1937, %v1929
    %v2578 = vpack.c.b16 %v1938, %v1930
    %v2579 = vpack.c.b16 %v1939, %v1931
    %v2580 = vpack.c.b16 %v1940, %v1932
    %v2581 = vpack.c.b16 %v1941, %v1933
    %v2582 = vpack.c.b16 %v1942, %v1934
    %v2583 = vpack.c.b16 %v1943, %v1935
    %v2584 = vpack.c.b16 %v1952, %v1944
    %v2585 = vpack.c.b16 %v1953, %v1945
    %v2586 = vpack.c.b16 %v1954, %v1946
    %v2587 = vpack.c.b16 %v1955, %v1947
    %v2588 = vpack.c.b16 %v1956, %v1948
    %v2589 = vpack.c.b16 %v1957, %v1949
    %v2590 = vpack.c.b16 %v1958, %v1950
    %v2591 = vpack.c.b16 %v1959, %v1951
    %v2592 = vpack.c.b16 %v1968, %v1960
    %v2593 = vpack.c.b16 %v1969, %v1961
    %v2594 = vpack.c.b16 %v1970, %v1962
    %v2595 = vpack.c.b16 %v1971, %v1963
    %v2596 = vpack.c.b16 %v1972, %v1964
    %v2597 = vpack.c.b16 %v1973, %v1965
    %v2598 = vpack.c.b16 %v1974, %v1966
    %v2599 = vpack.c.b16 %v1975, %v1967
    %v2600 = vpack.c.b16 %v1984, %v1976
    %v2601 = vpack.c.b16 %v1985, %v1977
    %v2602 = vpack.c.b16 %v1986, %v1978
    %v2603 = vpack.c.b16 %v1987, %v1979
    %v2604 = vpack.c.b16 %v1988, %v1980
    %v2605 = vpack.c.b16 %v1989, %v1981
    %v2606 = vpack.c.b16 %v1990, %v1982
    %v2607 = vpack.c.b16 %v1991, %v1983
    %v2608 = vpack.c.b16 %v2000, %v1992
    %v2609 = vpack.c.b16 %v2001, %v1993
    %v2610 = vpack.c.b16 %v2002, %v1994
    %v2611 = vpack.c.b16 %v2003, %v1995
    %v2612 = vpack.c.b16 %v2004, %v1996
    %v2613 = vpack.c.b16 %v2005, %v1997
    %v2614 = vpack.c.b16 %v2006, %v1998
    %v2615 = vpack.c.b16 %v2007, %v1999
    %v2616 = vpack.c.b16 %v2016, %v2008
    %v2617 = vpack.c.b16 %v2017, %v2009
    %v2618 = vpack.c.b16 %v2018, %v2010
    %v2619 = vpack.c.b16 %v2019, %v2011
    %v2620 = vpack.c.b16 %v2020, %v2012
    %v2621 = vpack.c.b16 %v2021, %v2013
    %v2622 = vpack.c.b16 %v2022, %v2014
    %v2623 = vpack.c.b16 %v2023, %v2015
    %v2624 = vpack.c.b16 %v2032, %v2024
    %v2625 = vpack.c.b16 %v2033, %v2025
    %v2626 = vpack.c.b16 %v2034, %v2026
    %v2627 = vpack.c.b16 %v2035, %v2027
    %v2628 = vpack.c.b16 %v2036, %v2028
    %v2629 = vpack.c.b16 %v2037, %v2029
    %v2630 = vpack.c.b16 %v2038, %v2030
    %v2631 = vpack.c.b16 %v2039, %v2031
    %v2632 = vpack.c.b16 %v2048, %v2040
    %v2633 = vpack.c.b16 %v2049, %v2041
    %v2634 = vpack.c.b16 %v2050, %v2042
    %v2635 = vpack.c.b16 %v2051, %v2043
    %v2636 = vpack.c.b16 %v2052, %v2044
    %v2637 = vpack.c.b16 %v2053, %v2045
    %v2638 = vpack.c.b16 %v2054, %v2046
    %v2639 = vpack.c.b16 %v2055, %v2047
    %v2640 = vpack.c.b16 %v2064, %v2056
    %v2641 = vpack.c.b16 %v2065, %v2057
    %v2642 = vpack.c.b16 %v2066, %v2058
    %v2643 = vpack.c.b16 %v2067, %v2059
    %v2644 = vpack.c.b16 %v2068, %v2060
    %v2645 = vpack.c.b16 %v2069, %v2061
    %v2646 = vpack.c.b16 %v2070, %v2062
    %v2647 = vpack.c.b16 %v2071, %v2063
    %v2648 = vpack.c.b16 %v2080, %v2072
    %v2649 = vpack.c.b16 %v2081, %v2073
    %v2650 = vpack.c.b16 %v2082, %v2074
    %v2651 = vpack.c.b16 %v2083, %v2075
    %v2652 = vpack.c.b16 %v2084, %v2076
    %v2653 = vpack.c.b16 %v2085, %v2077
    %v2654 = vpack.c.b16 %v2086, %v2078
    %v2655 = vpack.c.b16 %v2087, %v2079
    %v2656 = vpack.c.b16 %v2096, %v2088
    %v2657 = vpack.c.b16 %v2097, %v2089
    %v2658 = vpack.c.b16 %v2098, %v2090
    %v2659 = vpack.c.b16 %v2099, %v2091
    %v2660 = vpack.c.b16 %v2100, %v2092
    %v2661 = vpack.c.b16 %v2101, %v2093
    %v2662 = vpack.c.b16 %v2102, %v2094
    %v2663 = vpack.c.b16 %v2103, %v2095
    %v2664 = vpack.c.b16 %v2112, %v2104
    %v2665 = vpack.c.b16 %v2113, %v2105
    %v2666 = vpack.c.b16 %v2114, %v2106
    %v2667 = vpack.c.b16 %v2115, %v2107
    %v2668 = vpack.c.b16 %v2116, %v2108
    %v2669 = vpack.c.b16 %v2117, %v2109
    %v2670 = vpack.c.b16 %v2118, %v2110
    %v2671 = vpack.c.b16 %v2119, %v2111
    %v2672 = vpack.c.b16 %v2128, %v2120
    %v2673 = vpack.c.b16 %v2129, %v2121
    %v2674 = vpack.c.b16 %v2130, %v2122
    %v2675 = vpack.c.b16 %v2131, %v2123
    %v2676 = vpack.c.b16 %v2132, %v2124
    %v2677 = vpack.c.b16 %v2133, %v2125
    %v2678 = vpack.c.b16 %v2134, %v2126
    %v2679 = vpack.c.b16 %v2135, %v2127
    %v2680 = vpack.c.b16 %v2144, %v2136
    %v2681 = vpack.c.b16 %v2145, %v2137
    %v2682 = vpack.c.b16 %v2146, %v2138
    %v2683 = vpack.c.b16 %v2147, %v2139
    %v2684 = vpack.c.b16 %v2148, %v2140
    %v2685 = vpack.c.b16 %v2149, %v2141
    %v2686 = vpack.c.b16 %v2150, %v2142
    %v2687 = vpack.c.b16 %v2151, %v2143
    %v2688 = vpack.c.b16 %v2160, %v2152
    %v2689 = vpack.c.b16 %v2161, %v2153
    %v2690 = vpack.c.b16 %v2162, %v2154
    %v2691 = vpack.c.b16 %v2163, %v2155
    %v2692 = vpack.c.b16 %v2164, %v2156
    %v2693 = vpack.c.b16 %v2165, %v2157
    %v2694 = vpack.c.b16 %v2166, %v2158
    %v2695 = vpack.c.b16 %v2167, %v2159
    %v2696 = vpack.c.b16 %v2176, %v2168
    %v2697 = vpack.c.b16 %v2177, %v2169
    %v2698 = vpack.c.b16 %v2178, %v2170
    %v2699 = vpack.c.b16 %v2179, %v2171
    %v2700 = vpack.c.b16 %v2180, %v2172
    %v2701 = vpack.c.b16 %v2181, %v2173
    %v2702 = vpack.c.b16 %v2182, %v2174
    %v2703 = vpack.c.b16 %v2183, %v2175
    %v2704 = vpack.c.b16 %v2192, %v2184
    %v2705 = vpack.c.b16 %v2193, %v2185
    %v2706 = vpack.c.b16 %v2194, %v2186
    %v2707 = vpack.c.b16 %v2195, %v2187
    %v2708 = vpack.c.b16 %v2196, %v2188
    %v2709 = vpack.c.b16 %v2197, %v2189
    %v2710 = vpack.c.b16 %v2198, %v2190
    %v2711 = vpack.c.b16 %v2199, %v2191
    %3224 = vmatprep.subr.bf16.mxu0 %v2201
    %3225 = vmatpush1.bf16.msra.mxu0 %v2200
    %3226 = vmatprep.subr.bf16.mxu0 %v2209
    %3227 = vmatpush1.bf16.msra.mxu0 %v2208
    %3228 = vmatprep.subr.bf16.mxu0 %v2217
    %3229 = vmatpush1.bf16.msra.mxu0 %v2216
    %3230 = vmatprep.subr.bf16.mxu0 %v2225
    %3231 = vmatpush1.bf16.msra.mxu0 %v2224
    %3232 = vmatprep.subr.bf16.mxu0 %v2233
    %3233 = vmatpush1.bf16.msra.mxu0 %v2232
    %3234 = vmatprep.subr.bf16.mxu0 %v2241
    %3235 = vmatpush1.bf16.msra.mxu0 %v2240
    %3236 = vmatprep.subr.bf16.mxu0 %v2249
    %3237 = vmatpush1.bf16.msra.mxu0 %v2248
    %3238 = vmatprep.subr.bf16.mxu0 %v2257
    %3239 = vmatpush1.bf16.msra.mxu0 %v2256
    %3240 = vmatprep.subr.bf16.mxu0 %v2265
    %3241 = vmatpush1.bf16.msra.mxu0 %v2264
    %3242 = vmatprep.subr.bf16.mxu0 %v2273
    %3243 = vmatpush1.bf16.msra.mxu0 %v2272
    %3244 = vmatprep.subr.bf16.mxu0 %v2281
    %3245 = vmatpush1.bf16.msra.mxu0 %v2280
    %3246 = vmatprep.subr.bf16.mxu0 %v2289
    %3247 = vmatpush1.bf16.msra.mxu0 %v2288
    %3248 = vmatprep.subr.bf16.mxu0 %v2297
    %3249 = vmatpush1.bf16.msra.mxu0 %v2296
    %3250 = vmatprep.subr.bf16.mxu0 %v2305
    %3251 = vmatpush1.bf16.msra.mxu0 %v2304
    %3252 = vmatprep.subr.bf16.mxu0 %v2313
    %3253 = vmatpush1.bf16.msra.mxu0 %v2312
    %3254 = vmatprep.subr.bf16.mxu0 %v2321
    %3255 = vmatpush1.bf16.msra.mxu0 %v2320
    %3256 = vmatprep.mubr.bf16.mxu0 %v103
    %3257 = vmatmul.mubr.bf16.gmra.mrb[0].mxu0 %v102
    %v3258 = vpop.f32.mrb[0].mxu0
    %v3259 = vadd.f32 %v627, %v3258
    %v3260 = vpop.f32.mrb[0].mxu0
    %v3261 = vadd.f32 %v631, %v3260
    %v3262 = vpop.f32.mrb[0].mxu0
    %v3263 = vadd.f32 %v627, %v3262
    %v3264 = vpop.f32.mrb[0].mxu0
    %v3265 = vadd.f32 %v631, %v3264
    %3266 = vdwg.mxu0
    %3267 = vmatprep.subr.bf16.mxu0 %v2329
    %3268 = vmatpush1.bf16.msra.mxu0 %v2328
    %3269 = vmatprep.subr.bf16.mxu0 %v2337
    %3270 = vmatpush1.bf16.msra.mxu0 %v2336
    %3271 = vmatprep.subr.bf16.mxu0 %v2345
    %3272 = vmatpush1.bf16.msra.mxu0 %v2344
    %3273 = vmatprep.subr.bf16.mxu0 %v2353
    %3274 = vmatpush1.bf16.msra.mxu0 %v2352
    %3275 = vmatprep.subr.bf16.mxu0 %v2361
    %3276 = vmatpush1.bf16.msra.mxu0 %v2360
    %3277 = vmatprep.subr.bf16.mxu0 %v2369
    %3278 = vmatpush1.bf16.msra.mxu0 %v2368
    %3279 = vmatprep.subr.bf16.mxu0 %v2377
    %3280 = vmatpush1.bf16.msra.mxu0 %v2376
    %3281 = vmatprep.subr.bf16.mxu0 %v2385
    %3282 = vmatpush1.bf16.msra.mxu0 %v2384
    %3283 = vmatprep.subr.bf16.mxu0 %v2393
    %3284 = vmatpush1.bf16.msra.mxu0 %v2392
    %3285 = vmatprep.subr.bf16.mxu0 %v2401
    %3286 = vmatpush1.bf16.msra.mxu0 %v2400
    %3287 = vmatprep.subr.bf16.mxu0 %v2409
    %3288 = vmatpush1.bf16.msra.mxu0 %v2408
    %3289 = vmatprep.subr.bf16.mxu0 %v2417
    %3290 = vmatpush1.bf16.msra.mxu0 %v2416
    %3291 = vmatprep.subr.bf16.mxu0 %v2425
    %3292 = vmatpush1.bf16.msra.mxu0 %v2424
    %3293 = vmatprep.subr.bf16.mxu0 %v2433
    %3294 = vmatpush1.bf16.msra.mxu0 %v2432
    %3295 = vmatprep.subr.bf16.mxu0 %v2441
    %3296 = vmatpush1.bf16.msra.mxu0 %v2440
    %3297 = vmatprep.subr.bf16.mxu0 %v2449
    %3298 = vmatpush1.bf16.msra.mxu0 %v2448
    %3299 = vmatprep.mubr.bf16.mxu0 %v105
    %3300 = vmatmul.mubr.bf16.gmra.mrb[0].mxu0 %v104
    %v3301 = vpop.f32.mrb[0].mxu0
    %v3302 = vadd.f32 %v3259, %v3301
    %v3303 = vpop.f32.mrb[0].mxu0
    %v3304 = vadd.f32 %v3261, %v3303
    %v3305 = vpop.f32.mrb[0].mxu0
    %v3306 = vadd.f32 %v3263, %v3305
    %v3307 = vpop.f32.mrb[0].mxu0
    %v3308 = vadd.f32 %v3265, %v3307
    %3309 = vdwg.mxu0
    %3310 = vmatprep.subr.bf16.mxu0 %v2457
    %3311 = vmatpush1.bf16.msra.mxu0 %v2456
    %3312 = vmatprep.subr.bf16.mxu0 %v2465
    %3313 = vmatpush1.bf16.msra.mxu0 %v2464
    %3314 = vmatprep.subr.bf16.mxu0 %v2473
    %3315 = vmatpush1.bf16.msra.mxu0 %v2472
    %3316 = vmatprep.subr.bf16.mxu0 %v2481
    %3317 = vmatpush1.bf16.msra.mxu0 %v2480
    %3318 = vmatprep.subr.bf16.mxu0 %v2489
    %3319 = vmatpush1.bf16.msra.mxu0 %v2488
    %3320 = vmatprep.subr.bf16.mxu0 %v2497
    %3321 = vmatpush1.bf16.msra.mxu0 %v2496
    %3322 = vmatprep.subr.bf16.mxu0 %v2505
    %3323 = vmatpush1.bf16.msra.mxu0 %v2504
    %3324 = vmatprep.subr.bf16.mxu0 %v2513
    %3325 = vmatpush1.bf16.msra.mxu0 %v2512
    %3326 = vmatprep.subr.bf16.mxu0 %v2521
    %3327 = vmatpush1.bf16.msra.mxu0 %v2520
    %3328 = vmatprep.subr.bf16.mxu0 %v2529
    %3329 = vmatpush1.bf16.msra.mxu0 %v2528
    %3330 = vmatprep.subr.bf16.mxu0 %v2537
    %3331 = vmatpush1.bf16.msra.mxu0 %v2536
    %3332 = vmatprep.subr.bf16.mxu0 %v2545
    %3333 = vmatpush1.bf16.msra.mxu0 %v2544
    %3334 = vmatprep.subr.bf16.mxu0 %v2553
    %3335 = vmatpush1.bf16.msra.mxu0 %v2552
    %3336 = vmatprep.subr.bf16.mxu0 %v2561
    %3337 = vmatpush1.bf16.msra.mxu0 %v2560
    %3338 = vmatprep.subr.bf16.mxu0 %v2569
    %3339 = vmatpush1.bf16.msra.mxu0 %v2568
    %3340 = vmatprep.subr.bf16.mxu0 %v2577
    %3341 = vmatpush1.bf16.msra.mxu0 %v2576
    %3342 = vmatprep.mubr.bf16.mxu0 %v107
    %3343 = vmatmul.mubr.bf16.gmra.mrb[0].mxu0 %v106
    %v3344 = vpop.f32.mrb[0].mxu0
    %v3345 = vadd.f32 %v3302, %v3344
    %v3346 = vpop.f32.mrb[0].mxu0
    %v3347 = vadd.f32 %v3304, %v3346
    %v3348 = vpop.f32.mrb[0].mxu0
    %v3349 = vadd.f32 %v3306, %v3348
    %v3350 = vpop.f32.mrb[0].mxu0
    %v3351 = vadd.f32 %v3308, %v3350
    %3352 = vdwg.mxu0
    %3353 = vmatprep.subr.bf16.mxu0 %v2585
    %3354 = vmatpush1.bf16.msra.mxu0 %v2584
    %3355 = vmatprep.subr.bf16.mxu0 %v2593
    %3356 = vmatpush1.bf16.msra.mxu0 %v2592
    %3357 = vmatprep.subr.bf16.mxu0 %v2601
    %3358 = vmatpush1.bf16.msra.mxu0 %v2600
    %3359 = vmatprep.subr.bf16.mxu0 %v2609
    %3360 = vmatpush1.bf16.msra.mxu0 %v2608
    %3361 = vmatprep.subr.bf16.mxu0 %v2617
    %3362 = vmatpush1.bf16.msra.mxu0 %v2616
    %3363 = vmatprep.subr.bf16.mxu0 %v2625
    %3364 = vmatpush1.bf16.msra.mxu0 %v2624
    %3365 = vmatprep.subr.bf16.mxu0 %v2633
    %3366 = vmatpush1.bf16.msra.mxu0 %v2632
    %3367 = vmatprep.subr.bf16.mxu0 %v2641
    %3368 = vmatpush1.bf16.msra.mxu0 %v2640
    %3369 = vmatprep.subr.bf16.mxu0 %v2649
    %3370 = vmatpush1.bf16.msra.mxu0 %v2648
    %3371 = vmatprep.subr.bf16.mxu0 %v2657
    %3372 = vmatpush1.bf16.msra.mxu0 %v2656
    %3373 = vmatprep.subr.bf16.mxu0 %v2665
    %3374 = vmatpush1.bf16.msra.mxu0 %v2664
    %3375 = vmatprep.subr.bf16.mxu0 %v2673
    %3376 = vmatpush1.bf16.msra.mxu0 %v2672
    %3377 = vmatprep.subr.bf16.mxu0 %v2681
    %3378 = vmatpush1.bf16.msra.mxu0 %v2680
    %3379 = vmatprep.subr.bf16.mxu0 %v2689
    %3380 = vmatpush1.bf16.msra.mxu0 %v2688
    %3381 = vmatprep.subr.bf16.mxu0 %v2697
    %3382 = vmatpush1.bf16.msra.mxu0 %v2696
    %3383 = vmatprep.subr.bf16.mxu0 %v2705
    %3384 = vmatpush1.bf16.msra.mxu0 %v2704
    %3385 = vmatprep.mubr.bf16.mxu0 %v109
    %3386 = vmatmul.mubr.bf16.gmra.mrb[0].mxu0 %v108
    %v3387 = vpop.f32.mrb[0].mxu0
    %v3388 = vadd.f32 %v3345, %v3387
    %v3389 = vpop.f32.mrb[0].mxu0
    %v3390 = vadd.f32 %v3347, %v3389
    %v3391 = vpop.f32.mrb[0].mxu0
    %v3392 = vadd.f32 %v3349, %v3391
    %v3393 = vpop.f32.mrb[0].mxu0
    %v3394 = vadd.f32 %v3351, %v3393
    %3395 = vdwg.mxu0
    %3396 = vmatprep.subr.bf16.mxu0 %v2203
    %3397 = vmatpush1.bf16.msra.mxu0 %v2202
    %3398 = vmatprep.subr.bf16.mxu0 %v2211
    %3399 = vmatpush1.bf16.msra.mxu0 %v2210
    %3400 = vmatprep.subr.bf16.mxu0 %v2219
    %3401 = vmatpush1.bf16.msra.mxu0 %v2218
    %3402 = vmatprep.subr.bf16.mxu0 %v2227
    %3403 = vmatpush1.bf16.msra.mxu0 %v2226
    %3404 = vmatprep.subr.bf16.mxu0 %v2235
    %3405 = vmatpush1.bf16.msra.mxu0 %v2234
    %3406 = vmatprep.subr.bf16.mxu0 %v2243
    %3407 = vmatpush1.bf16.msra.mxu0 %v2242
    %3408 = vmatprep.subr.bf16.mxu0 %v2251
    %3409 = vmatpush1.bf16.msra.mxu0 %v2250
    %3410 = vmatprep.subr.bf16.mxu0 %v2259
    %3411 = vmatpush1.bf16.msra.mxu0 %v2258
    %3412 = vmatprep.subr.bf16.mxu0 %v2267
    %3413 = vmatpush1.bf16.msra.mxu0 %v2266
    %3414 = vmatprep.subr.bf16.mxu0 %v2275
    %3415 = vmatpush1.bf16.msra.mxu0 %v2274
    %3416 = vmatprep.subr.bf16.mxu0 %v2283
    %3417 = vmatpush1.bf16.msra.mxu0 %v2282
    %3418 = vmatprep.subr.bf16.mxu0 %v2291
    %3419 = vmatpush1.bf16.msra.mxu0 %v2290
    %3420 = vmatprep.subr.bf16.mxu0 %v2299
    %3421 = vmatpush1.bf16.msra.mxu0 %v2298
    %3422 = vmatprep.subr.bf16.mxu0 %v2307
    %3423 = vmatpush1.bf16.msra.mxu0 %v2306
    %3424 = vmatprep.subr.bf16.mxu0 %v2315
    %3425 = vmatpush1.bf16.msra.mxu0 %v2314
    %3426 = vmatprep.subr.bf16.mxu0 %v2323
    %3427 = vmatpush1.bf16.msra.mxu0 %v2322
    %3428 = vmatprep.mubr.bf16.mxu0 %v103
    %3429 = vmatmul.mubr.bf16.gmra.mrb[0].mxu0 %v102
    %v3430 = vpop.f32.mrb[0].mxu0
    %v3431 = vadd.f32 %v635, %v3430
    %v3432 = vpop.f32.mrb[0].mxu0
    %v3433 = vadd.f32 %v639, %v3432
    %v3434 = vpop.f32.mrb[0].mxu0
    %v3435 = vadd.f32 %v635, %v3434
    %v3436 = vpop.f32.mrb[0].mxu0
    %v3437 = vadd.f32 %v639, %v3436
    %3438 = vdwg.mxu0
    %3439 = vmatprep.subr.bf16.mxu0 %v2331
    %3440 = vmatpush1.bf16.msra.mxu0 %v2330
    %3441 = vmatprep.subr.bf16.mxu0 %v2339
    %3442 = vmatpush1.bf16.msra.mxu0 %v2338
    %3443 = vmatprep.subr.bf16.mxu0 %v2347
    %3444 = vmatpush1.bf16.msra.mxu0 %v2346
    %3445 = vmatprep.subr.bf16.mxu0 %v2355
    %3446 = vmatpush1.bf16.msra.mxu0 %v2354
    %3447 = vmatprep.subr.bf16.mxu0 %v2363
    %3448 = vmatpush1.bf16.msra.mxu0 %v2362
    %3449 = vmatprep.subr.bf16.mxu0 %v2371
    %3450 = vmatpush1.bf16.msra.mxu0 %v2370
    %3451 = vmatprep.subr.bf16.mxu0 %v2379
    %3452 = vmatpush1.bf16.msra.mxu0 %v2378
    %3453 = vmatprep.subr.bf16.mxu0 %v2387
    %3454 = vmatpush1.bf16.msra.mxu0 %v2386
    %3455 = vmatprep.subr.bf16.mxu0 %v2395
    %3456 = vmatpush1.bf16.msra.mxu0 %v2394
    %3457 = vmatprep.subr.bf16.mxu0 %v2403
    %3458 = vmatpush1.bf16.msra.mxu0 %v2402
    %3459 = vmatprep.subr.bf16.mxu0 %v2411
    %3460 = vmatpush1.bf16.msra.mxu0 %v2410
    %3461 = vmatprep.subr.bf16.mxu0 %v2419
    %3462 = vmatpush1.bf16.msra.mxu0 %v2418
    %3463 = vmatprep.subr.bf16.mxu0 %v2427
    %3464 = vmatpush1.bf16.msra.mxu0 %v2426
    %3465 = vmatprep.subr.bf16.mxu0 %v2435
    %3466 = vmatpush1.bf16.msra.mxu0 %v2434
    %3467 = vmatprep.subr.bf16.mxu0 %v2443
    %3468 = vmatpush1.bf16.msra.mxu0 %v2442
    %3469 = vmatprep.subr.bf16.mxu0 %v2451
    %3470 = vmatpush1.bf16.msra.mxu0 %v2450
    %3471 = vmatprep.mubr.bf16.mxu0 %v105
    %3472 = vmatmul.mubr.bf16.gmra.mrb[0].mxu0 %v104
    %v3473 = vpop.f32.mrb[0].mxu0
    %v3474 = vadd.f32 %v3431, %v3473
    %v3475 = vpop.f32.mrb[0].mxu0
    %v3476 = vadd.f32 %v3433, %v3475
    %v3477 = vpop.f32.mrb[0].mxu0
    %v3478 = vadd.f32 %v3435, %v3477
    %v3479 = vpop.f32.mrb[0].mxu0
    %v3480 = vadd.f32 %v3437, %v3479
    %3481 = vdwg.mxu0
    %3482 = vmatprep.subr.bf16.mxu0 %v2459
    %3483 = vmatpush1.bf16.msra.mxu0 %v2458
    %3484 = vmatprep.subr.bf16.mxu0 %v2467
    %3485 = vmatpush1.bf16.msra.mxu0 %v2466
    %3486 = vmatprep.subr.bf16.mxu0 %v2475
    %3487 = vmatpush1.bf16.msra.mxu0 %v2474
    %3488 = vmatprep.subr.bf16.mxu0 %v2483
    %3489 = vmatpush1.bf16.msra.mxu0 %v2482
    %3490 = vmatprep.subr.bf16.mxu0 %v2491
    %3491 = vmatpush1.bf16.msra.mxu0 %v2490
    %3492 = vmatprep.subr.bf16.mxu0 %v2499
    %3493 = vmatpush1.bf16.msra.mxu0 %v2498
    %3494 = vmatprep.subr.bf16.mxu0 %v2507
    %3495 = vmatpush1.bf16.msra.mxu0 %v2506
    %3496 = vmatprep.subr.bf16.mxu0 %v2515
    %3497 = vmatpush1.bf16.msra.mxu0 %v2514
    %3498 = vmatprep.subr.bf16.mxu0 %v2523
    %3499 = vmatpush1.bf16.msra.mxu0 %v2522
    %3500 = vmatprep.subr.bf16.mxu0 %v2531
    %3501 = vmatpush1.bf16.msra.mxu0 %v2530
    %3502 = vmatprep.subr.bf16.mxu0 %v2539
    %3503 = vmatpush1.bf16.msra.mxu0 %v2538
    %3504 = vmatprep.subr.bf16.mxu0 %v2547
    %3505 = vmatpush1.bf16.msra.mxu0 %v2546
    %3506 = vmatprep.subr.bf16.mxu0 %v2555
    %3507 = vmatpush1.bf16.msra.mxu0 %v2554
    %3508 = vmatprep.subr.bf16.mxu0 %v2563
    %3509 = vmatpush1.bf16.msra.mxu0 %v2562
    %3510 = vmatprep.subr.bf16.mxu0 %v2571
    %3511 = vmatpush1.bf16.msra.mxu0 %v2570
    %3512 = vmatprep.subr.bf16.mxu0 %v2579
    %3513 = vmatpush1.bf16.msra.mxu0 %v2578
    %3514 = vmatprep.mubr.bf16.mxu0 %v107
    %3515 = vmatmul.mubr.bf16.gmra.mrb[0].mxu0 %v106
    %v3516 = vpop.f32.mrb[0].mxu0
    %v3517 = vadd.f32 %v3474, %v3516
    %v3518 = vpop.f32.mrb[0].mxu0
    %v3519 = vadd.f32 %v3476, %v3518
    %v3520 = vpop.f32.mrb[0].mxu0
    %v3521 = vadd.f32 %v3478, %v3520
    %v3522 = vpop.f32.mrb[0].mxu0
    %v3523 = vadd.f32 %v3480, %v3522
    %3524 = vdwg.mxu0
    %3525 = vmatprep.subr.bf16.mxu0 %v2587
    %3526 = vmatpush1.bf16.msra.mxu0 %v2586
    %3527 = vmatprep.subr.bf16.mxu0 %v2595
    %3528 = vmatpush1.bf16.msra.mxu0 %v2594
    %3529 = vmatprep.subr.bf16.mxu0 %v2603
    %3530 = vmatpush1.bf16.msra.mxu0 %v2602
    %3531 = vmatprep.subr.bf16.mxu0 %v2611
    %3532 = vmatpush1.bf16.msra.mxu0 %v2610
    %3533 = vmatprep.subr.bf16.mxu0 %v2619
    %3534 = vmatpush1.bf16.msra.mxu0 %v2618
    %3535 = vmatprep.subr.bf16.mxu0 %v2627
    %3536 = vmatpush1.bf16.msra.mxu0 %v2626
    %3537 = vmatprep.subr.bf16.mxu0 %v2635
    %3538 = vmatpush1.bf16.msra.mxu0 %v2634
    %3539 = vmatprep.subr.bf16.mxu0 %v2643
    %3540 = vmatpush1.bf16.msra.mxu0 %v2642
    %3541 = vmatprep.subr.bf16.mxu0 %v2651
    %3542 = vmatpush1.bf16.msra.mxu0 %v2650
    %3543 = vmatprep.subr.bf16.mxu0 %v2659
    %3544 = vmatpush1.bf16.msra.mxu0 %v2658
    %3545 = vmatprep.subr.bf16.mxu0 %v2667
    %3546 = vmatpush1.bf16.msra.mxu0 %v2666
    %3547 = vmatprep.subr.bf16.mxu0 %v2675
    %3548 = vmatpush1.bf16.msra.mxu0 %v2674
    %3549 = vmatprep.subr.bf16.mxu0 %v2683
    %3550 = vmatpush1.bf16.msra.mxu0 %v2682
    %3551 = vmatprep.subr.bf16.mxu0 %v2691
    %3552 = vmatpush1.bf16.msra.mxu0 %v2690
    %3553 = vmatprep.subr.bf16.mxu0 %v2699
    %3554 = vmatpush1.bf16.msra.mxu0 %v2698
    %3555 = vmatprep.subr.bf16.mxu0 %v2707
    %3556 = vmatpush1.bf16.msra.mxu0 %v2706
    %3557 = vmatprep.mubr.bf16.mxu0 %v109
    %3558 = vmatmul.mubr.bf16.gmra.mrb[0].mxu0 %v108
    %v3559 = vpop.f32.mrb[0].mxu0
    %v3560 = vadd.f32 %v3517, %v3559
    %v3561 = vpop.f32.mrb[0].mxu0
    %v3562 = vadd.f32 %v3519, %v3561
    %v3563 = vpop.f32.mrb[0].mxu0
    %v3564 = vadd.f32 %v3521, %v3563
    %v3565 = vpop.f32.mrb[0].mxu0
    %v3566 = vadd.f32 %v3523, %v3565
    %3567 = vdwg.mxu0
    %3568 = vmatprep.subr.bf16.mxu0 %v2205
    %3569 = vmatpush1.bf16.msra.mxu0 %v2204
    %3570 = vmatprep.subr.bf16.mxu0 %v2213
    %3571 = vmatpush1.bf16.msra.mxu0 %v2212
    %3572 = vmatprep.subr.bf16.mxu0 %v2221
    %3573 = vmatpush1.bf16.msra.mxu0 %v2220
    %3574 = vmatprep.subr.bf16.mxu0 %v2229
    %3575 = vmatpush1.bf16.msra.mxu0 %v2228
    %3576 = vmatprep.subr.bf16.mxu0 %v2237
    %3577 = vmatpush1.bf16.msra.mxu0 %v2236
    %3578 = vmatprep.subr.bf16.mxu0 %v2245
    %3579 = vmatpush1.bf16.msra.mxu0 %v2244
    %3580 = vmatprep.subr.bf16.mxu0 %v2253
    %3581 = vmatpush1.bf16.msra.mxu0 %v2252
    %3582 = vmatprep.subr.bf16.mxu0 %v2261
    %3583 = vmatpush1.bf16.msra.mxu0 %v2260
    %3584 = vmatprep.subr.bf16.mxu0 %v2269
    %3585 = vmatpush1.bf16.msra.mxu0 %v2268
    %3586 = vmatprep.subr.bf16.mxu0 %v2277
    %3587 = vmatpush1.bf16.msra.mxu0 %v2276
    %3588 = vmatprep.subr.bf16.mxu0 %v2285
    %3589 = vmatpush1.bf16.msra.mxu0 %v2284
    %3590 = vmatprep.subr.bf16.mxu0 %v2293
    %3591 = vmatpush1.bf16.msra.mxu0 %v2292
    %3592 = vmatprep.subr.bf16.mxu0 %v2301
    %3593 = vmatpush1.bf16.msra.mxu0 %v2300
    %3594 = vmatprep.subr.bf16.mxu0 %v2309
    %3595 = vmatpush1.bf16.msra.mxu0 %v2308
    %3596 = vmatprep.subr.bf16.mxu0 %v2317
    %3597 = vmatpush1.bf16.msra.mxu0 %v2316
    %3598 = vmatprep.subr.bf16.mxu0 %v2325
    %3599 = vmatpush1.bf16.msra.mxu0 %v2324
    %3600 = vmatprep.mubr.bf16.mxu0 %v103
    %3601 = vmatmul.mubr.bf16.gmra.mrb[0].mxu0 %v102
    %v3602 = vpop.f32.mrb[0].mxu0
    %v3603 = vadd.f32 %v643, %v3602
    %v3604 = vpop.f32.mrb[0].mxu0
    %v3605 = vadd.f32 %v647, %v3604
    %v3606 = vpop.f32.mrb[0].mxu0
    %v3607 = vadd.f32 %v643, %v3606
    %v3608 = vpop.f32.mrb[0].mxu0
    %v3609 = vadd.f32 %v647, %v3608
    %3610 = vdwg.mxu0
    %3611 = vmatprep.subr.bf16.mxu0 %v2333
    %3612 = vmatpush1.bf16.msra.mxu0 %v2332
    %3613 = vmatprep.subr.bf16.mxu0 %v2341
    %3614 = vmatpush1.bf16.msra.mxu0 %v2340
    %3615 = vmatprep.subr.bf16.mxu0 %v2349
    %3616 = vmatpush1.bf16.msra.mxu0 %v2348
    %3617 = vmatprep.subr.bf16.mxu0 %v2357
    %3618 = vmatpush1.bf16.msra.mxu0 %v2356
    %3619 = vmatprep.subr.bf16.mxu0 %v2365
    %3620 = vmatpush1.bf16.msra.mxu0 %v2364
    %3621 = vmatprep.subr.bf16.mxu0 %v2373
    %3622 = vmatpush1.bf16.msra.mxu0 %v2372
    %3623 = vmatprep.subr.bf16.mxu0 %v2381
    %3624 = vmatpush1.bf16.msra.mxu0 %v2380
    %3625 = vmatprep.subr.bf16.mxu0 %v2389
    %3626 = vmatpush1.bf16.msra.mxu0 %v2388
    %3627 = vmatprep.subr.bf16.mxu0 %v2397
    %3628 = vmatpush1.bf16.msra.mxu0 %v2396
    %3629 = vmatprep.subr.bf16.mxu0 %v2405
    %3630 = vmatpush1.bf16.msra.mxu0 %v2404
    %3631 = vmatprep.subr.bf16.mxu0 %v2413
    %3632 = vmatpush1.bf16.msra.mxu0 %v2412
    %3633 = vmatprep.subr.bf16.mxu0 %v2421
    %3634 = vmatpush1.bf16.msra.mxu0 %v2420
    %3635 = vmatprep.subr.bf16.mxu0 %v2429
    %3636 = vmatpush1.bf16.msra.mxu0 %v2428
    %3637 = vmatprep.subr.bf16.mxu0 %v2437
    %3638 = vmatpush1.bf16.msra.mxu0 %v2436
    %3639 = vmatprep.subr.bf16.mxu0 %v2445
    %3640 = vmatpush1.bf16.msra.mxu0 %v2444
    %3641 = vmatprep.subr.bf16.mxu0 %v2453
    %3642 = vmatpush1.bf16.msra.mxu0 %v2452
    %3643 = vmatprep.mubr.bf16.mxu0 %v105
    %3644 = vmatmul.mubr.bf16.gmra.mrb[0].mxu0 %v104
    %v3645 = vpop.f32.mrb[0].mxu0
    %v3646 = vadd.f32 %v3603, %v3645
    %v3647 = vpop.f32.mrb[0].mxu0
    %v3648 = vadd.f32 %v3605, %v3647
    %v3649 = vpop.f32.mrb[0].mxu0
    %v3650 = vadd.f32 %v3607, %v3649
    %v3651 = vpop.f32.mrb[0].mxu0
    %v3652 = vadd.f32 %v3609, %v3651
    %3653 = vdwg.mxu0
    %3654 = vmatprep.subr.bf16.mxu0 %v2461
    %3655 = vmatpush1.bf16.msra.mxu0 %v2460
    %3656 = vmatprep.subr.bf16.mxu0 %v2469
    %3657 = vmatpush1.bf16.msra.mxu0 %v2468
    %3658 = vmatprep.subr.bf16.mxu0 %v2477
    %3659 = vmatpush1.bf16.msra.mxu0 %v2476
    %3660 = vmatprep.subr.bf16.mxu0 %v2485
    %3661 = vmatpush1.bf16.msra.mxu0 %v2484
    %3662 = vmatprep.subr.bf16.mxu0 %v2493
    %3663 = vmatpush1.bf16.msra.mxu0 %v2492
    %3664 = vmatprep.subr.bf16.mxu0 %v2501
    %3665 = vmatpush1.bf16.msra.mxu0 %v2500
    %3666 = vmatprep.subr.bf16.mxu0 %v2509
    %3667 = vmatpush1.bf16.msra.mxu0 %v2508
    %3668 = vmatprep.subr.bf16.mxu0 %v2517
    %3669 = vmatpush1.bf16.msra.mxu0 %v2516
    %3670 = vmatprep.subr.bf16.mxu0 %v2525
    %3671 = vmatpush1.bf16.msra.mxu0 %v2524
    %3672 = vmatprep.subr.bf16.mxu0 %v2533
    %3673 = vmatpush1.bf16.msra.mxu0 %v2532
    %3674 = vmatprep.subr.bf16.mxu0 %v2541
    %3675 = vmatpush1.bf16.msra.mxu0 %v2540
    %3676 = vmatprep.subr.bf16.mxu0 %v2549
    %3677 = vmatpush1.bf16.msra.mxu0 %v2548
    %3678 = vmatprep.subr.bf16.mxu0 %v2557
    %3679 = vmatpush1.bf16.msra.mxu0 %v2556
    %3680 = vmatprep.subr.bf16.mxu0 %v2565
    %3681 = vmatpush1.bf16.msra.mxu0 %v2564
    %3682 = vmatprep.subr.bf16.mxu0 %v2573
    %3683 = vmatpush1.bf16.msra.mxu0 %v2572
    %3684 = vmatprep.subr.bf16.mxu0 %v2581
    %3685 = vmatpush1.bf16.msra.mxu0 %v2580
    %3686 = vmatprep.mubr.bf16.mxu0 %v107
    %3687 = vmatmul.mubr.bf16.gmra.mrb[0].mxu0 %v106
    %v3688 = vpop.f32.mrb[0].mxu0
    %v3689 = vadd.f32 %v3646, %v3688
    %v3690 = vpop.f32.mrb[0].mxu0
    %v3691 = vadd.f32 %v3648, %v3690
    %v3692 = vpop.f32.mrb[0].mxu0
    %v3693 = vadd.f32 %v3650, %v3692
    %v3694 = vpop.f32.mrb[0].mxu0
    %v3695 = vadd.f32 %v3652, %v3694
    %3696 = vdwg.mxu0
    %3697 = vmatprep.subr.bf16.mxu0 %v2589
    %3698 = vmatpush1.bf16.msra.mxu0 %v2588
    %3699 = vmatprep.subr.bf16.mxu0 %v2597
    %3700 = vmatpush1.bf16.msra.mxu0 %v2596
    %3701 = vmatprep.subr.bf16.mxu0 %v2605
    %3702 = vmatpush1.bf16.msra.mxu0 %v2604
    %3703 = vmatprep.subr.bf16.mxu0 %v2613
    %3704 = vmatpush1.bf16.msra.mxu0 %v2612
    %3705 = vmatprep.subr.bf16.mxu0 %v2621
    %3706 = vmatpush1.bf16.msra.mxu0 %v2620
    %3707 = vmatprep.subr.bf16.mxu0 %v2629
    %3708 = vmatpush1.bf16.msra.mxu0 %v2628
    %3709 = vmatprep.subr.bf16.mxu0 %v2637
    %3710 = vmatpush1.bf16.msra.mxu0 %v2636
    %3711 = vmatprep.subr.bf16.mxu0 %v2645
    %3712 = vmatpush1.bf16.msra.mxu0 %v2644
    %3713 = vmatprep.subr.bf16.mxu0 %v2653
    %3714 = vmatpush1.bf16.msra.mxu0 %v2652
    %3715 = vmatprep.subr.bf16.mxu0 %v2661
    %3716 = vmatpush1.bf16.msra.mxu0 %v2660
    %3717 = vmatprep.subr.bf16.mxu0 %v2669
    %3718 = vmatpush1.bf16.msra.mxu0 %v2668
    %3719 = vmatprep.subr.bf16.mxu0 %v2677
    %3720 = vmatpush1.bf16.msra.mxu0 %v2676
    %3721 = vmatprep.subr.bf16.mxu0 %v2685
    %3722 = vmatpush1.bf16.msra.mxu0 %v2684
    %3723 = vmatprep.subr.bf16.mxu0 %v2693
    %3724 = vmatpush1.bf16.msra.mxu0 %v2692
    %3725 = vmatprep.subr.bf16.mxu0 %v2701
    %3726 = vmatpush1.bf16.msra.mxu0 %v2700
    %3727 = vmatprep.subr.bf16.mxu0 %v2709
    %3728 = vmatpush1.bf16.msra.mxu0 %v2708
    %3729 = vmatprep.mubr.bf16.mxu0 %v109
    %3730 = vmatmul.mubr.bf16.gmra.mrb[0].mxu0 %v108
    %v3731 = vpop.f32.mrb[0].mxu0
    %v3732 = vadd.f32 %v3689, %v3731
    %v3733 = vpop.f32.mrb[0].mxu0
    %v3734 = vadd.f32 %v3691, %v3733
    %v3735 = vpop.f32.mrb[0].mxu0
    %v3736 = vadd.f32 %v3693, %v3735
    %v3737 = vpop.f32.mrb[0].mxu0
    %v3738 = vadd.f32 %v3695, %v3737
    %3739 = vdwg.mxu0
    %3740 = vmatprep.subr.bf16.mxu0 %v2207
    %3741 = vmatpush1.bf16.msra.mxu0 %v2206
    %3742 = vmatprep.subr.bf16.mxu0 %v2215
    %3743 = vmatpush1.bf16.msra.mxu0 %v2214
    %3744 = vmatprep.subr.bf16.mxu0 %v2223
    %3745 = vmatpush1.bf16.msra.mxu0 %v2222
    %3746 = vmatprep.subr.bf16.mxu0 %v2231
    %3747 = vmatpush1.bf16.msra.mxu0 %v2230
    %3748 = vmatprep.subr.bf16.mxu0 %v2239
    %3749 = vmatpush1.bf16.msra.mxu0 %v2238
    %3750 = vmatprep.subr.bf16.mxu0 %v2247
    %3751 = vmatpush1.bf16.msra.mxu0 %v2246
    %3752 = vmatprep.subr.bf16.mxu0 %v2255
    %3753 = vmatpush1.bf16.msra.mxu0 %v2254
    %3754 = vmatprep.subr.bf16.mxu0 %v2263
    %3755 = vmatpush1.bf16.msra.mxu0 %v2262
    %3756 = vmatprep.subr.bf16.mxu0 %v2271
    %3757 = vmatpush1.bf16.msra.mxu0 %v2270
    %3758 = vmatprep.subr.bf16.mxu0 %v2279
    %3759 = vmatpush1.bf16.msra.mxu0 %v2278
    %3760 = vmatprep.subr.bf16.mxu0 %v2287
    %3761 = vmatpush1.bf16.msra.mxu0 %v2286
    %3762 = vmatprep.subr.bf16.mxu0 %v2295
    %3763 = vmatpush1.bf16.msra.mxu0 %v2294
    %3764 = vmatprep.subr.bf16.mxu0 %v2303
    %3765 = vmatpush1.bf16.msra.mxu0 %v2302
    %3766 = vmatprep.subr.bf16.mxu0 %v2311
    %3767 = vmatpush1.bf16.msra.mxu0 %v2310
    %3768 = vmatprep.subr.bf16.mxu0 %v2319
    %3769 = vmatpush1.bf16.msra.mxu0 %v2318
    %3770 = vmatprep.subr.bf16.mxu0 %v2327
    %3771 = vmatpush1.bf16.msra.mxu0 %v2326
    %3772 = vmatprep.mubr.bf16.mxu0 %v103
    %3773 = vmatmul.mubr.bf16.gmra.mrb[0].mxu0 %v102
    %v3774 = vpop.f32.mrb[0].mxu0
    %v3775 = vadd.f32 %v651, %v3774
    %v3776 = vpop.f32.mrb[0].mxu0
    %v3777 = vadd.f32 %v655, %v3776
    %v3778 = vpop.f32.mrb[0].mxu0
    %v3779 = vadd.f32 %v651, %v3778
    %v3780 = vpop.f32.mrb[0].mxu0
    %v3781 = vadd.f32 %v655, %v3780
    %3782 = vdwg.mxu0
    %3783 = vmatprep.subr.bf16.mxu0 %v2335
    %3784 = vmatpush1.bf16.msra.mxu0 %v2334
    %3785 = vmatprep.subr.bf16.mxu0 %v2343
    %3786 = vmatpush1.bf16.msra.mxu0 %v2342
    %3787 = vmatprep.subr.bf16.mxu0 %v2351
    %3788 = vmatpush1.bf16.msra.mxu0 %v2350
    %3789 = vmatprep.subr.bf16.mxu0 %v2359
    %3790 = vmatpush1.bf16.msra.mxu0 %v2358
    %3791 = vmatprep.subr.bf16.mxu0 %v2367
    %3792 = vmatpush1.bf16.msra.mxu0 %v2366
    %3793 = vmatprep.subr.bf16.mxu0 %v2375
    %3794 = vmatpush1.bf16.msra.mxu0 %v2374
    %3795 = vmatprep.subr.bf16.mxu0 %v2383
    %3796 = vmatpush1.bf16.msra.mxu0 %v2382
    %3797 = vmatprep.subr.bf16.mxu0 %v2391
    %3798 = vmatpush1.bf16.msra.mxu0 %v2390
    %3799 = vmatprep.subr.bf16.mxu0 %v2399
    %3800 = vmatpush1.bf16.msra.mxu0 %v2398
    %3801 = vmatprep.subr.bf16.mxu0 %v2407
    %3802 = vmatpush1.bf16.msra.mxu0 %v2406
    %3803 = vmatprep.subr.bf16.mxu0 %v2415
    %3804 = vmatpush1.bf16.msra.mxu0 %v2414
    %3805 = vmatprep.subr.bf16.mxu0 %v2423
    %3806 = vmatpush1.bf16.msra.mxu0 %v2422
    %3807 = vmatprep.subr.bf16.mxu0 %v2431
    %3808 = vmatpush1.bf16.msra.mxu0 %v2430
    %3809 = vmatprep.subr.bf16.mxu0 %v2439
    %3810 = vmatpush1.bf16.msra.mxu0 %v2438
    %3811 = vmatprep.subr.bf16.mxu0 %v2447
    %3812 = vmatpush1.bf16.msra.mxu0 %v2446
    %3813 = vmatprep.subr.bf16.mxu0 %v2455
    %3814 = vmatpush1.bf16.msra.mxu0 %v2454
    %3815 = vmatprep.mubr.bf16.mxu0 %v105
    %3816 = vmatmul.mubr.bf16.gmra.mrb[0].mxu0 %v104
    %v3817 = vpop.f32.mrb[0].mxu0
    %v3818 = vadd.f32 %v3775, %v3817
    %v3819 = vpop.f32.mrb[0].mxu0
    %v3820 = vadd.f32 %v3777, %v3819
    %v3821 = vpop.f32.mrb[0].mxu0
    %v3822 = vadd.f32 %v3779, %v3821
    %v3823 = vpop.f32.mrb[0].mxu0
    %v3824 = vadd.f32 %v3781, %v3823
    %3825 = vdwg.mxu0
    %3826 = vmatprep.subr.bf16.mxu0 %v2463
    %3827 = vmatpush1.bf16.msra.mxu0 %v2462
    %3828 = vmatprep.subr.bf16.mxu0 %v2471
    %3829 = vmatpush1.bf16.msra.mxu0 %v2470
    %3830 = vmatprep.subr.bf16.mxu0 %v2479
    %3831 = vmatpush1.bf16.msra.mxu0 %v2478
    %3832 = vmatprep.subr.bf16.mxu0 %v2487
    %3833 = vmatpush1.bf16.msra.mxu0 %v2486
    %3834 = vmatprep.subr.bf16.mxu0 %v2495
    %3835 = vmatpush1.bf16.msra.mxu0 %v2494
    %3836 = vmatprep.subr.bf16.mxu0 %v2503
    %3837 = vmatpush1.bf16.msra.mxu0 %v2502
    %3838 = vmatprep.subr.bf16.mxu0 %v2511
    %3839 = vmatpush1.bf16.msra.mxu0 %v2510
    %3840 = vmatprep.subr.bf16.mxu0 %v2519
    %3841 = vmatpush1.bf16.msra.mxu0 %v2518
    %3842 = vmatprep.subr.bf16.mxu0 %v2527
    %3843 = vmatpush1.bf16.msra.mxu0 %v2526
    %3844 = vmatprep.subr.bf16.mxu0 %v2535
    %3845 = vmatpush1.bf16.msra.mxu0 %v2534
    %3846 = vmatprep.subr.bf16.mxu0 %v2543
    %3847 = vmatpush1.bf16.msra.mxu0 %v2542
    %3848 = vmatprep.subr.bf16.mxu0 %v2551
    %3849 = vmatpush1.bf16.msra.mxu0 %v2550
    %3850 = vmatprep.subr.bf16.mxu0 %v2559
    %3851 = vmatpush1.bf16.msra.mxu0 %v2558
    %3852 = vmatprep.subr.bf16.mxu0 %v2567
    %3853 = vmatpush1.bf16.msra.mxu0 %v2566
    %3854 = vmatprep.subr.bf16.mxu0 %v2575
    %3855 = vmatpush1.bf16.msra.mxu0 %v2574
    %3856 = vmatprep.subr.bf16.mxu0 %v2583
    %3857 = vmatpush1.bf16.msra.mxu0 %v2582
    %3858 = vmatprep.mubr.bf16.mxu0 %v107
    %3859 = vmatmul.mubr.bf16.gmra.mrb[0].mxu0 %v106
    %v3860 = vpop.f32.mrb[0].mxu0
    %v3861 = vadd.f32 %v3818, %v3860
    %v3862 = vpop.f32.mrb[0].mxu0
    %v3863 = vadd.f32 %v3820, %v3862
    %v3864 = vpop.f32.mrb[0].mxu0
    %v3865 = vadd.f32 %v3822, %v3864
    %v3866 = vpop.f32.mrb[0].mxu0
    %v3867 = vadd.f32 %v3824, %v3866
    %3868 = vdwg.mxu0
    %3869 = vmatprep.subr.bf16.mxu0 %v2591
    %3870 = vmatpush1.bf16.msra.mxu0 %v2590
    %3871 = vmatprep.subr.bf16.mxu0 %v2599
    %3872 = vmatpush1.bf16.msra.mxu0 %v2598
    %3873 = vmatprep.subr.bf16.mxu0 %v2607
    %3874 = vmatpush1.bf16.msra.mxu0 %v2606
    %3875 = vmatprep.subr.bf16.mxu0 %v2615
    %3876 = vmatpush1.bf16.msra.mxu0 %v2614
    %3877 = vmatprep.subr.bf16.mxu0 %v2623
    %3878 = vmatpush1.bf16.msra.mxu0 %v2622
    %3879 = vmatprep.subr.bf16.mxu0 %v2631
    %3880 = vmatpush1.bf16.msra.mxu0 %v2630
    %3881 = vmatprep.subr.bf16.mxu0 %v2639
    %3882 = vmatpush1.bf16.msra.mxu0 %v2638
    %3883 = vmatprep.subr.bf16.mxu0 %v2647
    %3884 = vmatpush1.bf16.msra.mxu0 %v2646
    %3885 = vmatprep.subr.bf16.mxu0 %v2655
    %3886 = vmatpush1.bf16.msra.mxu0 %v2654
    %3887 = vmatprep.subr.bf16.mxu0 %v2663
    %3888 = vmatpush1.bf16.msra.mxu0 %v2662
    %3889 = vmatprep.subr.bf16.mxu0 %v2671
    %3890 = vmatpush1.bf16.msra.mxu0 %v2670
    %3891 = vmatprep.subr.bf16.mxu0 %v2679
    %3892 = vmatpush1.bf16.msra.mxu0 %v2678
    %3893 = vmatprep.subr.bf16.mxu0 %v2687
    %3894 = vmatpush1.bf16.msra.mxu0 %v2686
    %3895 = vmatprep.subr.bf16.mxu0 %v2695
    %3896 = vmatpush1.bf16.msra.mxu0 %v2694
    %3897 = vmatprep.subr.bf16.mxu0 %v2703
    %3898 = vmatpush1.bf16.msra.mxu0 %v2702
    %3899 = vmatprep.subr.bf16.mxu0 %v2711
    %3900 = vmatpush1.bf16.msra.mxu0 %v2710
    %3901 = vmatprep.mubr.bf16.mxu0 %v109
    %3902 = vmatmul.mubr.bf16.gmra.mrb[0].mxu0 %v108
    %v3903 = vpop.f32.mrb[0].mxu0
    %v3904 = vadd.f32 %v3861, %v3903
    %v3905 = vpop.f32.mrb[0].mxu0
    %v3906 = vadd.f32 %v3863, %v3905
    %v3907 = vpop.f32.mrb[0].mxu0
    %v3908 = vadd.f32 %v3865, %v3907
    %v3909 = vpop.f32.mrb[0].mxu0
    %v3910 = vadd.f32 %v3867, %v3909
    %3911 = vdwg.mxu0
    %v3912 = vmax.f32 %v3388, 0.0
    %v3913 = vmax.f32 %v3390, 0.0
    %v3914 = vmax.f32 %v3560, 0.0
    %v3915 = vmax.f32 %v3562, 0.0
    %v3916 = vmax.f32 %v3732, 0.0
    %v3917 = vmax.f32 %v3734, 0.0
    %v3918 = vmax.f32 %v3904, 0.0
    %v3919 = vmax.f32 %v3906, 0.0
    %v3920 = vmax.f32 %v3392, 0.0
    %v3921 = vmax.f32 %v3394, 0.0
    %v3922 = vmax.f32 %v3564, 0.0
    %v3923 = vmax.f32 %v3566, 0.0
    %v3924 = vmax.f32 %v3736, 0.0
    %v3925 = vmax.f32 %v3738, 0.0
    %v3926 = vmax.f32 %v3908, 0.0
    %v3927 = vmax.f32 %v3910, 0.0
    %v3928 = vpack.c.bf16 %v3920, %v3912
    %v3929 = vpack.c.bf16 %v3921, %v3913
    %v3930 = vpack.c.bf16 %v3922, %v3914
    %v3931 = vpack.c.bf16 %v3923, %v3915
    %v3932 = vpack.c.bf16 %v3924, %v3916
    %v3933 = vpack.c.bf16 %v3925, %v3917
    %v3934 = vpack.c.bf16 %v3926, %v3918
    %v3935 = vpack.c.bf16 %v3927, %v3919
    %v3936 = vld [vmem:[#allocation8] sm:$0xf]
    %v3937 = vld [vmem:[#allocation8 + $0x4] sm:$0xf]
    %v3938 = vld [vmem:[#allocation8 + $0x8] sm:$0xf]
    %v3939 = vld [vmem:[#allocation8 + $0xc] sm:$0xf]
    %v3940 = vld [vmem:[#allocation8 + $0x10] sm:$0xf]
    %v3941 = vld [vmem:[#allocation8 + $0x14] sm:$0xf]
    %v3942 = vld [vmem:[#allocation8 + $0x18] sm:$0xf]
    %v3943 = vld [vmem:[#allocation8 + $0x1c] sm:$0xf]
    %v3944 = vld [vmem:[#allocation8 + $0x20] sm:$0xf]
    %v3945 = vld [vmem:[#allocation8 + $0x24] sm:$0xf]
    %v3946 = vld [vmem:[#allocation8 + $0x28] sm:$0xf]
    %v3947 = vld [vmem:[#allocation8 + $0x2c] sm:$0xf]
    %v3948 = vld [vmem:[#allocation8 + $0x30] sm:$0xf]
    %v3949 = vld [vmem:[#allocation8 + $0x34] sm:$0xf]
    %v3950 = vld [vmem:[#allocation8 + $0x38] sm:$0xf]
    %v3951 = vld [vmem:[#allocation8 + $0x3c] sm:$0xf]
    %v3952 = vld [vmem:[#allocation8 + $0x40] sm:$0xf]
    %v3953 = vld [vmem:[#allocation8 + $0x44] sm:$0xf]
    %v3954 = vld [vmem:[#allocation8 + $0x48] sm:$0xf]
    %v3955 = vld [vmem:[#allocation8 + $0x4c] sm:$0xf]
    %v3956 = vld [vmem:[#allocation8 + $0x50] sm:$0xf]
    %v3957 = vld [vmem:[#allocation8 + $0x54] sm:$0xf]
    %v3958 = vld [vmem:[#allocation8 + $0x58] sm:$0xf]
    %v3959 = vld [vmem:[#allocation8 + $0x5c] sm:$0xf]
    %v3960 = vld [vmem:[#allocation8 + $0x60] sm:$0xf]
    %v3961 = vld [vmem:[#allocation8 + $0x64] sm:$0xf]
    %v3962 = vld [vmem:[#allocation8 + $0x68] sm:$0xf]
    %v3963 = vld [vmem:[#allocation8 + $0x6c] sm:$0xf]
    %v3964 = vld [vmem:[#allocation8 + $0x70] sm:$0xf]
    %v3965 = vld [vmem:[#allocation8 + $0x74] sm:$0xf]
    %v3966 = vld [vmem:[#allocation8 + $0x78] sm:$0xf]
    %v3967 = vld [vmem:[#allocation8 + $0x7c] sm:$0xf]
    %v3968 = vld [vmem:[#allocation8 + $0x80] sm:$0xf]
    %v3969 = vld [vmem:[#allocation8 + $0x84] sm:$0xf]
    %v3970 = vld [vmem:[#allocation8 + $0x88] sm:$0xf]
    %v3971 = vld [vmem:[#allocation8 + $0x8c] sm:$0xf]
    %v3972 = vld [vmem:[#allocation8 + $0x90] sm:$0xf]
    %v3973 = vld [vmem:[#allocation8 + $0x94] sm:$0xf]
    %v3974 = vld [vmem:[#allocation8 + $0x98] sm:$0xf]
    %v3975 = vld [vmem:[#allocation8 + $0x9c] sm:$0xf]
    %v3976 = vld [vmem:[#allocation8 + $0xa0] sm:$0xf]
    %v3977 = vld [vmem:[#allocation8 + $0xa4] sm:$0xf]
    %v3978 = vld [vmem:[#allocation8 + $0xa8] sm:$0xf]
    %v3979 = vld [vmem:[#allocation8 + $0xac] sm:$0xf]
    %v3980 = vld [vmem:[#allocation8 + $0xb0] sm:$0xf]
    %v3981 = vld [vmem:[#allocation8 + $0xb4] sm:$0xf]
    %v3982 = vld [vmem:[#allocation8 + $0xb8] sm:$0xf]
    %v3983 = vld [vmem:[#allocation8 + $0xbc] sm:$0xf]
    %v3984 = vld [vmem:[#allocation8 + $0xc0] sm:$0xf]
    %v3985 = vld [vmem:[#allocation8 + $0xc4] sm:$0xf]
    %v3986 = vld [vmem:[#allocation8 + $0xc8] sm:$0xf]
    %v3987 = vld [vmem:[#allocation8 + $0xcc] sm:$0xf]
    %v3988 = vld [vmem:[#allocation8 + $0xd0] sm:$0xf]
    %v3989 = vld [vmem:[#allocation8 + $0xd4] sm:$0xf]
    %v3990 = vld [vmem:[#allocation8 + $0xd8] sm:$0xf]
    %v3991 = vld [vmem:[#allocation8 + $0xdc] sm:$0xf]
    %v3992 = vld [vmem:[#allocation8 + $0xe0] sm:$0xf]
    %v3993 = vld [vmem:[#allocation8 + $0xe4] sm:$0xf]
    %v3994 = vld [vmem:[#allocation8 + $0xe8] sm:$0xf]
    %v3995 = vld [vmem:[#allocation8 + $0xec] sm:$0xf]
    %v3996 = vld [vmem:[#allocation8 + $0xf0] sm:$0xf]
    %v3997 = vld [vmem:[#allocation8 + $0xf4] sm:$0xf]
    %v3998 = vld [vmem:[#allocation8 + $0xf8] sm:$0xf]
    %v3999 = vld [vmem:[#allocation8 + $0xfc] sm:$0xf]
    %v4000 = vld [vmem:[#allocation8 + $0x100] sm:$0xf]
    %v4001 = vld [vmem:[#allocation8 + $0x104] sm:$0xf]
    %v4002 = vld [vmem:[#allocation8 + $0x108] sm:$0xf]
    %v4003 = vld [vmem:[#allocation8 + $0x10c] sm:$0xf]
    %v4004 = vld [vmem:[#allocation8 + $0x110] sm:$0xf]
    %v4005 = vld [vmem:[#allocation8 + $0x114] sm:$0xf]
    %v4006 = vld [vmem:[#allocation8 + $0x118] sm:$0xf]
    %v4007 = vld [vmem:[#allocation8 + $0x11c] sm:$0xf]
    %v4008 = vld [vmem:[#allocation8 + $0x120] sm:$0xf]
    %v4009 = vld [vmem:[#allocation8 + $0x124] sm:$0xf]
    %v4010 = vld [vmem:[#allocation8 + $0x128] sm:$0xf]
    %v4011 = vld [vmem:[#allocation8 + $0x12c] sm:$0xf]
    %v4012 = vld [vmem:[#allocation8 + $0x130] sm:$0xf]
    %v4013 = vld [vmem:[#allocation8 + $0x134] sm:$0xf]
    %v4014 = vld [vmem:[#allocation8 + $0x138] sm:$0xf]
    %v4015 = vld [vmem:[#allocation8 + $0x13c] sm:$0xf]
    %v4016 = vld [vmem:[#allocation8 + $0x140] sm:$0xf]
    %v4017 = vld [vmem:[#allocation8 + $0x144] sm:$0xf]
    %v4018 = vld [vmem:[#allocation8 + $0x148] sm:$0xf]
    %v4019 = vld [vmem:[#allocation8 + $0x14c] sm:$0xf]
    %v4020 = vld [vmem:[#allocation8 + $0x150] sm:$0xf]
    %v4021 = vld [vmem:[#allocation8 + $0x154] sm:$0xf]
    %v4022 = vld [vmem:[#allocation8 + $0x158] sm:$0xf]
    %v4023 = vld [vmem:[#allocation8 + $0x15c] sm:$0xf]
    %v4024 = vld [vmem:[#allocation8 + $0x160] sm:$0xf]
    %v4025 = vld [vmem:[#allocation8 + $0x164] sm:$0xf]
    %v4026 = vld [vmem:[#allocation8 + $0x168] sm:$0xf]
    %v4027 = vld [vmem:[#allocation8 + $0x16c] sm:$0xf]
    %v4028 = vld [vmem:[#allocation8 + $0x170] sm:$0xf]
    %v4029 = vld [vmem:[#allocation8 + $0x174] sm:$0xf]
    %v4030 = vld [vmem:[#allocation8 + $0x178] sm:$0xf]
    %v4031 = vld [vmem:[#allocation8 + $0x17c] sm:$0xf]
    %v4032 = vld [vmem:[#allocation8 + $0x180] sm:$0xf]
    %v4033 = vld [vmem:[#allocation8 + $0x184] sm:$0xf]
    %v4034 = vld [vmem:[#allocation8 + $0x188] sm:$0xf]
    %v4035 = vld [vmem:[#allocation8 + $0x18c] sm:$0xf]
    %v4036 = vld [vmem:[#allocation8 + $0x190] sm:$0xf]
    %v4037 = vld [vmem:[#allocation8 + $0x194] sm:$0xf]
    %v4038 = vld [vmem:[#allocation8 + $0x198] sm:$0xf]
    %v4039 = vld [vmem:[#allocation8 + $0x19c] sm:$0xf]
    %v4040 = vld [vmem:[#allocation8 + $0x1a0] sm:$0xf]
    %v4041 = vld [vmem:[#allocation8 + $0x1a4] sm:$0xf]
    %v4042 = vld [vmem:[#allocation8 + $0x1a8] sm:$0xf]
    %v4043 = vld [vmem:[#allocation8 + $0x1ac] sm:$0xf]
    %v4044 = vld [vmem:[#allocation8 + $0x1b0] sm:$0xf]
    %v4045 = vld [vmem:[#allocation8 + $0x1b4] sm:$0xf]
    %v4046 = vld [vmem:[#allocation8 + $0x1b8] sm:$0xf]
    %v4047 = vld [vmem:[#allocation8 + $0x1bc] sm:$0xf]
    %v4048 = vld [vmem:[#allocation8 + $0x1c0] sm:$0xf]
    %v4049 = vld [vmem:[#allocation8 + $0x1c4] sm:$0xf]
    %v4050 = vld [vmem:[#allocation8 + $0x1c8] sm:$0xf]
    %v4051 = vld [vmem:[#allocation8 + $0x1cc] sm:$0xf]
    %v4052 = vld [vmem:[#allocation8 + $0x1d0] sm:$0xf]
    %v4053 = vld [vmem:[#allocation8 + $0x1d4] sm:$0xf]
    %v4054 = vld [vmem:[#allocation8 + $0x1d8] sm:$0xf]
    %v4055 = vld [vmem:[#allocation8 + $0x1dc] sm:$0xf]
    %v4056 = vld [vmem:[#allocation8 + $0x1e0] sm:$0xf]
    %v4057 = vld [vmem:[#allocation8 + $0x1e4] sm:$0xf]
    %v4058 = vld [vmem:[#allocation8 + $0x1e8] sm:$0xf]
    %v4059 = vld [vmem:[#allocation8 + $0x1ec] sm:$0xf]
    %v4060 = vld [vmem:[#allocation8 + $0x1f0] sm:$0xf]
    %v4061 = vld [vmem:[#allocation8 + $0x1f4] sm:$0xf]
    %v4062 = vld [vmem:[#allocation8 + $0x1f8] sm:$0xf]
    %v4063 = vld [vmem:[#allocation8 + $0x1fc] sm:$0xf]
    %v4064 = vld [vmem:[#allocation10] sm:$0x1]
    %v4066 = vlaneseq
    %v4067 = vshrl.u32 %v4066, 7
    %v4068 = vsub.s32 0, %v4067
    %v4069 = vrot.slane %v4064, %v4068
    %v4199 = vunpack.c.l.b16 %v3936
    %v4200 = vunpack.c.l.b16 %v3937
    %v4201 = vunpack.c.l.b16 %v3938
    %v4202 = vunpack.c.l.b16 %v3939
    %v4203 = vunpack.c.l.b16 %v3940
    %v4204 = vunpack.c.l.b16 %v3941
    %v4205 = vunpack.c.l.b16 %v3942
    %v4206 = vunpack.c.l.b16 %v3943
    %v4207 = vunpack.c.l.b16 %v3944
    %v4208 = vunpack.c.l.b16 %v3945
    %v4209 = vunpack.c.l.b16 %v3946
    %v4210 = vunpack.c.l.b16 %v3947
    %v4211 = vunpack.c.l.b16 %v3948
    %v4212 = vunpack.c.l.b16 %v3949
    %v4213 = vunpack.c.l.b16 %v3950
    %v4214 = vunpack.c.l.b16 %v3951
    %v4215 = vunpack.c.l.b16 %v3952
    %v4216 = vunpack.c.l.b16 %v3953
    %v4217 = vunpack.c.l.b16 %v3954
    %v4218 = vunpack.c.l.b16 %v3955
    %v4219 = vunpack.c.l.b16 %v3956
    %v4220 = vunpack.c.l.b16 %v3957
    %v4221 = vunpack.c.l.b16 %v3958
    %v4222 = vunpack.c.l.b16 %v3959
    %v4223 = vunpack.c.l.b16 %v3960
    %v4224 = vunpack.c.l.b16 %v3961
    %v4225 = vunpack.c.l.b16 %v3962
    %v4226 = vunpack.c.l.b16 %v3963
    %v4227 = vunpack.c.l.b16 %v3964
    %v4228 = vunpack.c.l.b16 %v3965
    %v4229 = vunpack.c.l.b16 %v3966
    %v4230 = vunpack.c.l.b16 %v3967
    %v4231 = vunpack.c.l.b16 %v3968
    %v4232 = vunpack.c.l.b16 %v3969
    %v4233 = vunpack.c.l.b16 %v3970
    %v4234 = vunpack.c.l.b16 %v3971
    %v4235 = vunpack.c.l.b16 %v3972
    %v4236 = vunpack.c.l.b16 %v3973
    %v4237 = vunpack.c.l.b16 %v3974
    %v4238 = vunpack.c.l.b16 %v3975
    %v4239 = vunpack.c.l.b16 %v3976
    %v4240 = vunpack.c.l.b16 %v3977
    %v4241 = vunpack.c.l.b16 %v3978
    %v4242 = vunpack.c.l.b16 %v3979
    %v4243 = vunpack.c.l.b16 %v3980
    %v4244 = vunpack.c.l.b16 %v3981
    %v4245 = vunpack.c.l.b16 %v3982
    %v4246 = vunpack.c.l.b16 %v3983
    %v4247 = vunpack.c.l.b16 %v3984
    %v4248 = vunpack.c.l.b16 %v3985
    %v4249 = vunpack.c.l.b16 %v3986
    %v4250 = vunpack.c.l.b16 %v3987
    %v4251 = vunpack.c.l.b16 %v3988
    %v4252 = vunpack.c.l.b16 %v3989
    %v4253 = vunpack.c.l.b16 %v3990
    %v4254 = vunpack.c.l.b16 %v3991
    %v4255 = vunpack.c.l.b16 %v3992
    %v4256 = vunpack.c.l.b16 %v3993
    %v4257 = vunpack.c.l.b16 %v3994
    %v4258 = vunpack.c.l.b16 %v3995
    %v4259 = vunpack.c.l.b16 %v3996
    %v4260 = vunpack.c.l.b16 %v3997
    %v4261 = vunpack.c.l.b16 %v3998
    %v4262 = vunpack.c.l.b16 %v3999
    %v4263 = vunpack.c.l.b16 %v4000
    %v4264 = vunpack.c.l.b16 %v4001
    %v4265 = vunpack.c.l.b16 %v4002
    %v4266 = vunpack.c.l.b16 %v4003
    %v4267 = vunpack.c.l.b16 %v4004
    %v4268 = vunpack.c.l.b16 %v4005
    %v4269 = vunpack.c.l.b16 %v4006
    %v4270 = vunpack.c.l.b16 %v4007
    %v4271 = vunpack.c.l.b16 %v4008
    %v4272 = vunpack.c.l.b16 %v4009
    %v4273 = vunpack.c.l.b16 %v4010
    %v4274 = vunpack.c.l.b16 %v4011
    %v4275 = vunpack.c.l.b16 %v4012
    %v4276 = vunpack.c.l.b16 %v4013
    %v4277 = vunpack.c.l.b16 %v4014
    %v4278 = vunpack.c.l.b16 %v4015
    %v4279 = vunpack.c.l.b16 %v4016
    %v4280 = vunpack.c.l.b16 %v4017
    %v4281 = vunpack.c.l.b16 %v4018
    %v4282 = vunpack.c.l.b16 %v4019
    %v4283 = vunpack.c.l.b16 %v4020
    %v4284 = vunpack.c.l.b16 %v4021
    %v4285 = vunpack.c.l.b16 %v4022
    %v4286 = vunpack.c.l.b16 %v4023
    %v4287 = vunpack.c.l.b16 %v4024
    %v4288 = vunpack.c.l.b16 %v4025
    %v4289 = vunpack.c.l.b16 %v4026
    %v4290 = vunpack.c.l.b16 %v4027
    %v4291 = vunpack.c.l.b16 %v4028
    %v4292 = vunpack.c.l.b16 %v4029
    %v4293 = vunpack.c.l.b16 %v4030
    %v4294 = vunpack.c.l.b16 %v4031
    %v4295 = vunpack.c.l.b16 %v4032
    %v4296 = vunpack.c.l.b16 %v4033
    %v4297 = vunpack.c.l.b16 %v4034
    %v4298 = vunpack.c.l.b16 %v4035
    %v4299 = vunpack.c.l.b16 %v4036
    %v4300 = vunpack.c.l.b16 %v4037
    %v4301 = vunpack.c.l.b16 %v4038
    %v4302 = vunpack.c.l.b16 %v4039
    %v4303 = vunpack.c.l.b16 %v4040
    %v4304 = vunpack.c.l.b16 %v4041
    %v4305 = vunpack.c.l.b16 %v4042
    %v4306 = vunpack.c.l.b16 %v4043
    %v4307 = vunpack.c.l.b16 %v4044
    %v4308 = vunpack.c.l.b16 %v4045
    %v4309 = vunpack.c.l.b16 %v4046
    %v4310 = vunpack.c.l.b16 %v4047
    %v4311 = vunpack.c.l.b16 %v4048
    %v4312 = vunpack.c.l.b16 %v4049
    %v4313 = vunpack.c.l.b16 %v4050
    %v4314 = vunpack.c.l.b16 %v4051
    %v4315 = vunpack.c.l.b16 %v4052
    %v4316 = vunpack.c.l.b16 %v4053
    %v4317 = vunpack.c.l.b16 %v4054
    %v4318 = vunpack.c.l.b16 %v4055
    %v4319 = vunpack.c.l.b16 %v4056
    %v4320 = vunpack.c.l.b16 %v4057
    %v4321 = vunpack.c.l.b16 %v4058
    %v4322 = vunpack.c.l.b16 %v4059
    %v4323 = vunpack.c.l.b16 %v4060
    %v4324 = vunpack.c.l.b16 %v4061
    %v4325 = vunpack.c.l.b16 %v4062
    %v4326 = vunpack.c.l.b16 %v4063
    %v4327 = vpack.c.b16 %v4200, %v4199
    %v4328 = vpack.c.b16 %v4202, %v4201
    %v4329 = vpack.c.b16 %v4204, %v4203
    %v4330 = vpack.c.b16 %v4206, %v4205
    %v4331 = vpack.c.b16 %v4208, %v4207
    %v4332 = vpack.c.b16 %v4210, %v4209
    %v4333 = vpack.c.b16 %v4212, %v4211
    %v4334 = vpack.c.b16 %v4214, %v4213
    %v4335 = vpack.c.b16 %v4216, %v4215
    %v4336 = vpack.c.b16 %v4218, %v4217
    %v4337 = vpack.c.b16 %v4220, %v4219
    %v4338 = vpack.c.b16 %v4222, %v4221
    %v4339 = vpack.c.b16 %v4224, %v4223
    %v4340 = vpack.c.b16 %v4226, %v4225
    %v4341 = vpack.c.b16 %v4228, %v4227
    %v4342 = vpack.c.b16 %v4230, %v4229
    %v4343 = vpack.c.b16 %v4232, %v4231
    %v4344 = vpack.c.b16 %v4234, %v4233
    %v4345 = vpack.c.b16 %v4236, %v4235
    %v4346 = vpack.c.b16 %v4238, %v4237
    %v4347 = vpack.c.b16 %v4240, %v4239
    %v4348 = vpack.c.b16 %v4242, %v4241
    %v4349 = vpack.c.b16 %v4244, %v4243
    %v4350 = vpack.c.b16 %v4246, %v4245
    %v4351 = vpack.c.b16 %v4248, %v4247
    %v4352 = vpack.c.b16 %v4250, %v4249
    %v4353 = vpack.c.b16 %v4252, %v4251
    %v4354 = vpack.c.b16 %v4254, %v4253
    %v4355 = vpack.c.b16 %v4256, %v4255
    %v4356 = vpack.c.b16 %v4258, %v4257
    %v4357 = vpack.c.b16 %v4260, %v4259
    %v4358 = vpack.c.b16 %v4262, %v4261
    %v4359 = vpack.c.b16 %v4264, %v4263
    %v4360 = vpack.c.b16 %v4266, %v4265
    %v4361 = vpack.c.b16 %v4268, %v4267
    %v4362 = vpack.c.b16 %v4270, %v4269
    %v4363 = vpack.c.b16 %v4272, %v4271
    %v4364 = vpack.c.b16 %v4274, %v4273
    %v4365 = vpack.c.b16 %v4276, %v4275
    %v4366 = vpack.c.b16 %v4278, %v4277
    %v4367 = vpack.c.b16 %v4280, %v4279
    %v4368 = vpack.c.b16 %v4282, %v4281
    %v4369 = vpack.c.b16 %v4284, %v4283
    %v4370 = vpack.c.b16 %v4286, %v4285
    %v4371 = vpack.c.b16 %v4288, %v4287
    %v4372 = vpack.c.b16 %v4290, %v4289
    %v4373 = vpack.c.b16 %v4292, %v4291
    %v4374 = vpack.c.b16 %v4294, %v4293
    %v4375 = vpack.c.b16 %v4296, %v4295
    %v4376 = vpack.c.b16 %v4298, %v4297
    %v4377 = vpack.c.b16 %v4300, %v4299
    %v4378 = vpack.c.b16 %v4302, %v4301
    %v4379 = vpack.c.b16 %v4304, %v4303
    %v4380 = vpack.c.b16 %v4306, %v4305
    %v4381 = vpack.c.b16 %v4308, %v4307
    %v4382 = vpack.c.b16 %v4310, %v4309
    %v4383 = vpack.c.b16 %v4312, %v4311
    %v4384 = vpack.c.b16 %v4314, %v4313
    %v4385 = vpack.c.b16 %v4316, %v4315
    %v4386 = vpack.c.b16 %v4318, %v4317
    %v4387 = vpack.c.b16 %v4320, %v4319
    %v4388 = vpack.c.b16 %v4322, %v4321
    %v4389 = vpack.c.b16 %v4324, %v4323
    %v4390 = vpack.c.b16 %v4326, %v4325
    %4455 = vmatprep.subr.bf16.mxu0 0
    %4456 = vmatpush1.bf16.msra.mxu0 %v4327
    %4457 = vmatprep.subr.bf16.mxu0 0
    %4458 = vmatpush1.bf16.msra.mxu0 %v4328
    %4459 = vmatprep.subr.bf16.mxu0 0
    %4460 = vmatpush1.bf16.msra.mxu0 %v4329
    %4461 = vmatprep.subr.bf16.mxu0 0
    %4462 = vmatpush1.bf16.msra.mxu0 %v4330
    %4463 = vmatprep.subr.bf16.mxu0 0
    %4464 = vmatpush1.bf16.msra.mxu0 %v4331
    %4465 = vmatprep.subr.bf16.mxu0 0
    %4466 = vmatpush1.bf16.msra.mxu0 %v4332
    %4467 = vmatprep.subr.bf16.mxu0 0
    %4468 = vmatpush1.bf16.msra.mxu0 %v4333
    %4469 = vmatprep.subr.bf16.mxu0 0
    %4470 = vmatpush1.bf16.msra.mxu0 %v4334
    %4471 = vmatprep.subr.bf16.mxu0 0
    %4472 = vmatpush1.bf16.msra.mxu0 %v4335
    %4473 = vmatprep.subr.bf16.mxu0 0
    %4474 = vmatpush1.bf16.msra.mxu0 %v4336
    %4475 = vmatprep.subr.bf16.mxu0 0
    %4476 = vmatpush1.bf16.msra.mxu0 %v4337
    %4477 = vmatprep.subr.bf16.mxu0 0
    %4478 = vmatpush1.bf16.msra.mxu0 %v4338
    %4479 = vmatprep.subr.bf16.mxu0 0
    %4480 = vmatpush1.bf16.msra.mxu0 %v4339
    %4481 = vmatprep.subr.bf16.mxu0 0
    %4482 = vmatpush1.bf16.msra.mxu0 %v4340
    %4483 = vmatprep.subr.bf16.mxu0 0
    %4484 = vmatpush1.bf16.msra.mxu0 %v4341
    %4485 = vmatprep.subr.bf16.mxu0 0
    %4486 = vmatpush1.bf16.msra.mxu0 %v4342
    %4487 = vmatprep.mubr.bf16.mxu0 %v3929
    %4488 = vmatmul.mubr.bf16.gmra.mrb[0].mxu0 %v3928
    %v4489 = vpop.f32.mrb[0].mxu0
    %v4490 = vadd.f32 %v4069, %v4489
    %v4491 = vpop.f32.mrb[0].mxu0
    %v4492 = vpop.f32.mrb[0].mxu0
    %v4493 = vadd.f32 %v4069, %v4492
    %v4494 = vpop.f32.mrb[0].mxu0
    %4495 = vdwg.mxu0
    %4496 = vmatprep.subr.bf16.mxu0 0
    %4497 = vmatpush1.bf16.msra.mxu0 %v4343
    %4498 = vmatprep.subr.bf16.mxu0 0
    %4499 = vmatpush1.bf16.msra.mxu0 %v4344
    %4500 = vmatprep.subr.bf16.mxu0 0
    %4501 = vmatpush1.bf16.msra.mxu0 %v4345
    %4502 = vmatprep.subr.bf16.mxu0 0
    %4503 = vmatpush1.bf16.msra.mxu0 %v4346
    %4504 = vmatprep.subr.bf16.mxu0 0
    %4505 = vmatpush1.bf16.msra.mxu0 %v4347
    %4506 = vmatprep.subr.bf16.mxu0 0
    %4507 = vmatpush1.bf16.msra.mxu0 %v4348
    %4508 = vmatprep.subr.bf16.mxu0 0
    %4509 = vmatpush1.bf16.msra.mxu0 %v4349
    %4510 = vmatprep.subr.bf16.mxu0 0
    %4511 = vmatpush1.bf16.msra.mxu0 %v4350
    %4512 = vmatprep.subr.bf16.mxu0 0
    %4513 = vmatpush1.bf16.msra.mxu0 %v4351
    %4514 = vmatprep.subr.bf16.mxu0 0
    %4515 = vmatpush1.bf16.msra.mxu0 %v4352
    %4516 = vmatprep.subr.bf16.mxu0 0
    %4517 = vmatpush1.bf16.msra.mxu0 %v4353
    %4518 = vmatprep.subr.bf16.mxu0 0
    %4519 = vmatpush1.bf16.msra.mxu0 %v4354
    %4520 = vmatprep.subr.bf16.mxu0 0
    %4521 = vmatpush1.bf16.msra.mxu0 %v4355
    %4522 = vmatprep.subr.bf16.mxu0 0
    %4523 = vmatpush1.bf16.msra.mxu0 %v4356
    %4524 = vmatprep.subr.bf16.mxu0 0
    %4525 = vmatpush1.bf16.msra.mxu0 %v4357
    %4526 = vmatprep.subr.bf16.mxu0 0
    %4527 = vmatpush1.bf16.msra.mxu0 %v4358
    %4528 = vmatprep.mubr.bf16.mxu0 %v3931
    %4529 = vmatmul.mubr.bf16.gmra.mrb[0].mxu0 %v3930
    %v4530 = vpop.f32.mrb[0].mxu0
    %v4531 = vadd.f32 %v4490, %v4530
    %v4532 = vpop.f32.mrb[0].mxu0
    %v4533 = vpop.f32.mrb[0].mxu0
    %v4534 = vadd.f32 %v4493, %v4533
    %v4535 = vpop.f32.mrb[0].mxu0
    %4536 = vdwg.mxu0
    %4537 = vmatprep.subr.bf16.mxu0 0
    %4538 = vmatpush1.bf16.msra.mxu0 %v4359
    %4539 = vmatprep.subr.bf16.mxu0 0
    %4540 = vmatpush1.bf16.msra.mxu0 %v4360
    %4541 = vmatprep.subr.bf16.mxu0 0
    %4542 = vmatpush1.bf16.msra.mxu0 %v4361
    %4543 = vmatprep.subr.bf16.mxu0 0
    %4544 = vmatpush1.bf16.msra.mxu0 %v4362
    %4545 = vmatprep.subr.bf16.mxu0 0
    %4546 = vmatpush1.bf16.msra.mxu0 %v4363
    %4547 = vmatprep.subr.bf16.mxu0 0
    %4548 = vmatpush1.bf16.msra.mxu0 %v4364
    %4549 = vmatprep.subr.bf16.mxu0 0
    %4550 = vmatpush1.bf16.msra.mxu0 %v4365
    %4551 = vmatprep.subr.bf16.mxu0 0
    %4552 = vmatpush1.bf16.msra.mxu0 %v4366
    %4553 = vmatprep.subr.bf16.mxu0 0
    %4554 = vmatpush1.bf16.msra.mxu0 %v4367
    %4555 = vmatprep.subr.bf16.mxu0 0
    %4556 = vmatpush1.bf16.msra.mxu0 %v4368
    %4557 = vmatprep.subr.bf16.mxu0 0
    %4558 = vmatpush1.bf16.msra.mxu0 %v4369
    %4559 = vmatprep.subr.bf16.mxu0 0
    %4560 = vmatpush1.bf16.msra.mxu0 %v4370
    %4561 = vmatprep.subr.bf16.mxu0 0
    %4562 = vmatpush1.bf16.msra.mxu0 %v4371
    %4563 = vmatprep.subr.bf16.mxu0 0
    %4564 = vmatpush1.bf16.msra.mxu0 %v4372
    %4565 = vmatprep.subr.bf16.mxu0 0
    %4566 = vmatpush1.bf16.msra.mxu0 %v4373
    %4567 = vmatprep.subr.bf16.mxu0 0
    %4568 = vmatpush1.bf16.msra.mxu0 %v4374
    %4569 = vmatprep.mubr.bf16.mxu0 %v3933
    %4570 = vmatmul.mubr.bf16.gmra.mrb[0].mxu0 %v3932
    %v4571 = vpop.f32.mrb[0].mxu0
    %v4572 = vadd.f32 %v4531, %v4571
    %v4573 = vpop.f32.mrb[0].mxu0
    %v4574 = vpop.f32.mrb[0].mxu0
    %v4575 = vadd.f32 %v4534, %v4574
    %v4576 = vpop.f32.mrb[0].mxu0
    %4577 = vdwg.mxu0
    %4578 = vmatprep.subr.bf16.mxu0 0
    %4579 = vmatpush1.bf16.msra.mxu0 %v4375
    %4580 = vmatprep.subr.bf16.mxu0 0
    %4581 = vmatpush1.bf16.msra.mxu0 %v4376
    %4582 = vmatprep.subr.bf16.mxu0 0
    %4583 = vmatpush1.bf16.msra.mxu0 %v4377
    %4584 = vmatprep.subr.bf16.mxu0 0
    %4585 = vmatpush1.bf16.msra.mxu0 %v4378
    %4586 = vmatprep.subr.bf16.mxu0 0
    %4587 = vmatpush1.bf16.msra.mxu0 %v4379
    %4588 = vmatprep.subr.bf16.mxu0 0
    %4589 = vmatpush1.bf16.msra.mxu0 %v4380
    %4590 = vmatprep.subr.bf16.mxu0 0
    %4591 = vmatpush1.bf16.msra.mxu0 %v4381
    %4592 = vmatprep.subr.bf16.mxu0 0
    %4593 = vmatpush1.bf16.msra.mxu0 %v4382
    %4594 = vmatprep.subr.bf16.mxu0 0
    %4595 = vmatpush1.bf16.msra.mxu0 %v4383
    %4596 = vmatprep.subr.bf16.mxu0 0
    %4597 = vmatpush1.bf16.msra.mxu0 %v4384
    %4598 = vmatprep.subr.bf16.mxu0 0
    %4599 = vmatpush1.bf16.msra.mxu0 %v4385
    %4600 = vmatprep.subr.bf16.mxu0 0
    %4601 = vmatpush1.bf16.msra.mxu0 %v4386
    %4602 = vmatprep.subr.bf16.mxu0 0
    %4603 = vmatpush1.bf16.msra.mxu0 %v4387
    %4604 = vmatprep.subr.bf16.mxu0 0
    %4605 = vmatpush1.bf16.msra.mxu0 %v4388
    %4606 = vmatprep.subr.bf16.mxu0 0
    %4607 = vmatpush1.bf16.msra.mxu0 %v4389
    %4608 = vmatprep.subr.bf16.mxu0 0
    %4609 = vmatpush1.bf16.msra.mxu0 %v4390
    %4610 = vmatprep.mubr.bf16.mxu0 %v3935
    %4611 = vmatmul.mubr.bf16.gmra.mrb[0].mxu0 %v3934
    %v4612 = vpop.f32.mrb[0].mxu0
    %v4613 = vadd.f32 %v4572, %v4612
    %v4614 = vpop.f32.mrb[0].mxu0
    %v4615 = vpop.f32.mrb[0].mxu0
    %v4616 = vadd.f32 %v4575, %v4615
    %v4617 = vpop.f32.mrb[0].mxu0
    %4618 = vdwg.mxu0
    %4619 = vst [vmem:[#allocation11] sm:$0xff] %v4613
    %4620 = vst [vmem:[#allocation11 + $0x8] sm:$0xff] %v4616
    // Predicated region
    $region42: #{tpu_custom_call.1} parent=1 // pred_check
      _
    $region43: #{tpu_custom_call.1} parent=1 // pred_check_branch
      %4622 = sbr.rel (0) target = $region45
    $region44: #{tpu_custom_call.1} parent=1 // pred_region
      %s4624 = ssub.s32 256, 256
      %4625 = vsyncadd [#allocation4], %s4624
      %s4626 = sshll.u32 [#allocation11], 4
      %s4627 = int_to_ptr.vmem [resolvable:$true] %s4626
      %4632 = dma.vmem_to_hbm [thread:$0]  %s4627, 256, %s5, [#allocation4], 128, 128, 8
    $region45: #{tpu_custom_call.1} parent=1 // pred_fallthru
      _
    // Predicated region
    $region46: #{tpu_custom_call.1} parent=1 // pred_check
      _
    $region47: #{tpu_custom_call.1} parent=1 // pred_check_branch
      %4634 = sbr.rel (0) target = $region49
    $region48: #{tpu_custom_call.1} parent=1 // pred_region
      %4635 = dma.done [#allocation4], 256
    $region49: #{tpu_custom_call.1} parent=1 // pred_fallthru
      _
    %4636 = vsyncpa [#allocation3], 1
    %4637 = vsyncpa [#allocation6], 1
    %4638 = vsyncpa [#allocation9], 1
    %4639 = vsyncpa [#allocation4], 1

</llo_original>
